<compile_context>
chip_gen: v7x
topology: tpu7x:2x2x1
jax: 0.10.0
libtpu: 0.0.40
codegen_flags: <defaults>
</compile_context>

<pallas_src>
from functools import partial

import numpy as np
import jax
import jax.numpy as jnp
from jax.experimental import pallas as pl
from jax.experimental.pallas import tpu as pltpu


# --------------------------- config helpers ---------------------------

_ROW_TILE = 512      # token rows per grid step for (M, C) matmuls
_COL_TILE = 2048     # only tile N above this (below: weight stays VMEM-resident)


def _default_vmem_limit():
    """Explicit scoped-VMEM budget: ~70% of physical capacity, capped at 100 MiB."""
    try:
        info = pltpu.get_tpu_info()
        cap = int(getattr(info, "vmem_capacity_bytes", 0))
        if cap > 0:
            return min(cap * 7 // 10, 100 * 1024 * 1024)
    except Exception:
        pass
    return 32 * 1024 * 1024


_VMEM_LIMIT = _default_vmem_limit()


def _ceil_to(x, m):
    return ((x + m - 1) // m) * m


def _largest_divisor_leq(n, cap):
    cap = max(1, min(n, cap))
    for d in range(cap, 0, -1):
        if n % d == 0:
            return d
    return 1


def _row_tile(m):
    return m if m <= _ROW_TILE else _ROW_TILE


def _col_tile(n):
    if n <= _COL_TILE:
        return n
    for t in (1024, 512, 256, 128):
        if n % t == 0:
            return t
    return 512  # lane-aligned; ragged tail handled by the cdiv grid


# --------------------------- Pallas kernels ---------------------------

def _linear_kernel(*refs, ln, gelu, has_res, eps):
    """[LayerNorm prologue] -> bf16 matmul (f32 acc) -> +bias [-> GELU] [-> +residual]."""
    if ln:
        x_ref, g_ref, b_ref, w_ref, bias_ref, *rest = refs
    else:
        x_ref, w_ref, bias_ref, *rest = refs
    if has_res:
        r_ref, o_ref = rest
    else:
        (o_ref,) = rest

    if ln:
        x = x_ref[...].astype(jnp.float32)
        mu = jnp.mean(x, axis=-1, keepdims=True)
        xc = x - mu
        var = jnp.mean(xc * xc, axis=-1, keepdims=True)
        xn = xc * jax.lax.rsqrt(var + eps)
        xn = xn * g_ref[...].astype(jnp.float32) + b_ref[...].astype(jnp.float32)
        a = xn.astype(jnp.bfloat16)
    else:
        a = x_ref[...]

    y = jnp.dot(a, w_ref[...], preferred_element_type=jnp.float32)
    y = y + bias_ref[...].astype(jnp.float32)
    if gelu:
        # TODO(synk): nn.GELU default is the exact erf GELU; tanh approximation
        #             (EUP-friendly) is used here, max relative error ~1e-3.
        y = jax.nn.gelu(y, approximate=True)
    if has_res:
        y = y + r_ref[...].astype(jnp.float32)
    o_ref[...] = y.astype(o_ref.dtype)


def _win_attn_kernel(q_ref, k_ref, v_ref, bias_ref, *rest, has_mask):
    """Head-major window attention for a group of windows.
    q/k/v: (WG, H, N, Dh) bf16 (q pre-scaled), bias: (H, N, N) f32,
    optional mask: (WG, N, N) f32, out: (WG, H, N, Dh) bf16."""
    if has_mask:
        mask_ref, o_ref = rest
    else:
        (o_ref,) = rest
    wg, nh, n, dh = q_ref.shape

    q = q_ref[...].reshape(wg * nh, n, dh)
    k = k_ref[...].reshape(wg * nh, n, dh)
    s = jnp.einsum('bnd,bmd->bnm', q, k, preferred_element_type=jnp.float32)
    s = s.reshape(wg, nh, n, n) + bias_ref[...][None].astype(jnp.float32)
    if has_mask:
        s = s + mask_ref[...][:, None, :, :].astype(jnp.float32)
    s = s - jnp.max(s, axis=-1, keepdims=True)
    p = jnp.exp(s)
    p = p * pl.reciprocal(jnp.sum(p, axis=-1, keepdims=True), approx=True)
    p = p.astype(jnp.bfloat16).reshape(wg * nh, n, n)      # f32 scores die here
    v = v_ref[...].reshape(wg * nh, n, dh)
    o = jnp.einsum('bnm,bmd->bnd', p, v, preferred_element_type=jnp.float32)
    o_ref[...] = o.reshape(wg, nh, n, dh).astype(o_ref.dtype)


# --------------------------- Pallas wrappers ---------------------------

def linear(a, w, b, *, ln=None, gelu=False, residual=None,
           out_dtype=jnp.float32, eps=1e-5):
    """(M,K) @ (K,N) + bias, with optional fused LayerNorm prologue on `a`,
    fused GELU and fused residual add.  MXU in bf16, accumulation in f32."""
    M, K = a.shape
    N = w.shape[1]
    tm, tn = _row_tile(M), _col_tile(N)
    grid = (pl.cdiv(M, tm), pl.cdiv(N, tn))

    operands, in_specs = [], []
    if ln is not None:
        gamma, beta = ln
        operands += [a, gamma.reshape(1, K), beta.reshape(1, K)]
        in_specs += [pl.BlockSpec((tm, K), lambda i, j: (i, 0)),
                     pl.BlockSpec((1, K), lambda i, j: (0, 0)),
                     pl.BlockSpec((1, K), lambda i, j: (0, 0))]
    else:
        operands += [a.astype(jnp.bfloat16)]
        in_specs += [pl.BlockSpec((tm, K), lambda i, j: (i, 0))]
    operands += [w.astype(jnp.bfloat16), b.reshape(1, N).astype(jnp.float32)]
    in_specs += [pl.BlockSpec((K, tn), lambda i, j: (0, j)),
                 pl.BlockSpec((1, tn), lambda i, j: (0, j))]
    has_res = residual is not None
    if has_res:
        operands.append(residual)
        in_specs.append(pl.BlockSpec((tm, tn), lambda i, j: (i, j)))

    return pl.pallas_call(
        partial(_linear_kernel, ln=ln is not None, gelu=gelu,
                has_res=has_res, eps=eps),
        out_shape=jax.ShapeDtypeStruct((M, N), out_dtype),
        grid=grid,
        in_specs=in_specs,
        out_specs=pl.BlockSpec((tm, tn), lambda i, j: (i, j)),
        compiler_params=pltpu.CompilerParams(
            dimension_semantics=("parallel", "parallel"),
            vmem_limit_bytes=_VMEM_LIMIT),
    )(*operands)


def window_attention(q, k, v, rel_bias, mask):
    """q/k/v: (nWB, heads, N, Dh) bf16 (q pre-scaled), rel_bias: (heads, N, N),
    mask: (nW, N, N) or None  ->  (nWB, heads, N, Dh) bf16."""
    nWB, heads, N, Dh = q.shape
    cap = max(1, 512 // N)                      # ~512 token-rows per grid step
    if mask is not None:
        nW = mask.shape[0]
        wg = _largest_divisor_leq(nW, cap)      # wg | nW and nW | nWB
        grid = (nWB // wg,)
    else:
        wg = min(cap, nWB)
        grid = (pl.cdiv(nWB, wg),)              # ragged tail OK (no mask period)

    qkv_spec = pl.BlockSpec((wg, heads, N, Dh), lambda i: (i, 0, 0, 0))
    in_specs = [qkv_spec, qkv_spec, qkv_spec,
                pl.BlockSpec((heads, N, N), lambda i: (0, 0, 0))]
    operands = [q, k, v, rel_bias.astype(jnp.float32)]
    if mask is not None:
        nblk = nW // wg
        mask_map = (lambda i: (0, 0, 0)) if nblk == 1 else (lambda i: (i % nblk, 0, 0))
        in_specs.append(pl.BlockSpec((wg, N, N), mask_map))
        operands.append(mask.astype(jnp.float32))

    return pl.pallas_call(
        partial(_win_attn_kernel, has_mask=mask is not None),
        out_shape=jax.ShapeDtypeStruct((nWB, heads, N, Dh), jnp.bfloat16),
        grid=grid,
        in_specs=in_specs,
        out_specs=pl.BlockSpec((wg, heads, N, Dh), lambda i: (i, 0, 0, 0)),
        compiler_params=pltpu.CompilerParams(
            dimension_semantics=("parallel",),
            vmem_limit_bytes=_VMEM_LIMIT),
    )(*operands)


# --------------------------- layout glue ---------------------------
# TODO(synk): window partition/reverse + head split below are XLA transposes;
#             folding them into the attention kernel's BlockSpecs
#             ((1, ws, Wp, 3C) row-of-window strips) would save two more HBM
#             passes over the qkv / attention-output tensors.

def _qkv_to_head_major_windows(qkv, ws, heads):
    """(B, Hp, Wp, 3C) -> q, k, v each (B*nW, heads, ws*ws, Dh)."""
    B, Hp, Wp, C3 = qkv.shape
    C = C3 // 3
    Dh = C // heads
    nWh, nWw = Hp // ws, Wp // ws
    x = qkv.reshape(B, nWh, ws, nWw, ws, 3, heads, Dh)
    x = jnp.transpose(x, (5, 0, 1, 3, 6, 2, 4, 7))
    x = x.reshape(3, B * nWh * nWw, heads, ws * ws, Dh)
    return x[0], x[1], x[2]


def _head_major_windows_to_spatial(o, ws, Hp, Wp):
    """(B*nW, heads, ws*ws, Dh) -> (B, Hp, Wp, heads*Dh) (head-major channel concat)."""
    nWB, heads, N, Dh = o.shape
    nWh, nWw = Hp // ws, Wp // ws
    B = nWB // (nWh * nWw)
    x = o.reshape(B, nWh, nWw, heads, ws, ws, Dh)
    x = jnp.transpose(x, (0, 1, 4, 2, 5, 3, 6))
    return x.reshape(B, Hp, Wp, heads * Dh)


def _relative_position_index(ws):
    coords = np.stack(np.meshgrid(np.arange(ws), np.arange(ws), indexing='ij'))
    coords_flat = coords.reshape(2, -1)
    rel = coords_flat[:, :, None] - coords_flat[:, None, :]
    rel = rel.transpose(1, 2, 0).copy()
    rel[:, :, 0] += ws - 1
    rel[:, :, 1] += ws - 1
    rel[:, :, 0] *= 2 * ws - 1
    return rel.sum(-1).astype(np.int32)  # (N, N)


def build_attn_mask(H, W, window_size, shift_size):
    """Attention mask for the shifted-window configuration (as in BasicLayer)."""
    if shift_size == 0:
        return None
    Hp = _ceil_to(H, window_size)
    Wp = _ceil_to(W, window_size)
    img_mask = np.zeros((1, Hp, Wp, 1), np.float32)
    slices = (slice(0, -window_size), slice(-window_size, -shift_size),
              slice(-shift_size, None))
    cnt = 0
    for hs in slices:
        for wsl in slices:
            img_mask[:, hs, wsl, :] = cnt
            cnt += 1
    mw = img_mask.reshape(1, Hp // window_size, window_size,
                          Wp // window_size, window_size, 1)
    mw = mw.transpose(0, 1, 3, 2, 4, 5).reshape(-1, window_size * window_size)
    attn_mask = mw[:, None, :] - mw[:, :, None]
    attn_mask = np.where(attn_mask != 0, -100.0, 0.0).astype(np.float32)
    return jnp.asarray(attn_mask)  # (nW, N, N)


# --------------------------- forward ---------------------------

def swin_block_forward(params, x, mask_matrix=None, *, H, W,
                       window_size, shift_size, num_heads):
    """Mirrors SwinTransformerBlock.forward(x, mask_matrix) with self.H/self.W = H/W."""
    B, L, C = x.shape
    assert L == H * W, 'input feature has wrong size'
    ws, shift, heads = window_size, shift_size, num_heads
    N = ws * ws

    shortcut = x.reshape(B * L, C)

    # norm1 fused into the qkv matmul (Pallas); qk scale pre-folded into W_q/b_q.
    qkv = linear(shortcut, params['qkv_w'], params['qkv_b'],
                 ln=(params['ln1_g'], params['ln1_b']), out_dtype=jnp.bfloat16)
    qkv = qkv.reshape(B, H, W, 3 * C)

    # Spatial pad to multiples of the window size.  The reference pads the LN
    # output with zeros *before* qkv; qkv(0) == bias, so filling the padded qkv
    # rows with the (scaled) bias is exact and keeps the LN+qkv fusion valid.
    pad_b = (ws - H % ws) % ws
    pad_r = (ws - W % ws) % ws
    Hp, Wp = H + pad_b, W + pad_r
    if pad_b or pad_r:
        qkv = jnp.pad(qkv, ((0, 0), (0, pad_b), (0, pad_r), (0, 0)))
        in_bounds = ((jnp.arange(Hp) < H)[None, :, None, None]
                     & (jnp.arange(Wp) < W)[None, None, :, None])
        fill = params['qkv_b'].astype(qkv.dtype).reshape(1, 1, 1, 3 * C)
        qkv = jnp.where(in_bounds, qkv, fill)

    # cyclic shift (layout glue)
    if shift > 0:
        qkv = jnp.roll(qkv, shift=(-shift, -shift), axis=(1, 2))
        attn_mask = mask_matrix
    else:
        attn_mask = None

    # window partition + head split (one layout transpose)
    q, k, v = _qkv_to_head_major_windows(qkv, ws, heads)

    # relative position bias (tiny gather, glue)
    rel_bias = params['rel_pos_table'][params['rel_pos_index'].reshape(-1)]
    rel_bias = jnp.transpose(rel_bias.reshape(N, N, heads), (2, 0, 1))  # (heads,N,N)

    # windowed multi-head attention (Pallas, head-major batched einsums)
    attn_out = window_attention(q, k, v, rel_bias, attn_mask)

    # window reverse + head merge + un-shift + un-pad (layout glue)
    attn_x = _head_major_windows_to_spatial(attn_out, ws, Hp, Wp)
    if shift > 0:
        attn_x = jnp.roll(attn_x, shift=(shift, shift), axis=(1, 2))
    if pad_b or pad_r:
        attn_x = attn_x[:, :H, :W, :]
    attn_x = attn_x.reshape(B * L, C)

    # attention output projection + first residual (fused epilogue)
    x1 = linear(attn_x, params['proj_w'], params['proj_b'],
                residual=shortcut, out_dtype=jnp.float32)

    # MLP branch: norm2 fused into fc1 (+GELU), fc2 + second residual fused
    h = linear(x1, params['fc1_w'], params['fc1_b'],
               ln=(params['ln2_g'], params['ln2_b']), gelu=True,
               out_dtype=jnp.bfloat16)
    x2 = linear(h, params['fc2_w'], params['fc2_b'],
                residual=x1, out_dtype=jnp.float32)
    return x2.reshape(B, L, C)


# --------------------------- deterministic init ---------------------------

def init_params(key, dim, num_heads, window_size, mlp_ratio=4.0):
    ks = jax.random.split(key, 5)
    head_dim = dim // num_heads
    scale = head_dim ** (-0.5)
    hidden = int(dim * mlp_ratio)

    def lin(k, fin, fout):
        kw, kb = jax.random.split(k)
        w = jax.random.normal(kw, (fin, fout), jnp.float32) / np.sqrt(float(fin))
        b = 0.01 * jax.random.normal(kb, (fout,), jnp.float32)
        return w, b

    qkv_w, qkv_b = lin(ks[0], dim, 3 * dim)
    qkv_w = qkv_w.at[:, :dim].multiply(scale)   # fold the q scale into W_q / b_q
    qkv_b = qkv_b.at[:dim].multiply(scale)
    proj_w, proj_b = lin(ks[1], dim, dim)
    fc1_w, fc1_b = lin(ks[2], dim, hidden)
    fc2_w, fc2_b = lin(ks[3], hidden, dim)
    table = 0.02 * jax.random.normal(
        ks[4], ((2 * window_size - 1) ** 2, num_heads), jnp.float32)

    return dict(
        ln1_g=jnp.ones((dim,), jnp.float32), ln1_b=jnp.zeros((dim,), jnp.float32),
        ln2_g=jnp.ones((dim,), jnp.float32), ln2_b=jnp.zeros((dim,), jnp.float32),
        qkv_w=qkv_w.astype(jnp.bfloat16), qkv_b=qkv_b,
        proj_w=proj_w.astype(jnp.bfloat16), proj_b=proj_b,
        fc1_w=fc1_w.astype(jnp.bfloat16), fc1_b=fc1_b,
        fc2_w=fc2_w.astype(jnp.bfloat16), fc2_b=fc2_b,
        rel_pos_table=table,
        rel_pos_index=jnp.asarray(_relative_position_index(window_size)),
    )


# --------------------------- demo ---------------------------

if __name__ == "__main__":
    key = jax.random.PRNGKey(0)
    k_x, k_p = jax.random.split(key)

    B, H, W = 2, 7, 7                   # exercises the spatial-pad path
    dim, num_heads = 128, 4             # lane-dense channel dim
    window_size, shift_size = 4, 2      # shifted-window (SW-MSA) path with mask
    L = H * W

    x = jax.random.normal(k_x, (B, L, dim), jnp.float32)
    params = init_params(k_p, dim, num_heads, window_size, mlp_ratio=4.0)
    mask_matrix = build_attn_mask(H, W, window_size, shift_size)

    fwd = jax.jit(partial(swin_block_forward, H=H, W=W,
                          window_size=window_size, shift_size=shift_size,
                          num_heads=num_heads))
    out = fwd(params, x, mask_matrix)
    jax.block_until_ready(out)

    assert out.shape == (B, L, dim), out.shape
    assert bool(jnp.all(jnp.isfinite(out)))
    print("KERNEL_OK")
</pallas_src>

<mosaic_0001>
module attributes {stable_mosaic.version = 11 : i64} {
  func.func @_linear_kernel(%arg0: i32, %arg1: i32, %arg2: memref<98x128xf32, #tpu.memory_space<vmem>>, %arg3: memref<1x128xf32, #tpu.memory_space<vmem>>, %arg4: memref<1x128xf32, #tpu.memory_space<vmem>>, %arg5: memref<128x384xbf16, #tpu.memory_space<vmem>>, %arg6: memref<1x384xf32, #tpu.memory_space<vmem>>, %arg7: memref<98x384xbf16, #tpu.memory_space<vmem>>) attributes {dimension_semantics = [#tpu.dimension_semantics<parallel>, #tpu.dimension_semantics<parallel>], iteration_bounds = array<i64: 1, 1>, scalar_prefetch = 0 : i64, scratch_operands = 0 : i64, tpu.core_type = #tpu.core_type<tc>, window_params = [{transform_indices = @transform_0, window_bounds = array<i64: 98, 128>}, {pipeline_mode = #tpu.pipeline_mode<synchronous>, transform_indices = @transform_1, window_bounds = array<i64: 1, 128>}, {pipeline_mode = #tpu.pipeline_mode<synchronous>, transform_indices = @transform_2, window_bounds = array<i64: 1, 128>}, {transform_indices = @transform_3, window_bounds = array<i64: 128, 384>}, {transform_indices = @transform_4, window_bounds = array<i64: 1, 384>}, {transform_indices = @transform_5, window_bounds = array<i64: 98, 384>}]} {
    %c0 = arith.constant 0 : index
    %c0_0 = arith.constant 0 : index
    %0 = vector.load %arg2[%c0, %c0_0] : memref<98x128xf32, #tpu.memory_space<vmem>>, vector<98x128xf32>
    %cst = arith.constant dense<0.000000e+00> : vector<98xf32>
    %1 = vector.multi_reduction <add>, %0, %cst [1] : vector<98x128xf32> to vector<98xf32>
    %2 = vector.shape_cast %1 : vector<98xf32> to vector<98x1xf32>
    %cst_1 = arith.constant 1.280000e+02 : f32
    %3 = vector.broadcast %cst_1 : f32 to vector<98x1xf32>
    %4 = arith.divf %2, %3 : vector<98x1xf32>
    %5 = vector.broadcast %4 : vector<98x1xf32> to vector<98x128xf32>
    %6 = arith.subf %0, %5 : vector<98x128xf32>
    %7 = arith.mulf %6, %6 : vector<98x128xf32>
    %cst_2 = arith.constant dense<0.000000e+00> : vector<98xf32>
    %8 = vector.multi_reduction <add>, %7, %cst_2 [1] : vector<98x128xf32> to vector<98xf32>
    %9 = vector.shape_cast %8 : vector<98xf32> to vector<98x1xf32>
    %cst_3 = arith.constant 1.280000e+02 : f32
    %10 = vector.broadcast %cst_3 : f32 to vector<98x1xf32>
    %11 = arith.divf %9, %10 : vector<98x1xf32>
    %cst_4 = arith.constant 9.99999974E-6 : f32
    %12 = vector.broadcast %cst_4 : f32 to vector<98x1xf32>
    %13 = arith.addf %11, %12 : vector<98x1xf32>
    %14 = math.rsqrt %13 : vector<98x1xf32>
    %15 = vector.broadcast %14 : vector<98x1xf32> to vector<98x128xf32>
    %16 = arith.mulf %6, %15 : vector<98x128xf32>
    %c0_5 = arith.constant 0 : index
    %c0_6 = arith.constant 0 : index
    %17 = vector.load %arg3[%c0_5, %c0_6] : memref<1x128xf32, #tpu.memory_space<vmem>>, vector<1x128xf32>
    %18 = vector.broadcast %17 : vector<1x128xf32> to vector<98x128xf32>
    %19 = arith.mulf %16, %18 : vector<98x128xf32>
    %c0_7 = arith.constant 0 : index
    %c0_8 = arith.constant 0 : index
    %20 = vector.load %arg4[%c0_7, %c0_8] : memref<1x128xf32, #tpu.memory_space<vmem>>, vector<1x128xf32>
    %21 = vector.broadcast %20 : vector<1x128xf32> to vector<98x128xf32>
    %22 = arith.addf %19, %21 : vector<98x128xf32>
    %23 = arith.truncf %22 : vector<98x128xf32> to vector<98x128xbf16>
    %c0_9 = arith.constant 0 : index
    %c0_10 = arith.constant 0 : index
    %24 = vector.load %arg5[%c0_9, %c0_10] : memref<128x384xbf16, #tpu.memory_space<vmem>>, vector<128x384xbf16>
    %cst_11 = arith.constant dense<0.000000e+00> : vector<98x384xf32>
    %25 = tpu.matmul %23, %24, %cst_11 {dimension_numbers = #tpu.dot_dimension_numbers<[1], [0], [0], [1], [0, 0, 1, 1], [], []>} : vector<98x128xbf16>, vector<128x384xbf16>, vector<98x384xf32> -> vector<98x384xf32>
    %c0_12 = arith.constant 0 : index
    %c0_13 = arith.constant 0 : index
    %26 = vector.load %arg6[%c0_12, %c0_13] : memref<1x384xf32, #tpu.memory_space<vmem>>, vector<1x384xf32>
    %27 = vector.broadcast %26 : vector<1x384xf32> to vector<98x384xf32>
    %28 = arith.addf %25, %27 : vector<98x384xf32>
    %29 = arith.truncf %28 : vector<98x384xf32> to vector<98x384xbf16>
    %c0_14 = arith.constant 0 : index
    %c0_15 = arith.constant 0 : index
    %30 = vector.load %arg7[%c0_14, %c0_15] : memref<98x384xbf16, #tpu.memory_space<vmem>>, vector<98x384xbf16>
    tpu.vector_store %arg7[%c0_14, %c0_15], %29 {strides = array<i32>} : memref<98x384xbf16, #tpu.memory_space<vmem>>, vector<98x384xbf16>,
    return
  }
  func.func @transform_0(%arg0: i32, %arg1: i32) -> (i32, i32) {
    %c0_i32 = arith.constant 0 : i32
    %c0_i32_0 = arith.constant 0 : i32
    return %arg0, %c0_i32 : i32, i32
  }
  func.func @transform_1(%arg0: i32, %arg1: i32) -> (i32, i32) {
    %c0_i32 = arith.constant 0 : i32
    %c0_i32_0 = arith.constant 0 : i32
    %c0_i32_1 = arith.constant 0 : i32
    return %c0_i32, %c0_i32_0 : i32, i32
  }
  func.func @transform_2(%arg0: i32, %arg1: i32) -> (i32, i32) {
    %c0_i32 = arith.constant 0 : i32
    %c0_i32_0 = arith.constant 0 : i32
    %c0_i32_1 = arith.constant 0 : i32
    return %c0_i32, %c0_i32_0 : i32, i32
  }
  func.func @transform_3(%arg0: i32, %arg1: i32) -> (i32, i32) {
    %c0_i32 = arith.constant 0 : i32
    %c0_i32_0 = arith.constant 0 : i32
    return %c0_i32, %arg1 : i32, i32
  }
  func.func @transform_4(%arg0: i32, %arg1: i32) -> (i32, i32) {
    %c0_i32 = arith.constant 0 : i32
    %c0_i32_0 = arith.constant 0 : i32
    return %c0_i32, %arg1 : i32, i32
  }
  func.func @transform_5(%arg0: i32, %arg1: i32) -> (i32, i32) {
    %c0_i32 = arith.constant 0 : i32
    return %arg0, %arg1 : i32, i32
  }
}

module attributes {stable_mosaic.version = 11 : i64} {
  func.func @_win_attn_kernel(%arg0: i32, %arg1: memref<4x4x16x32xbf16, #tpu.memory_space<vmem>>, %arg2: memref<4x4x16x32xbf16, #tpu.memory_space<vmem>>, %arg3: memref<4x4x16x32xbf16, #tpu.memory_space<vmem>>, %arg4: memref<4x16x16xf32, #tpu.memory_space<vmem>>, %arg5: memref<4x16x16xf32, #tpu.memory_space<vmem>>, %arg6: memref<4x4x16x32xbf16, #tpu.memory_space<vmem>>) attributes {dimension_semantics = [#tpu.dimension_semantics<parallel>], iteration_bounds = array<i64: 2>, scalar_prefetch = 0 : i64, scratch_operands = 0 : i64, tpu.core_type = #tpu.core_type<tc>, window_params = [{transform_indices = @transform_0, window_bounds = array<i64: 4, 4, 16, 32>}, {transform_indices = @transform_1, window_bounds = array<i64: 4, 4, 16, 32>}, {transform_indices = @transform_2, window_bounds = array<i64: 4, 4, 16, 32>}, {pipeline_mode = #tpu.pipeline_mode<synchronous>, transform_indices = @transform_3, window_bounds = array<i64: 4, 16, 16>}, {pipeline_mode = #tpu.pipeline_mode<synchronous>, transform_indices = @transform_4, window_bounds = array<i64: 4, 16, 16>}, {transform_indices = @transform_5, window_bounds = array<i64: 4, 4, 16, 32>}]} {
    %c0 = arith.constant 0 : index
    %c0_0 = arith.constant 0 : index
    %c0_1 = arith.constant 0 : index
    %c0_2 = arith.constant 0 : index
    %0 = vector.load %arg1[%c0, %c0_0, %c0_1, %c0_2] : memref<4x4x16x32xbf16, #tpu.memory_space<vmem>>, vector<4x4x16x32xbf16>
    %1 = vector.shape_cast %0 : vector<4x4x16x32xbf16> to vector<16x16x32xbf16>
    %c0_3 = arith.constant 0 : index
    %c0_4 = arith.constant 0 : index
    %c0_5 = arith.constant 0 : index
    %c0_6 = arith.constant 0 : index
    %2 = vector.load %arg2[%c0_3, %c0_4, %c0_5, %c0_6] : memref<4x4x16x32xbf16, #tpu.memory_space<vmem>>, vector<4x4x16x32xbf16>
    %3 = vector.shape_cast %2 : vector<4x4x16x32xbf16> to vector<16x16x32xbf16>
    "tpu.trace_start"() <{level = 10 : i32, message = "bnd,bmd->bnm"}> : () -> ()
    %cst = arith.constant dense<0.000000e+00> : vector<16x16x16xf32>
    %4 = tpu.matmul %1, %3, %cst {dimension_numbers = #tpu.dot_dimension_numbers<[2], [2], [1], [1], [0, 0, 0, 1, 1, 1], [0], [0]>} : vector<16x16x32xbf16>, vector<16x16x32xbf16>, vector<16x16x16xf32> -> vector<16x16x16xf32>
    "tpu.trace_stop"() : () -> ()
    %5 = vector.shape_cast %4 : vector<16x16x16xf32> to vector<4x4x16x16xf32>
    %c0_7 = arith.constant 0 : index
    %c0_8 = arith.constant 0 : index
    %c0_9 = arith.constant 0 : index
    %6 = vector.load %arg4[%c0_7, %c0_8, %c0_9] : memref<4x16x16xf32, #tpu.memory_space<vmem>>, vector<4x16x16xf32>
    %7 = vector.shape_cast %6 : vector<4x16x16xf32> to vector<1x4x16x16xf32>
    %8 = vector.broadcast %7 : vector<1x4x16x16xf32> to vector<4x4x16x16xf32>
    %9 = arith.addf %5, %8 : vector<4x4x16x16xf32>
    %c0_10 = arith.constant 0 : index
    %c0_11 = arith.constant 0 : index
    %c0_12 = arith.constant 0 : index
    %10 = vector.load %arg5[%c0_10, %c0_11, %c0_12] : memref<4x16x16xf32, #tpu.memory_space<vmem>>, vector<4x16x16xf32>
    %11 = vector.shape_cast %10 : vector<4x16x16xf32> to vector<4x1x16x16xf32>
    %12 = vector.broadcast %11 : vector<4x1x16x16xf32> to vector<4x4x16x16xf32>
    %13 = arith.addf %9, %12 : vector<4x4x16x16xf32>
    %cst_13 = arith.constant dense<0xFF800000> : vector<4x4x16xf32>
    %14 = vector.multi_reduction <maximumf>, %13, %cst_13 [3] : vector<4x4x16x16xf32> to vector<4x4x16xf32>
    %15 = vector.shape_cast %14 : vector<4x4x16xf32> to vector<4x4x16x1xf32>
    %16 = vector.broadcast %15 : vector<4x4x16x1xf32> to vector<4x4x16x16xf32>
    %17 = arith.subf %13, %16 : vector<4x4x16x16xf32>
    %18 = math.exp %17 : vector<4x4x16x16xf32>
    %cst_14 = arith.constant dense<0.000000e+00> : vector<4x4x16xf32>
    %19 = vector.multi_reduction <add>, %18, %cst_14 [3] : vector<4x4x16x16xf32> to vector<4x4x16xf32>
    %20 = vector.shape_cast %19 : vector<4x4x16xf32> to vector<4x4x16x1xf32>
    %21 = tpu.reciprocal %20 {approx = true} : vector<4x4x16x1xf32> -> vector<4x4x16x1xf32>
    %22 = vector.broadcast %21 : vector<4x4x16x1xf32> to vector<4x4x16x16xf32>
    %23 = arith.mulf %18, %22 : vector<4x4x16x16xf32>
    %24 = arith.truncf %23 : vector<4x4x16x16xf32> to vector<4x4x16x16xbf16>
    %25 = vector.shape_cast %24 : vector<4x4x16x16xbf16> to vector<16x16x16xbf16>
    %c0_15 = arith.constant 0 : index
    %c0_16 = arith.constant 0 : index
    %c0_17 = arith.constant 0 : index
    %c0_18 = arith.constant 0 : index
    %26 = vector.load %arg3[%c0_15, %c0_16, %c0_17, %c0_18] : memref<4x4x16x32xbf16, #tpu.memory_space<vmem>>, vector<4x4x16x32xbf16>
    %27 = vector.shape_cast %26 : vector<4x4x16x32xbf16> to vector<16x16x32xbf16>
    "tpu.trace_start"() <{level = 10 : i32, message = "bnm,bmd->bnd"}> : () -> ()
    %cst_19 = arith.constant dense<0.000000e+00> : vector<16x16x32xf32>
    %28 = tpu.matmul %25, %27, %cst_19 {dimension_numbers = #tpu.dot_dimension_numbers<[2], [1], [1], [2], [0, 0, 0, 1, 1, 2], [0], [0]>} : vector<16x16x16xbf16>, vector<16x16x32xbf16>, vector<16x16x32xf32> -> vector<16x16x32xf32>
    "tpu.trace_stop"() : () -> ()
    %29 = vector.shape_cast %28 : vector<16x16x32xf32> to vector<4x4x16x32xf32>
    %30 = arith.truncf %29 : vector<4x4x16x32xf32> to vector<4x4x16x32xbf16>
    %c0_20 = arith.constant 0 : index
    %c0_21 = arith.constant 0 : index
    %c0_22 = arith.constant 0 : index
    %c0_23 = arith.constant 0 : index
    %31 = vector.load %arg6[%c0_20, %c0_21, %c0_22, %c0_23] : memref<4x4x16x32xbf16, #tpu.memory_space<vmem>>, vector<4x4x16x32xbf16>
    tpu.vector_store %arg6[%c0_20, %c0_21, %c0_22, %c0_23], %30 {strides = array<i32>} : memref<4x4x16x32xbf16, #tpu.memory_space<vmem>>, vector<4x4x16x32xbf16>,
    return
  }
  func.func @transform_0(%arg0: i32) -> (i32, i32, i32, i32) {
    %c0_i32 = arith.constant 0 : i32
    %c0_i32_0 = arith.constant 0 : i32
    %c0_i32_1 = arith.constant 0 : i32
    %c0_i32_2 = arith.constant 0 : i32
    return %arg0, %c0_i32, %c0_i32_0, %c0_i32_1 : i32, i32, i32, i32
  }
  func.func @transform_1(%arg0: i32) -> (i32, i32, i32, i32) {
    %c0_i32 = arith.constant 0 : i32
    %c0_i32_0 = arith.constant 0 : i32
    %c0_i32_1 = arith.constant 0 : i32
    %c0_i32_2 = arith.constant 0 : i32
    return %arg0, %c0_i32, %c0_i32_0, %c0_i32_1 : i32, i32, i32, i32
  }
  func.func @transform_2(%arg0: i32) -> (i32, i32, i32, i32) {
    %c0_i32 = arith.constant 0 : i32
    %c0_i32_0 = arith.constant 0 : i32
    %c0_i32_1 = arith.constant 0 : i32
    %c0_i32_2 = arith.constant 0 : i32
    return %arg0, %c0_i32, %c0_i32_0, %c0_i32_1 : i32, i32, i32, i32
  }
  func.func @transform_3(%arg0: i32) -> (i32, i32, i32) {
    %c0_i32 = arith.constant 0 : i32
    %c0_i32_0 = arith.constant 0 : i32
    %c0_i32_1 = arith.constant 0 : i32
    %c0_i32_2 = arith.constant 0 : i32
    return %c0_i32, %c0_i32_0, %c0_i32_1 : i32, i32, i32
  }
  func.func @transform_4(%arg0: i32) -> (i32, i32, i32) {
    %c0_i32 = arith.constant 0 : i32
    %c0_i32_0 = arith.constant 0 : i32
    %c0_i32_1 = arith.constant 0 : i32
    %c0_i32_2 = arith.constant 0 : i32
    return %c0_i32, %c0_i32_0, %c0_i32_1 : i32, i32, i32
  }
  func.func @transform_5(%arg0: i32) -> (i32, i32, i32, i32) {
    %c0_i32 = arith.constant 0 : i32
    %c0_i32_0 = arith.constant 0 : i32
    %c0_i32_1 = arith.constant 0 : i32
    %c0_i32_2 = arith.constant 0 : i32
    return %arg0, %c0_i32, %c0_i32_0, %c0_i32_1 : i32, i32, i32, i32
  }
}

module attributes {stable_mosaic.version = 11 : i64} {
  func.func @_linear_kernel(%arg0: i32, %arg1: i32, %arg2: memref<98x128xbf16, #tpu.memory_space<vmem>>, %arg3: memref<128x128xbf16, #tpu.memory_space<vmem>>, %arg4: memref<1x128xf32, #tpu.memory_space<vmem>>, %arg5: memref<98x128xf32, #tpu.memory_space<vmem>>, %arg6: memref<98x128xf32, #tpu.memory_space<vmem>>) attributes {dimension_semantics = [#tpu.dimension_semantics<parallel>, #tpu.dimension_semantics<parallel>], iteration_bounds = array<i64: 1, 1>, scalar_prefetch = 0 : i64, scratch_operands = 0 : i64, tpu.core_type = #tpu.core_type<tc>, window_params = [{transform_indices = @transform_0, window_bounds = array<i64: 98, 128>}, {transform_indices = @transform_1, window_bounds = array<i64: 128, 128>}, {transform_indices = @transform_2, window_bounds = array<i64: 1, 128>}, {transform_indices = @transform_3, window_bounds = array<i64: 98, 128>}, {transform_indices = @transform_4, window_bounds = array<i64: 98, 128>}]} {
    %c0 = arith.constant 0 : index
    %c0_0 = arith.constant 0 : index
    %0 = vector.load %arg2[%c0, %c0_0] : memref<98x128xbf16, #tpu.memory_space<vmem>>, vector<98x128xbf16>
    %c0_1 = arith.constant 0 : index
    %c0_2 = arith.constant 0 : index
    %1 = vector.load %arg3[%c0_1, %c0_2] : memref<128x128xbf16, #tpu.memory_space<vmem>>, vector<128x128xbf16>
    %cst = arith.constant dense<0.000000e+00> : vector<98x128xf32>
    %2 = tpu.matmul %0, %1, %cst {dimension_numbers = #tpu.dot_dimension_numbers<[1], [0], [0], [1], [0, 0, 1, 1], [], []>} : vector<98x128xbf16>, vector<128x128xbf16>, vector<98x128xf32> -> vector<98x128xf32>
    %c0_3 = arith.constant 0 : index
    %c0_4 = arith.constant 0 : index
    %3 = vector.load %arg4[%c0_3, %c0_4] : memref<1x128xf32, #tpu.memory_space<vmem>>, vector<1x128xf32>
    %4 = vector.broadcast %3 : vector<1x128xf32> to vector<98x128xf32>
    %5 = arith.addf %2, %4 : vector<98x128xf32>
    %c0_5 = arith.constant 0 : index
    %c0_6 = arith.constant 0 : index
    %6 = vector.load %arg5[%c0_5, %c0_6] : memref<98x128xf32, #tpu.memory_space<vmem>>, vector<98x128xf32>
    %7 = arith.addf %5, %6 : vector<98x128xf32>
    %c0_7 = arith.constant 0 : index
    %c0_8 = arith.constant 0 : index
    %8 = vector.load %arg6[%c0_7, %c0_8] : memref<98x128xf32, #tpu.memory_space<vmem>>, vector<98x128xf32>
    tpu.vector_store %arg6[%c0_7, %c0_8], %7 {strides = array<i32>} : memref<98x128xf32, #tpu.memory_space<vmem>>, vector<98x128xf32>,
    return
  }
  func.func @transform_0(%arg0: i32, %arg1: i32) -> (i32, i32) {
    %c0_i32 = arith.constant 0 : i32
    %c0_i32_0 = arith.constant 0 : i32
    return %arg0, %c0_i32 : i32, i32
  }
  func.func @transform_1(%arg0: i32, %arg1: i32) -> (i32, i32) {
    %c0_i32 = arith.constant 0 : i32
    %c0_i32_0 = arith.constant 0 : i32
    return %c0_i32, %arg1 : i32, i32
  }
  func.func @transform_2(%arg0: i32, %arg1: i32) -> (i32, i32) {
    %c0_i32 = arith.constant 0 : i32
    %c0_i32_0 = arith.constant 0 : i32
    return %c0_i32, %arg1 : i32, i32
  }
  func.func @transform_3(%arg0: i32, %arg1: i32) -> (i32, i32) {
    %c0_i32 = arith.constant 0 : i32
    return %arg0, %arg1 : i32, i32
  }
  func.func @transform_4(%arg0: i32, %arg1: i32) -> (i32, i32) {
    %c0_i32 = arith.constant 0 : i32
    return %arg0, %arg1 : i32, i32
  }
}

module attributes {stable_mosaic.version = 11 : i64} {
  func.func @_linear_kernel(%arg0: i32, %arg1: i32, %arg2: memref<98x128xf32, #tpu.memory_space<vmem>>, %arg3: memref<1x128xf32, #tpu.memory_space<vmem>>, %arg4: memref<1x128xf32, #tpu.memory_space<vmem>>, %arg5: memref<128x512xbf16, #tpu.memory_space<vmem>>, %arg6: memref<1x512xf32, #tpu.memory_space<vmem>>, %arg7: memref<98x512xbf16, #tpu.memory_space<vmem>>) attributes {dimension_semantics = [#tpu.dimension_semantics<parallel>, #tpu.dimension_semantics<parallel>], iteration_bounds = array<i64: 1, 1>, scalar_prefetch = 0 : i64, scratch_operands = 0 : i64, tpu.core_type = #tpu.core_type<tc>, window_params = [{transform_indices = @transform_0, window_bounds = array<i64: 98, 128>}, {pipeline_mode = #tpu.pipeline_mode<synchronous>, transform_indices = @transform_1, window_bounds = array<i64: 1, 128>}, {pipeline_mode = #tpu.pipeline_mode<synchronous>, transform_indices = @transform_2, window_bounds = array<i64: 1, 128>}, {transform_indices = @transform_3, window_bounds = array<i64: 128, 512>}, {transform_indices = @transform_4, window_bounds = array<i64: 1, 512>}, {transform_indices = @transform_5, window_bounds = array<i64: 98, 512>}]} {
    %c0 = arith.constant 0 : index
    %c0_0 = arith.constant 0 : index
    %0 = vector.load %arg2[%c0, %c0_0] : memref<98x128xf32, #tpu.memory_space<vmem>>, vector<98x128xf32>
    %cst = arith.constant dense<0.000000e+00> : vector<98xf32>
    %1 = vector.multi_reduction <add>, %0, %cst [1] : vector<98x128xf32> to vector<98xf32>
    %2 = vector.shape_cast %1 : vector<98xf32> to vector<98x1xf32>
    %cst_1 = arith.constant 1.280000e+02 : f32
    %3 = vector.broadcast %cst_1 : f32 to vector<98x1xf32>
    %4 = arith.divf %2, %3 : vector<98x1xf32>
    %5 = vector.broadcast %4 : vector<98x1xf32> to vector<98x128xf32>
    %6 = arith.subf %0, %5 : vector<98x128xf32>
    %7 = arith.mulf %6, %6 : vector<98x128xf32>
    %cst_2 = arith.constant dense<0.000000e+00> : vector<98xf32>
    %8 = vector.multi_reduction <add>, %7, %cst_2 [1] : vector<98x128xf32> to vector<98xf32>
    %9 = vector.shape_cast %8 : vector<98xf32> to vector<98x1xf32>
    %cst_3 = arith.constant 1.280000e+02 : f32
    %10 = vector.broadcast %cst_3 : f32 to vector<98x1xf32>
    %11 = arith.divf %9, %10 : vector<98x1xf32>
    %cst_4 = arith.constant 9.99999974E-6 : f32
    %12 = vector.broadcast %cst_4 : f32 to vector<98x1xf32>
    %13 = arith.addf %11, %12 : vector<98x1xf32>
    %14 = math.rsqrt %13 : vector<98x1xf32>
    %15 = vector.broadcast %14 : vector<98x1xf32> to vector<98x128xf32>
    %16 = arith.mulf %6, %15 : vector<98x128xf32>
    %c0_5 = arith.constant 0 : index
    %c0_6 = arith.constant 0 : index
    %17 = vector.load %arg3[%c0_5, %c0_6] : memref<1x128xf32, #tpu.memory_space<vmem>>, vector<1x128xf32>
    %18 = vector.broadcast %17 : vector<1x128xf32> to vector<98x128xf32>
    %19 = arith.mulf %16, %18 : vector<98x128xf32>
    %c0_7 = arith.constant 0 : index
    %c0_8 = arith.constant 0 : index
    %20 = vector.load %arg4[%c0_7, %c0_8] : memref<1x128xf32, #tpu.memory_space<vmem>>, vector<1x128xf32>
    %21 = vector.broadcast %20 : vector<1x128xf32> to vector<98x128xf32>
    %22 = arith.addf %19, %21 : vector<98x128xf32>
    %23 = arith.truncf %22 : vector<98x128xf32> to vector<98x128xbf16>
    %c0_9 = arith.constant 0 : index
    %c0_10 = arith.constant 0 : index
    %24 = vector.load %arg5[%c0_9, %c0_10] : memref<128x512xbf16, #tpu.memory_space<vmem>>, vector<128x512xbf16>
    %cst_11 = arith.constant dense<0.000000e+00> : vector<98x512xf32>
    %25 = tpu.matmul %23, %24, %cst_11 {dimension_numbers = #tpu.dot_dimension_numbers<[1], [0], [0], [1], [0, 0, 1, 1], [], []>} : vector<98x128xbf16>, vector<128x512xbf16>, vector<98x512xf32> -> vector<98x512xf32>
    %c0_12 = arith.constant 0 : index
    %c0_13 = arith.constant 0 : index
    %26 = vector.load %arg6[%c0_12, %c0_13] : memref<1x512xf32, #tpu.memory_space<vmem>>, vector<1x512xf32>
    %27 = vector.broadcast %26 : vector<1x512xf32> to vector<98x512xf32>
    %28 = arith.addf %25, %27 : vector<98x512xf32>
    %29 = arith.mulf %28, %28 : vector<98x512xf32>
    %30 = arith.mulf %28, %29 : vector<98x512xf32>
    %cst_14 = arith.constant 4.471500e-02 : f32
    %31 = vector.broadcast %cst_14 : f32 to vector<98x512xf32>
    %32 = arith.mulf %31, %30 : vector<98x512xf32>
    %33 = arith.addf %28, %32 : vector<98x512xf32>
    %cst_15 = arith.constant 0.797884583 : f32
    %34 = vector.broadcast %cst_15 : f32 to vector<98x512xf32>
    %35 = arith.mulf %34, %33 : vector<98x512xf32>
    %36 = math.tanh %35 : vector<98x512xf32>
    %cst_16 = arith.constant 1.000000e+00 : f32
    %37 = vector.broadcast %cst_16 : f32 to vector<98x512xf32>
    %38 = arith.addf %37, %36 : vector<98x512xf32>
    %cst_17 = arith.constant 5.000000e-01 : f32
    %39 = vector.broadcast %cst_17 : f32 to vector<98x512xf32>
    %40 = arith.mulf %39, %38 : vector<98x512xf32>
    %41 = arith.mulf %28, %40 : vector<98x512xf32>
    %42 = arith.truncf %41 : vector<98x512xf32> to vector<98x512xbf16>
    %c0_18 = arith.constant 0 : index
    %c0_19 = arith.constant 0 : index
    %43 = vector.load %arg7[%c0_18, %c0_19] : memref<98x512xbf16, #tpu.memory_space<vmem>>, vector<98x512xbf16>
    tpu.vector_store %arg7[%c0_18, %c0_19], %42 {strides = array<i32>} : memref<98x512xbf16, #tpu.memory_space<vmem>>, vector<98x512xbf16>,
    return
  }
  func.func @transform_0(%arg0: i32, %arg1: i32) -> (i32, i32) {
    %c0_i32 = arith.constant 0 : i32
    %c0_i32_0 = arith.constant 0 : i32
    return %arg0, %c0_i32 : i32, i32
  }
  func.func @transform_1(%arg0: i32, %arg1: i32) -> (i32, i32) {
    %c0_i32 = arith.constant 0 : i32
    %c0_i32_0 = arith.constant 0 : i32
    %c0_i32_1 = arith.constant 0 : i32
    return %c0_i32, %c0_i32_0 : i32, i32
  }
  func.func @transform_2(%arg0: i32, %arg1: i32) -> (i32, i32) {
    %c0_i32 = arith.constant 0 : i32
    %c0_i32_0 = arith.constant 0 : i32
    %c0_i32_1 = arith.constant 0 : i32
    return %c0_i32, %c0_i32_0 : i32, i32
  }
  func.func @transform_3(%arg0: i32, %arg1: i32) -> (i32, i32) {
    %c0_i32 = arith.constant 0 : i32
    %c0_i32_0 = arith.constant 0 : i32
    return %c0_i32, %arg1 : i32, i32
  }
  func.func @transform_4(%arg0: i32, %arg1: i32) -> (i32, i32) {
    %c0_i32 = arith.constant 0 : i32
    %c0_i32_0 = arith.constant 0 : i32
    return %c0_i32, %arg1 : i32, i32
  }
  func.func @transform_5(%arg0: i32, %arg1: i32) -> (i32, i32) {
    %c0_i32 = arith.constant 0 : i32
    return %arg0, %arg1 : i32, i32
  }
}

module attributes {stable_mosaic.version = 11 : i64} {
  func.func @_linear_kernel(%arg0: i32, %arg1: i32, %arg2: memref<98x512xbf16, #tpu.memory_space<vmem>>, %arg3: memref<512x128xbf16, #tpu.memory_space<vmem>>, %arg4: memref<1x128xf32, #tpu.memory_space<vmem>>, %arg5: memref<98x128xf32, #tpu.memory_space<vmem>>, %arg6: memref<98x128xf32, #tpu.memory_space<vmem>>) attributes {dimension_semantics = [#tpu.dimension_semantics<parallel>, #tpu.dimension_semantics<parallel>], iteration_bounds = array<i64: 1, 1>, scalar_prefetch = 0 : i64, scratch_operands = 0 : i64, tpu.core_type = #tpu.core_type<tc>, window_params = [{transform_indices = @transform_0, window_bounds = array<i64: 98, 512>}, {transform_indices = @transform_1, window_bounds = array<i64: 512, 128>}, {transform_indices = @transform_2, window_bounds = array<i64: 1, 128>}, {transform_indices = @transform_3, window_bounds = array<i64: 98, 128>}, {transform_indices = @transform_4, window_bounds = array<i64: 98, 128>}]} {
    %c0 = arith.constant 0 : index
    %c0_0 = arith.constant 0 : index
    %0 = vector.load %arg2[%c0, %c0_0] : memref<98x512xbf16, #tpu.memory_space<vmem>>, vector<98x512xbf16>
    %c0_1 = arith.constant 0 : index
    %c0_2 = arith.constant 0 : index
    %1 = vector.load %arg3[%c0_1, %c0_2] : memref<512x128xbf16, #tpu.memory_space<vmem>>, vector<512x128xbf16>
    %cst = arith.constant dense<0.000000e+00> : vector<98x128xf32>
    %2 = tpu.matmul %0, %1, %cst {dimension_numbers = #tpu.dot_dimension_numbers<[1], [0], [0], [1], [0, 0, 1, 1], [], []>} : vector<98x512xbf16>, vector<512x128xbf16>, vector<98x128xf32> -> vector<98x128xf32>
    %c0_3 = arith.constant 0 : index
    %c0_4 = arith.constant 0 : index
    %3 = vector.load %arg4[%c0_3, %c0_4] : memref<1x128xf32, #tpu.memory_space<vmem>>, vector<1x128xf32>
    %4 = vector.broadcast %3 : vector<1x128xf32> to vector<98x128xf32>
    %5 = arith.addf %2, %4 : vector<98x128xf32>
    %c0_5 = arith.constant 0 : index
    %c0_6 = arith.constant 0 : index
    %6 = vector.load %arg5[%c0_5, %c0_6] : memref<98x128xf32, #tpu.memory_space<vmem>>, vector<98x128xf32>
    %7 = arith.addf %5, %6 : vector<98x128xf32>
    %c0_7 = arith.constant 0 : index
    %c0_8 = arith.constant 0 : index
    %8 = vector.load %arg6[%c0_7, %c0_8] : memref<98x128xf32, #tpu.memory_space<vmem>>, vector<98x128xf32>
    tpu.vector_store %arg6[%c0_7, %c0_8], %7 {strides = array<i32>} : memref<98x128xf32, #tpu.memory_space<vmem>>, vector<98x128xf32>,
    return
  }
  func.func @transform_0(%arg0: i32, %arg1: i32) -> (i32, i32) {
    %c0_i32 = arith.constant 0 : i32
    %c0_i32_0 = arith.constant 0 : i32
    return %arg0, %c0_i32 : i32, i32
  }
  func.func @transform_1(%arg0: i32, %arg1: i32) -> (i32, i32) {
    %c0_i32 = arith.constant 0 : i32
    %c0_i32_0 = arith.constant 0 : i32
    return %c0_i32, %arg1 : i32, i32
  }
  func.func @transform_2(%arg0: i32, %arg1: i32) -> (i32, i32) {
    %c0_i32 = arith.constant 0 : i32
    %c0_i32_0 = arith.constant 0 : i32
    return %c0_i32, %arg1 : i32, i32
  }
  func.func @transform_3(%arg0: i32, %arg1: i32) -> (i32, i32) {
    %c0_i32 = arith.constant 0 : i32
    return %arg0, %arg1 : i32, i32
  }
  func.func @transform_4(%arg0: i32, %arg1: i32) -> (i32, i32) {
    %c0_i32 = arith.constant 0 : i32
    return %arg0, %arg1 : i32, i32
  }
}

</mosaic_0001>

<llo_original>
// kernel: swin_block_forward.5
$region0: #{swin_block_forward.5}
  #allocation0 [shape = 'u32[]', space=smem, size = 0x4, offset = 0x4, fixed_abs, tag = 'smem constant byte address 0x4 - core index']
  #allocation1 [shape = 'u32[144,128]{1,0:T(1,128)}', space=vmem, size = 0x12000, scoped, tag = 'internal scratch']
  %s0 = inlined_call_operand.vmem [shape: f32[98,128], index: 0, kind: input, shape index: {}]
  %s1 = inlined_call_operand.vmem [shape: f32[1,128], index: 1, kind: input, shape index: {}]
  %s2 = inlined_call_operand.vmem [shape: f32[1,128], index: 2, kind: input, shape index: {}]
  %s3 = inlined_call_operand.vmem [shape: bf16[128,384], index: 3, kind: input, shape index: {}]
  %s4 = inlined_call_operand.vmem [shape: f32[1,384], index: 4, kind: input, shape index: {}]
  %s5 = inlined_call_operand.vmem [shape: bf16[98,384], index: 5, kind: output, shape index: {}]
  %s6 = sld [smem:[#allocation0]]
  $region30: #{swin_block_forward.5} parent=0
    _
  %s8 = ssub.s32 1, %s6
  %s9 = scalar_select 0, %s8, %s6
  // Predicated region
  $region2: #{swin_block_forward.5} parent=0 // pred_check
    _
  $region3: #{swin_block_forward.5} parent=0 // pred_check_branch
    %11 = sbr.rel (0) target = $region5
  $region4: #{swin_block_forward.5} parent=0 // pred_region
    _
  $region5: #{swin_block_forward.5} parent=0 // pred_fallthru
    _
  // Predicated region
  $region6: #{swin_block_forward.5} parent=0 // pred_check
    _
  $region7: #{swin_block_forward.5} parent=0 // pred_check_branch
    %13 = sbr.rel (0) target = $region9
  $region8: #{swin_block_forward.5} parent=0 // pred_region
    _
  $region9: #{swin_block_forward.5} parent=0 // pred_fallthru
    _
  // Predicated region
  $region10: #{swin_block_forward.5} parent=0 // pred_check
    _
  $region11: #{swin_block_forward.5} parent=0 // pred_check_branch
    %15 = sbr.rel (0) target = $region13
  $region12: #{swin_block_forward.5} parent=0 // pred_region
    _
  $region13: #{swin_block_forward.5} parent=0 // pred_fallthru
    _
  // Predicated region
  $region14: #{swin_block_forward.5} parent=0 // pred_check
    _
  $region15: #{swin_block_forward.5} parent=0 // pred_check_branch
    %17 = sbr.rel (0) target = $region17
  $region16: #{swin_block_forward.5} parent=0 // pred_region
    _
  $region17: #{swin_block_forward.5} parent=0 // pred_fallthru
    _
  // Predicated region
  $region18: #{swin_block_forward.5} parent=0 // pred_check
    _
  $region19: #{swin_block_forward.5} parent=0 // pred_check_branch
    %19 = sbr.rel (0) target = $region21
  $region20: #{swin_block_forward.5} parent=0 // pred_region
    _
  $region21: #{swin_block_forward.5} parent=0 // pred_fallthru
    _
  %v21 = vld [vmem:[%s0] sm:$0xff]
  %v22 = vld [vmem:[%s0 + $0x8] sm:$0xff]
  %v23 = vld [vmem:[%s0 + $0x10] sm:$0xff]
  %v24 = vld [vmem:[%s0 + $0x18] sm:$0xff]
  %v25 = vld [vmem:[%s0 + $0x20] sm:$0xff]
  %v26 = vld [vmem:[%s0 + $0x28] sm:$0xff]
  %v27 = vld [vmem:[%s0 + $0x30] sm:$0xff]
  %v28 = vld [vmem:[%s0 + $0x38] sm:$0xff]
  %v29 = vld [vmem:[%s0 + $0x40] sm:$0xff]
  %v30 = vld [vmem:[%s0 + $0x48] sm:$0xff]
  %v31 = vld [vmem:[%s0 + $0x50] sm:$0xff]
  %v32 = vld [vmem:[%s0 + $0x58] sm:$0xff]
  %v33 = vld [vmem:[%s0 + $0x60] sm:$0x3]
  %34 = vadd.xlane.f32.xlu0 %v21
  %v35 = vpop.xlane.xlu0 %34
  %36 = vadd.xlane.f32.xlu0 %v22
  %v37 = vpop.xlane.xlu0 %36
  %38 = vadd.xlane.f32.xlu0 %v23
  %v39 = vpop.xlane.xlu0 %38
  %40 = vadd.xlane.f32.xlu0 %v24
  %v41 = vpop.xlane.xlu0 %40
  %42 = vadd.xlane.f32.xlu0 %v25
  %v43 = vpop.xlane.xlu0 %42
  %44 = vadd.xlane.f32.xlu0 %v26
  %v45 = vpop.xlane.xlu0 %44
  %46 = vadd.xlane.f32.xlu0 %v27
  %v47 = vpop.xlane.xlu0 %46
  %48 = vadd.xlane.f32.xlu0 %v28
  %v49 = vpop.xlane.xlu0 %48
  %50 = vadd.xlane.f32.xlu0 %v29
  %v51 = vpop.xlane.xlu0 %50
  %52 = vadd.xlane.f32.xlu0 %v30
  %v53 = vpop.xlane.xlu0 %52
  %54 = vadd.xlane.f32.xlu0 %v31
  %v55 = vpop.xlane.xlu0 %54
  %56 = vadd.xlane.f32.xlu0 %v32
  %v57 = vpop.xlane.xlu0 %56
  %vm58 = vcmask 1041408
  %v59 = vsel %vm58, %v33, 0.0
  %60 = vadd.xlane.f32.xlu0 %v59
  %v61 = vpop.xlane.xlu0 %60
  %v62 = vrcp.pop 128.0
  %v63 = vmul.f32 %v35, %v62
  %v64 = vmul.f32 %v37, %v62
  %v65 = vmul.f32 %v39, %v62
  %v66 = vmul.f32 %v41, %v62
  %v67 = vmul.f32 %v43, %v62
  %v68 = vmul.f32 %v45, %v62
  %v69 = vmul.f32 %v47, %v62
  %v70 = vmul.f32 %v49, %v62
  %v71 = vmul.f32 %v51, %v62
  %v72 = vmul.f32 %v53, %v62
  %v73 = vmul.f32 %v55, %v62
  %v74 = vmul.f32 %v57, %v62
  %v75 = vmul.f32 %v61, %v62
  %v76 = vsub.f32 %v21, %v63
  %v77 = vsub.f32 %v22, %v64
  %v78 = vsub.f32 %v23, %v65
  %v79 = vsub.f32 %v24, %v66
  %v80 = vsub.f32 %v25, %v67
  %v81 = vsub.f32 %v26, %v68
  %v82 = vsub.f32 %v27, %v69
  %v83 = vsub.f32 %v28, %v70
  %v84 = vsub.f32 %v29, %v71
  %v85 = vsub.f32 %v30, %v72
  %v86 = vsub.f32 %v31, %v73
  %v87 = vsub.f32 %v32, %v74
  %v88 = vsub.f32 %v33, %v75
  %v89 = vmul.f32 %v76, %v76
  %v90 = vmul.f32 %v77, %v77
  %v91 = vmul.f32 %v78, %v78
  %v92 = vmul.f32 %v79, %v79
  %v93 = vmul.f32 %v80, %v80
  %v94 = vmul.f32 %v81, %v81
  %v95 = vmul.f32 %v82, %v82
  %v96 = vmul.f32 %v83, %v83
  %v97 = vmul.f32 %v84, %v84
  %v98 = vmul.f32 %v85, %v85
  %v99 = vmul.f32 %v86, %v86
  %v100 = vmul.f32 %v87, %v87
  %v101 = vmul.f32 %v88, %v88
  %102 = vadd.xlane.f32.xlu0 %v89
  %v103 = vpop.xlane.xlu0 %102
  %104 = vadd.xlane.f32.xlu0 %v90
  %v105 = vpop.xlane.xlu0 %104
  %106 = vadd.xlane.f32.xlu0 %v91
  %v107 = vpop.xlane.xlu0 %106
  %108 = vadd.xlane.f32.xlu0 %v92
  %v109 = vpop.xlane.xlu0 %108
  %110 = vadd.xlane.f32.xlu0 %v93
  %v111 = vpop.xlane.xlu0 %110
  %112 = vadd.xlane.f32.xlu0 %v94
  %v113 = vpop.xlane.xlu0 %112
  %114 = vadd.xlane.f32.xlu0 %v95
  %v115 = vpop.xlane.xlu0 %114
  %116 = vadd.xlane.f32.xlu0 %v96
  %v117 = vpop.xlane.xlu0 %116
  %118 = vadd.xlane.f32.xlu0 %v97
  %v119 = vpop.xlane.xlu0 %118
  %120 = vadd.xlane.f32.xlu0 %v98
  %v121 = vpop.xlane.xlu0 %120
  %122 = vadd.xlane.f32.xlu0 %v99
  %v123 = vpop.xlane.xlu0 %122
  %124 = vadd.xlane.f32.xlu0 %v100
  %v125 = vpop.xlane.xlu0 %124
  %v126 = vsel %vm58, %v101, 0.0
  %127 = vadd.xlane.f32.xlu0 %v126
  %v128 = vpop.xlane.xlu0 %127
  %v129 = vmul.f32 %v103, %v62
  %v130 = vmul.f32 %v105, %v62
  %v131 = vmul.f32 %v107, %v62
  %v132 = vmul.f32 %v109, %v62
  %v133 = vmul.f32 %v111, %v62
  %v134 = vmul.f32 %v113, %v62
  %v135 = vmul.f32 %v115, %v62
  %v136 = vmul.f32 %v117, %v62
  %v137 = vmul.f32 %v119, %v62
  %v138 = vmul.f32 %v121, %v62
  %v139 = vmul.f32 %v123, %v62
  %v140 = vmul.f32 %v125, %v62
  %v141 = vmul.f32 %v128, %v62
  %v142 = vadd.f32 %v129, 1e-05
  %v143 = vadd.f32 %v130, 1e-05
  %v144 = vadd.f32 %v131, 1e-05
  %v145 = vadd.f32 %v132, 1e-05
  %v146 = vadd.f32 %v133, 1e-05
  %v147 = vadd.f32 %v134, 1e-05
  %v148 = vadd.f32 %v135, 1e-05
  %v149 = vadd.f32 %v136, 1e-05
  %v150 = vadd.f32 %v137, 1e-05
  %v151 = vadd.f32 %v138, 1e-05
  %v152 = vadd.f32 %v139, 1e-05
  %v153 = vadd.f32 %v140, 1e-05
  %v154 = vadd.f32 %v141, 1e-05
  %v155 = vrsqrt.pop %v142
  %v156 = vrsqrt.pop %v143
  %v157 = vrsqrt.pop %v144
  %v158 = vrsqrt.pop %v145
  %v159 = vrsqrt.pop %v146
  %v160 = vrsqrt.pop %v147
  %v161 = vrsqrt.pop %v148
  %v162 = vrsqrt.pop %v149
  %v163 = vrsqrt.pop %v150
  %v164 = vrsqrt.pop %v151
  %v165 = vrsqrt.pop %v152
  %v166 = vrsqrt.pop %v153
  %v167 = vrsqrt.pop %v154
  %v168 = vmul.f32 %v76, %v155
  %v169 = vmul.f32 %v77, %v156
  %v170 = vmul.f32 %v78, %v157
  %v171 = vmul.f32 %v79, %v158
  %v172 = vmul.f32 %v80, %v159
  %v173 = vmul.f32 %v81, %v160
  %v174 = vmul.f32 %v82, %v161
  %v175 = vmul.f32 %v83, %v162
  %v176 = vmul.f32 %v84, %v163
  %v177 = vmul.f32 %v85, %v164
  %v178 = vmul.f32 %v86, %v165
  %v179 = vmul.f32 %v87, %v166
  %v180 = vmul.f32 %v88, %v167
  %v181 = vld [vmem:[%s1] sm:$0x1]
  %v183 = vlaneseq
  %v184 = vshrl.u32 %v183, 7
  %v185 = vsub.s32 0, %v184
  %v186 = vrot.slane %v181, %v185
  %v188 = vmul.f32 %v168, %v186
  %v189 = vmul.f32 %v169, %v186
  %v190 = vmul.f32 %v170, %v186
  %v191 = vmul.f32 %v171, %v186
  %v192 = vmul.f32 %v172, %v186
  %v193 = vmul.f32 %v173, %v186
  %v194 = vmul.f32 %v174, %v186
  %v195 = vmul.f32 %v175, %v186
  %v196 = vmul.f32 %v176, %v186
  %v197 = vmul.f32 %v177, %v186
  %v198 = vmul.f32 %v178, %v186
  %v199 = vmul.f32 %v179, %v186
  %v200 = vmul.f32 %v180, %v186
  %v201 = vld [vmem:[%s2] sm:$0x1]
  %v203 = vlaneseq
  %v204 = vshrl.u32 %v203, 7
  %v205 = vsub.s32 0, %v204
  %v206 = vrot.slane %v201, %v205
  %v208 = vadd.f32 %v188, %v206
  %v209 = vadd.f32 %v189, %v206
  %v210 = vadd.f32 %v190, %v206
  %v211 = vadd.f32 %v191, %v206
  %v212 = vadd.f32 %v192, %v206
  %v213 = vadd.f32 %v193, %v206
  %v214 = vadd.f32 %v194, %v206
  %v215 = vadd.f32 %v195, %v206
  %v216 = vadd.f32 %v196, %v206
  %v217 = vadd.f32 %v197, %v206
  %v218 = vadd.f32 %v198, %v206
  %v219 = vadd.f32 %v199, %v206
  %v220 = vadd.f32 %v200, %v206
  %v221 = vpack.c.bf16 %v209, %v208
  %v222 = vpack.c.bf16 %v211, %v210
  %v223 = vpack.c.bf16 %v213, %v212
  %v224 = vpack.c.bf16 %v215, %v214
  %v225 = vpack.c.bf16 %v217, %v216
  %v226 = vpack.c.bf16 %v219, %v218
  %v227 = vpack.c.bf16 %v220, %v220
  %v228 = vld [vmem:[%s3] sm:$0xff]
  %v229 = vld [vmem:[%s3 + $0x8] sm:$0xf]
  %v230 = vld [vmem:[%s3 + $0xc] sm:$0xff]
  %v231 = vld [vmem:[%s3 + $0x14] sm:$0xf]
  %v232 = vld [vmem:[%s3 + $0x18] sm:$0xff]
  %v233 = vld [vmem:[%s3 + $0x20] sm:$0xf]
  %v234 = vld [vmem:[%s3 + $0x24] sm:$0xff]
  %v235 = vld [vmem:[%s3 + $0x2c] sm:$0xf]
  %v236 = vld [vmem:[%s3 + $0x30] sm:$0xff]
  %v237 = vld [vmem:[%s3 + $0x38] sm:$0xf]
  %v238 = vld [vmem:[%s3 + $0x3c] sm:$0xff]
  %v239 = vld [vmem:[%s3 + $0x44] sm:$0xf]
  %v240 = vld [vmem:[%s3 + $0x48] sm:$0xff]
  %v241 = vld [vmem:[%s3 + $0x50] sm:$0xf]
  %v242 = vld [vmem:[%s3 + $0x54] sm:$0xff]
  %v243 = vld [vmem:[%s3 + $0x5c] sm:$0xf]
  %v244 = vld [vmem:[%s3 + $0x60] sm:$0xff]
  %v245 = vld [vmem:[%s3 + $0x68] sm:$0xf]
  %v246 = vld [vmem:[%s3 + $0x6c] sm:$0xff]
  %v247 = vld [vmem:[%s3 + $0x74] sm:$0xf]
  %v248 = vld [vmem:[%s3 + $0x78] sm:$0xff]
  %v249 = vld [vmem:[%s3 + $0x80] sm:$0xf]
  %v250 = vld [vmem:[%s3 + $0x84] sm:$0xff]
  %v251 = vld [vmem:[%s3 + $0x8c] sm:$0xf]
  %v252 = vld [vmem:[%s3 + $0x90] sm:$0xff]
  %v253 = vld [vmem:[%s3 + $0x98] sm:$0xf]
  %v254 = vld [vmem:[%s3 + $0x9c] sm:$0xff]
  %v255 = vld [vmem:[%s3 + $0xa4] sm:$0xf]
  %v256 = vld [vmem:[%s3 + $0xa8] sm:$0xff]
  %v257 = vld [vmem:[%s3 + $0xb0] sm:$0xf]
  %v258 = vld [vmem:[%s3 + $0xb4] sm:$0xff]
  %v259 = vld [vmem:[%s3 + $0xbc] sm:$0xf]
  %v260 = vld [vmem:[%s4] sm:$0x7]
  %v262 = vlaneseq
  %v263 = vshrl.u32 %v262, 7
  %v264 = vsub.s32 0, %v263
  %v265 = vrot.slane %v260, %v264
  %v266 = vlaneseq
  %v267 = vshrl.u32 %v266, 7
  %v268 = vsub.s32 1, %v267
  %v269 = vrot.slane %v260, %v268
  %v270 = vlaneseq
  %v271 = vshrl.u32 %v270, 7
  %v272 = vsub.s32 2, %v271
  %v273 = vrot.slane %v260, %v272
  %v309 = vunpack.c.l.b16 %v228
  %v310 = vunpack.c.h.b16 %v228
  %v311 = vunpack.c.l.b16 %v229
  %v312 = vunpack.c.l.b16 %v230
  %v313 = vunpack.c.h.b16 %v230
  %v314 = vunpack.c.l.b16 %v231
  %v315 = vunpack.c.l.b16 %v232
  %v316 = vunpack.c.h.b16 %v232
  %v317 = vunpack.c.l.b16 %v233
  %v318 = vunpack.c.l.b16 %v234
  %v319 = vunpack.c.h.b16 %v234
  %v320 = vunpack.c.l.b16 %v235
  %v321 = vunpack.c.l.b16 %v236
  %v322 = vunpack.c.h.b16 %v236
  %v323 = vunpack.c.l.b16 %v237
  %v324 = vunpack.c.l.b16 %v238
  %v325 = vunpack.c.h.b16 %v238
  %v326 = vunpack.c.l.b16 %v239
  %v327 = vunpack.c.l.b16 %v240
  %v328 = vunpack.c.h.b16 %v240
  %v329 = vunpack.c.l.b16 %v241
  %v330 = vunpack.c.l.b16 %v242
  %v331 = vunpack.c.h.b16 %v242
  %v332 = vunpack.c.l.b16 %v243
  %v333 = vunpack.c.l.b16 %v244
  %v334 = vunpack.c.h.b16 %v244
  %v335 = vunpack.c.l.b16 %v245
  %v336 = vunpack.c.l.b16 %v246
  %v337 = vunpack.c.h.b16 %v246
  %v338 = vunpack.c.l.b16 %v247
  %v339 = vunpack.c.l.b16 %v248
  %v340 = vunpack.c.h.b16 %v248
  %v341 = vunpack.c.l.b16 %v249
  %v342 = vunpack.c.l.b16 %v250
  %v343 = vunpack.c.h.b16 %v250
  %v344 = vunpack.c.l.b16 %v251
  %v345 = vunpack.c.l.b16 %v252
  %v346 = vunpack.c.h.b16 %v252
  %v347 = vunpack.c.l.b16 %v253
  %v348 = vunpack.c.l.b16 %v254
  %v349 = vunpack.c.h.b16 %v254
  %v350 = vunpack.c.l.b16 %v255
  %v351 = vunpack.c.l.b16 %v256
  %v352 = vunpack.c.h.b16 %v256
  %v353 = vunpack.c.l.b16 %v257
  %v354 = vunpack.c.l.b16 %v258
  %v355 = vunpack.c.h.b16 %v258
  %v356 = vunpack.c.l.b16 %v259
  %v357 = vpack.c.b16 %v312, %v309
  %v358 = vpack.c.b16 %v313, %v310
  %v359 = vpack.c.b16 %v314, %v311
  %v360 = vpack.c.b16 %v318, %v315
  %v361 = vpack.c.b16 %v319, %v316
  %v362 = vpack.c.b16 %v320, %v317
  %v363 = vpack.c.b16 %v324, %v321
  %v364 = vpack.c.b16 %v325, %v322
  %v365 = vpack.c.b16 %v326, %v323
  %v366 = vpack.c.b16 %v330, %v327
  %v367 = vpack.c.b16 %v331, %v328
  %v368 = vpack.c.b16 %v332, %v329
  %v369 = vpack.c.b16 %v336, %v333
  %v370 = vpack.c.b16 %v337, %v334
  %v371 = vpack.c.b16 %v338, %v335
  %v372 = vpack.c.b16 %v342, %v339
  %v373 = vpack.c.b16 %v343, %v340
  %v374 = vpack.c.b16 %v344, %v341
  %v375 = vpack.c.b16 %v348, %v345
  %v376 = vpack.c.b16 %v349, %v346
  %v377 = vpack.c.b16 %v350, %v347
  %v378 = vpack.c.b16 %v354, %v351
  %v379 = vpack.c.b16 %v355, %v352
  %v380 = vpack.c.b16 %v356, %v353
  %405 = vmatprep.subr.bf16.mxu0 %v358
  %406 = vmatpush1.bf16.msra.mxu0 %v357
  %407 = vmatprep.subr.bf16.mxu0 %v361
  %408 = vmatpush1.bf16.msra.mxu0 %v360
  %409 = vmatprep.subr.bf16.mxu0 %v364
  %410 = vmatpush1.bf16.msra.mxu0 %v363
  %411 = vmatprep.subr.bf16.mxu0 %v367
  %412 = vmatpush1.bf16.msra.mxu0 %v366
  %413 = vmatprep.subr.bf16.mxu0 %v370
  %414 = vmatpush1.bf16.msra.mxu0 %v369
  %415 = vmatprep.subr.bf16.mxu0 %v373
  %416 = vmatpush1.bf16.msra.mxu0 %v372
  %417 = vmatprep.subr.bf16.mxu0 %v376
  %418 = vmatpush1.bf16.msra.mxu0 %v375
  %419 = vmatprep.subr.bf16.mxu0 %v379
  %420 = vmatpush1.bf16.msra.mxu0 %v378
  %421 = vmatprep.subr.bf16.mxu0 0
  %422 = vmatpush1.bf16.msra.mxu0 0
  %423 = vmatprep.subr.bf16.mxu0 0
  %424 = vmatpush1.bf16.msra.mxu0 0
  %425 = vmatprep.subr.bf16.mxu0 0
  %426 = vmatpush1.bf16.msra.mxu0 0
  %427 = vmatprep.subr.bf16.mxu0 0
  %428 = vmatpush1.bf16.msra.mxu0 0
  %429 = vmatprep.subr.bf16.mxu0 0
  %430 = vmatpush1.bf16.msra.mxu0 0
  %431 = vmatprep.subr.bf16.mxu0 0
  %432 = vmatpush1.bf16.msra.mxu0 0
  %433 = vmatprep.subr.bf16.mxu0 0
  %434 = vmatpush1.bf16.msra.mxu0 0
  %435 = vmatprep.subr.bf16.mxu0 0
  %436 = vmatpush1.bf16.msra.mxu0 0
  %437 = vmatprep.mubr.bf16.mxu0 0
  %438 = vmatmul.mubr.bf16.gmra.mrb[0].mxu0 %v221
  %v439 = vpop.f32.mrb[0].mxu0
  %v440 = vadd.f32 %v265, %v439
  %v441 = vpop.f32.mrb[0].mxu0
  %v442 = vadd.f32 %v269, %v441
  %v443 = vpop.f32.mrb[0].mxu0
  %v444 = vadd.f32 %v265, %v443
  %v445 = vpop.f32.mrb[0].mxu0
  %v446 = vadd.f32 %v269, %v445
  %447 = vmatprep.mubr.bf16.mxu0 0
  %448 = vmatmul.mubr.bf16.gmra.mrb[0].mxu0 %v222
  %v449 = vpop.f32.mrb[0].mxu0
  %v450 = vadd.f32 %v265, %v449
  %v451 = vpop.f32.mrb[0].mxu0
  %v452 = vadd.f32 %v269, %v451
  %v453 = vpop.f32.mrb[0].mxu0
  %v454 = vadd.f32 %v265, %v453
  %v455 = vpop.f32.mrb[0].mxu0
  %v456 = vadd.f32 %v269, %v455
  %457 = vmatprep.mubr.bf16.mxu0 0
  %458 = vmatmul.mubr.bf16.gmra.mrb[0].mxu0 %v223
  %v459 = vpop.f32.mrb[0].mxu0
  %v460 = vadd.f32 %v265, %v459
  %v461 = vpop.f32.mrb[0].mxu0
  %v462 = vadd.f32 %v269, %v461
  %v463 = vpop.f32.mrb[0].mxu0
  %v464 = vadd.f32 %v265, %v463
  %v465 = vpop.f32.mrb[0].mxu0
  %v466 = vadd.f32 %v269, %v465
  %467 = vmatprep.mubr.bf16.mxu0 0
  %468 = vmatmul.mubr.bf16.gmra.mrb[0].mxu0 %v224
  %v469 = vpop.f32.mrb[0].mxu0
  %v470 = vadd.f32 %v265, %v469
  %v471 = vpop.f32.mrb[0].mxu0
  %v472 = vadd.f32 %v269, %v471
  %v473 = vpop.f32.mrb[0].mxu0
  %v474 = vadd.f32 %v265, %v473
  %v475 = vpop.f32.mrb[0].mxu0
  %v476 = vadd.f32 %v269, %v475
  %477 = vmatprep.mubr.bf16.mxu0 0
  %478 = vmatmul.mubr.bf16.gmra.mrb[0].mxu0 %v225
  %v479 = vpop.f32.mrb[0].mxu0
  %v480 = vadd.f32 %v265, %v479
  %v481 = vpop.f32.mrb[0].mxu0
  %v482 = vadd.f32 %v269, %v481
  %v483 = vpop.f32.mrb[0].mxu0
  %v484 = vadd.f32 %v265, %v483
  %v485 = vpop.f32.mrb[0].mxu0
  %v486 = vadd.f32 %v269, %v485
  %487 = vmatprep.mubr.bf16.mxu0 0
  %488 = vmatmul.mubr.bf16.gmra.mrb[0].mxu0 %v226
  %v489 = vpop.f32.mrb[0].mxu0
  %v490 = vadd.f32 %v265, %v489
  %v491 = vpop.f32.mrb[0].mxu0
  %v492 = vadd.f32 %v269, %v491
  %v493 = vpop.f32.mrb[0].mxu0
  %v494 = vadd.f32 %v265, %v493
  %v495 = vpop.f32.mrb[0].mxu0
  %v496 = vadd.f32 %v269, %v495
  %497 = vmatprep.mubr.bf16.mxu0 0
  %498 = vmatmul.mubr.bf16.gmra.mrb[0].mxu0 %v227
  %v499 = vpop.f32.mrb[0].mxu0
  %v500 = vadd.f32 %v265, %v499
  %v501 = vpop.f32.mrb[0].mxu0
  %v502 = vadd.f32 %v269, %v501
  %v503 = vpop.f32.mrb[0].mxu0
  %v504 = vpop.f32.mrb[0].mxu0
  %505 = vdwg.mxu0
  %506 = vmatprep.subr.bf16.mxu0 0
  %507 = vmatpush1.bf16.msra.mxu0 %v359
  %508 = vmatprep.subr.bf16.mxu0 0
  %509 = vmatpush1.bf16.msra.mxu0 %v362
  %510 = vmatprep.subr.bf16.mxu0 0
  %511 = vmatpush1.bf16.msra.mxu0 %v365
  %512 = vmatprep.subr.bf16.mxu0 0
  %513 = vmatpush1.bf16.msra.mxu0 %v368
  %514 = vmatprep.subr.bf16.mxu0 0
  %515 = vmatpush1.bf16.msra.mxu0 %v371
  %516 = vmatprep.subr.bf16.mxu0 0
  %517 = vmatpush1.bf16.msra.mxu0 %v374
  %518 = vmatprep.subr.bf16.mxu0 0
  %519 = vmatpush1.bf16.msra.mxu0 %v377
  %520 = vmatprep.subr.bf16.mxu0 0
  %521 = vmatpush1.bf16.msra.mxu0 %v380
  %522 = vmatprep.subr.bf16.mxu0 0
  %523 = vmatpush1.bf16.msra.mxu0 0
  %524 = vmatprep.subr.bf16.mxu0 0
  %525 = vmatpush1.bf16.msra.mxu0 0
  %526 = vmatprep.subr.bf16.mxu0 0
  %527 = vmatpush1.bf16.msra.mxu0 0
  %528 = vmatprep.subr.bf16.mxu0 0
  %529 = vmatpush1.bf16.msra.mxu0 0
  %530 = vmatprep.subr.bf16.mxu0 0
  %531 = vmatpush1.bf16.msra.mxu0 0
  %532 = vmatprep.subr.bf16.mxu0 0
  %533 = vmatpush1.bf16.msra.mxu0 0
  %534 = vmatprep.subr.bf16.mxu0 0
  %535 = vmatpush1.bf16.msra.mxu0 0
  %536 = vmatprep.subr.bf16.mxu0 0
  %537 = vmatpush1.bf16.msra.mxu0 0
  %538 = vmatprep.mubr.bf16.mxu0 0
  %539 = vmatmul.mubr.bf16.gmra.mrb[0].mxu0 %v221
  %v540 = vpop.f32.mrb[0].mxu0
  %v541 = vadd.f32 %v273, %v540
  %v542 = vpop.f32.mrb[0].mxu0
  %v543 = vpop.f32.mrb[0].mxu0
  %v544 = vadd.f32 %v273, %v543
  %v545 = vpop.f32.mrb[0].mxu0
  %546 = vmatprep.mubr.bf16.mxu0 0
  %547 = vmatmul.mubr.bf16.gmra.mrb[0].mxu0 %v222
  %v548 = vpop.f32.mrb[0].mxu0
  %v549 = vadd.f32 %v273, %v548
  %v550 = vpop.f32.mrb[0].mxu0
  %v551 = vpop.f32.mrb[0].mxu0
  %v552 = vadd.f32 %v273, %v551
  %v553 = vpop.f32.mrb[0].mxu0
  %554 = vmatprep.mubr.bf16.mxu0 0
  %555 = vmatmul.mubr.bf16.gmra.mrb[0].mxu0 %v223
  %v556 = vpop.f32.mrb[0].mxu0
  %v557 = vadd.f32 %v273, %v556
  %v558 = vpop.f32.mrb[0].mxu0
  %v559 = vpop.f32.mrb[0].mxu0
  %v560 = vadd.f32 %v273, %v559
  %v561 = vpop.f32.mrb[0].mxu0
  %562 = vmatprep.mubr.bf16.mxu0 0
  %563 = vmatmul.mubr.bf16.gmra.mrb[0].mxu0 %v224
  %v564 = vpop.f32.mrb[0].mxu0
  %v565 = vadd.f32 %v273, %v564
  %v566 = vpop.f32.mrb[0].mxu0
  %v567 = vpop.f32.mrb[0].mxu0
  %v568 = vadd.f32 %v273, %v567
  %v569 = vpop.f32.mrb[0].mxu0
  %570 = vmatprep.mubr.bf16.mxu0 0
  %571 = vmatmul.mubr.bf16.gmra.mrb[0].mxu0 %v225
  %v572 = vpop.f32.mrb[0].mxu0
  %v573 = vadd.f32 %v273, %v572
  %v574 = vpop.f32.mrb[0].mxu0
  %v575 = vpop.f32.mrb[0].mxu0
  %v576 = vadd.f32 %v273, %v575
  %v577 = vpop.f32.mrb[0].mxu0
  %578 = vmatprep.mubr.bf16.mxu0 0
  %579 = vmatmul.mubr.bf16.gmra.mrb[0].mxu0 %v226
  %v580 = vpop.f32.mrb[0].mxu0
  %v581 = vadd.f32 %v273, %v580
  %v582 = vpop.f32.mrb[0].mxu0
  %v583 = vpop.f32.mrb[0].mxu0
  %v584 = vadd.f32 %v273, %v583
  %v585 = vpop.f32.mrb[0].mxu0
  %586 = vmatprep.mubr.bf16.mxu0 0
  %587 = vmatmul.mubr.bf16.gmra.mrb[0].mxu0 %v227
  %v588 = vpop.f32.mrb[0].mxu0
  %v589 = vadd.f32 %v273, %v588
  %v590 = vpop.f32.mrb[0].mxu0
  %v591 = vpop.f32.mrb[0].mxu0
  %v592 = vpop.f32.mrb[0].mxu0
  %593 = vdwg.mxu0
  %v594 = vpack.c.bf16 %v444, %v440
  %v595 = vpack.c.bf16 %v446, %v442
  %v596 = vpack.c.bf16 %v544, %v541
  %v597 = vpack.c.bf16 %v454, %v450
  %v598 = vpack.c.bf16 %v456, %v452
  %v599 = vpack.c.bf16 %v552, %v549
  %v600 = vpack.c.bf16 %v464, %v460
  %v601 = vpack.c.bf16 %v466, %v462
  %v602 = vpack.c.bf16 %v560, %v557
  %v603 = vpack.c.bf16 %v474, %v470
  %v604 = vpack.c.bf16 %v476, %v472
  %v605 = vpack.c.bf16 %v568, %v565
  %v606 = vpack.c.bf16 %v484, %v480
  %v607 = vpack.c.bf16 %v486, %v482
  %v608 = vpack.c.bf16 %v576, %v573
  %v609 = vpack.c.bf16 %v494, %v490
  %v610 = vpack.c.bf16 %v496, %v492
  %v611 = vpack.c.bf16 %v584, %v581
  %v612 = vpack.c.bf16 %v500, %v500
  %v613 = vpack.c.bf16 %v502, %v502
  %v614 = vpack.c.bf16 %v589, %v589
  %v636 = vunpack.c.l.b16 %v594
  %v637 = vunpack.c.l.b16 %v595
  %v638 = vunpack.c.l.b16 %v596
  %v639 = vunpack.c.h.b16 %v594
  %v640 = vunpack.c.h.b16 %v595
  %v641 = vunpack.c.h.b16 %v596
  %v642 = vunpack.c.l.b16 %v597
  %v643 = vunpack.c.l.b16 %v598
  %v644 = vunpack.c.l.b16 %v599
  %v645 = vunpack.c.h.b16 %v597
  %v646 = vunpack.c.h.b16 %v598
  %v647 = vunpack.c.h.b16 %v599
  %v648 = vunpack.c.l.b16 %v600
  %v649 = vunpack.c.l.b16 %v601
  %v650 = vunpack.c.l.b16 %v602
  %v651 = vunpack.c.h.b16 %v600
  %v652 = vunpack.c.h.b16 %v601
  %v653 = vunpack.c.h.b16 %v602
  %v654 = vunpack.c.l.b16 %v603
  %v655 = vunpack.c.l.b16 %v604
  %v656 = vunpack.c.l.b16 %v605
  %v657 = vunpack.c.h.b16 %v603
  %v658 = vunpack.c.h.b16 %v604
  %v659 = vunpack.c.h.b16 %v605
  %v660 = vunpack.c.l.b16 %v606
  %v661 = vunpack.c.l.b16 %v607
  %v662 = vunpack.c.l.b16 %v608
  %v663 = vunpack.c.h.b16 %v606
  %v664 = vunpack.c.h.b16 %v607
  %v665 = vunpack.c.h.b16 %v608
  %v666 = vunpack.c.l.b16 %v609
  %v667 = vunpack.c.l.b16 %v610
  %v668 = vunpack.c.l.b16 %v611
  %v669 = vunpack.c.h.b16 %v609
  %v670 = vunpack.c.h.b16 %v610
  %v671 = vunpack.c.h.b16 %v611
  %v672 = vunpack.c.l.b16 %v612
  %v673 = vunpack.c.l.b16 %v613
  %v674 = vunpack.c.l.b16 %v614
  %v675 = vpack.c.b16 %v637, %v636
  %v676 = vpack.c.b16 %v638, %v638
  %v677 = vpack.c.b16 %v640, %v639
  %v678 = vpack.c.b16 %v641, %v641
  %v679 = vpack.c.b16 %v643, %v642
  %v680 = vpack.c.b16 %v644, %v644
  %v681 = vpack.c.b16 %v646, %v645
  %v682 = vpack.c.b16 %v647, %v647
  %v683 = vpack.c.b16 %v649, %v648
  %v684 = vpack.c.b16 %v650, %v650
  %v685 = vpack.c.b16 %v652, %v651
  %v686 = vpack.c.b16 %v653, %v653
  %v687 = vpack.c.b16 %v655, %v654
  %v688 = vpack.c.b16 %v656, %v656
  %v689 = vpack.c.b16 %v658, %v657
  %v690 = vpack.c.b16 %v659, %v659
  %v691 = vpack.c.b16 %v661, %v660
  %v692 = vpack.c.b16 %v662, %v662
  %v693 = vpack.c.b16 %v664, %v663
  %v694 = vpack.c.b16 %v665, %v665
  %v695 = vpack.c.b16 %v667, %v666
  %v696 = vpack.c.b16 %v668, %v668
  %v697 = vpack.c.b16 %v670, %v669
  %v698 = vpack.c.b16 %v671, %v671
  %v699 = vpack.c.b16 %v673, %v672
  %v700 = vpack.c.b16 %v674, %v674
  %727 = vst [vmem:[%s5] sm:$0xff] %v675
  %728 = vst [vmem:[%s5 + $0x8] sm:$0xf] %v676
  %729 = vst [vmem:[%s5 + $0xc] sm:$0xff] %v677
  %730 = vst [vmem:[%s5 + $0x14] sm:$0xf] %v678
  %731 = vst [vmem:[%s5 + $0x18] sm:$0xff] %v679
  %732 = vst [vmem:[%s5 + $0x20] sm:$0xf] %v680
  %733 = vst [vmem:[%s5 + $0x24] sm:$0xff] %v681
  %734 = vst [vmem:[%s5 + $0x2c] sm:$0xf] %v682
  %735 = vst [vmem:[%s5 + $0x30] sm:$0xff] %v683
  %736 = vst [vmem:[%s5 + $0x38] sm:$0xf] %v684
  %737 = vst [vmem:[%s5 + $0x3c] sm:$0xff] %v685
  %738 = vst [vmem:[%s5 + $0x44] sm:$0xf] %v686
  %739 = vst [vmem:[%s5 + $0x48] sm:$0xff] %v687
  %740 = vst [vmem:[%s5 + $0x50] sm:$0xf] %v688
  %741 = vst [vmem:[%s5 + $0x54] sm:$0xff] %v689
  %742 = vst [vmem:[%s5 + $0x5c] sm:$0xf] %v690
  %743 = vst [vmem:[%s5 + $0x60] sm:$0xff] %v691
  %744 = vst [vmem:[%s5 + $0x68] sm:$0xf] %v692
  %745 = vst [vmem:[%s5 + $0x6c] sm:$0xff] %v693
  %746 = vst [vmem:[%s5 + $0x74] sm:$0xf] %v694
  %747 = vst [vmem:[%s5 + $0x78] sm:$0xff] %v695
  %748 = vst [vmem:[%s5 + $0x80] sm:$0xf] %v696
  %749 = vst [vmem:[%s5 + $0x84] sm:$0xff] %v697
  %750 = vst [vmem:[%s5 + $0x8c] sm:$0xf] %v698
  %751 = vst [vmem:[%s5 + $0x90] sm:$0x11] %v699
  %752 = vst [vmem:[%s5 + $0x98] sm:$0x1] %v700
  // Predicated region
  $region22: #{swin_block_forward.5} parent=0 // pred_check
    _
  $region23: #{swin_block_forward.5} parent=0 // pred_check_branch
    %754 = sbr.rel (0) target = $region25
  $region24: #{swin_block_forward.5} parent=0 // pred_region
    _
  $region25: #{swin_block_forward.5} parent=0 // pred_fallthru
    _
  // Predicated region
  $region26: #{swin_block_forward.5} parent=0 // pred_check
    _
  $region27: #{swin_block_forward.5} parent=0 // pred_check_branch
    %756 = sbr.rel (0) target = $region29
  $region28: #{swin_block_forward.5} parent=0 // pred_region
    _
  $region29: #{swin_block_forward.5} parent=0 // pred_fallthru
    _

// kernel: swin_block_forward.7
$region0: #{swin_block_forward.7}
  #allocation0 [shape = 'u32[]', space=smem, size = 0x4, offset = 0x4, fixed_abs, tag = 'smem constant byte address 0x4 - core index']
  #allocation1 [shape = 'u32[144,128]{1,0:T(1,128)}', space=vmem, size = 0x12000, scoped, tag = 'internal scratch']
  %s0 = inlined_call_operand.vmem [shape: bf16[98,128], index: 0, kind: input, shape index: {}]
  %s1 = inlined_call_operand.vmem [shape: bf16[128,128], index: 1, kind: input, shape index: {}]
  %s2 = inlined_call_operand.vmem [shape: f32[1,128], index: 2, kind: input, shape index: {}]
  %s3 = inlined_call_operand.vmem [shape: f32[98,128], index: 3, kind: input, shape index: {}]
  %s4 = inlined_call_operand.vmem [shape: f32[98,128], index: 4, kind: output, shape index: {}]
  %s5 = sld [smem:[#allocation0]]
  $region26: #{swin_block_forward.7} parent=0
    _
  %s7 = ssub.s32 1, %s5
  %s8 = scalar_select 0, %s7, %s5
  // Predicated region
  $region2: #{swin_block_forward.7} parent=0 // pred_check
    _
  $region3: #{swin_block_forward.7} parent=0 // pred_check_branch
    %10 = sbr.rel (0) target = $region5
  $region4: #{swin_block_forward.7} parent=0 // pred_region
    _
  $region5: #{swin_block_forward.7} parent=0 // pred_fallthru
    _
  // Predicated region
  $region6: #{swin_block_forward.7} parent=0 // pred_check
    _
  $region7: #{swin_block_forward.7} parent=0 // pred_check_branch
    %12 = sbr.rel (0) target = $region9
  $region8: #{swin_block_forward.7} parent=0 // pred_region
    _
  $region9: #{swin_block_forward.7} parent=0 // pred_fallthru
    _
  // Predicated region
  $region10: #{swin_block_forward.7} parent=0 // pred_check
    _
  $region11: #{swin_block_forward.7} parent=0 // pred_check_branch
    %14 = sbr.rel (0) target = $region13
  $region12: #{swin_block_forward.7} parent=0 // pred_region
    _
  $region13: #{swin_block_forward.7} parent=0 // pred_fallthru
    _
  // Predicated region
  $region14: #{swin_block_forward.7} parent=0 // pred_check
    _
  $region15: #{swin_block_forward.7} parent=0 // pred_check_branch
    %16 = sbr.rel (0) target = $region17
  $region16: #{swin_block_forward.7} parent=0 // pred_region
    _
  $region17: #{swin_block_forward.7} parent=0 // pred_fallthru
    _
  %v18 = vld [vmem:[%s0] sm:$0xf]
  %v19 = vld [vmem:[%s0 + $0x4] sm:$0xf]
  %v20 = vld [vmem:[%s0 + $0x8] sm:$0xf]
  %v21 = vld [vmem:[%s0 + $0xc] sm:$0xf]
  %v22 = vld [vmem:[%s0 + $0x10] sm:$0xf]
  %v23 = vld [vmem:[%s0 + $0x14] sm:$0xf]
  %v24 = vld [vmem:[%s0 + $0x18] sm:$0xf]
  %v25 = vld [vmem:[%s0 + $0x1c] sm:$0xf]
  %v26 = vld [vmem:[%s0 + $0x20] sm:$0xf]
  %v27 = vld [vmem:[%s0 + $0x24] sm:$0xf]
  %v28 = vld [vmem:[%s0 + $0x28] sm:$0xf]
  %v29 = vld [vmem:[%s0 + $0x2c] sm:$0xf]
  %v30 = vld [vmem:[%s0 + $0x30] sm:$0x1]
  %v31 = vld [vmem:[%s1] sm:$0xf]
  %v32 = vld [vmem:[%s1 + $0x4] sm:$0xf]
  %v33 = vld [vmem:[%s1 + $0x8] sm:$0xf]
  %v34 = vld [vmem:[%s1 + $0xc] sm:$0xf]
  %v35 = vld [vmem:[%s1 + $0x10] sm:$0xf]
  %v36 = vld [vmem:[%s1 + $0x14] sm:$0xf]
  %v37 = vld [vmem:[%s1 + $0x18] sm:$0xf]
  %v38 = vld [vmem:[%s1 + $0x1c] sm:$0xf]
  %v39 = vld [vmem:[%s1 + $0x20] sm:$0xf]
  %v40 = vld [vmem:[%s1 + $0x24] sm:$0xf]
  %v41 = vld [vmem:[%s1 + $0x28] sm:$0xf]
  %v42 = vld [vmem:[%s1 + $0x2c] sm:$0xf]
  %v43 = vld [vmem:[%s1 + $0x30] sm:$0xf]
  %v44 = vld [vmem:[%s1 + $0x34] sm:$0xf]
  %v45 = vld [vmem:[%s1 + $0x38] sm:$0xf]
  %v46 = vld [vmem:[%s1 + $0x3c] sm:$0xf]
  %v47 = vld [vmem:[%s2] sm:$0x1]
  %v49 = vlaneseq
  %v50 = vshrl.u32 %v49, 7
  %v51 = vsub.s32 0, %v50
  %v52 = vrot.slane %v47, %v51
  %v67 = vunpack.c.l.b16 %v18
  %v68 = vunpack.c.l.b16 %v19
  %v69 = vunpack.c.l.b16 %v20
  %v70 = vunpack.c.l.b16 %v21
  %v71 = vunpack.c.l.b16 %v22
  %v72 = vunpack.c.l.b16 %v23
  %v73 = vunpack.c.l.b16 %v24
  %v74 = vunpack.c.l.b16 %v25
  %v75 = vunpack.c.l.b16 %v26
  %v76 = vunpack.c.l.b16 %v27
  %v77 = vunpack.c.l.b16 %v28
  %v78 = vunpack.c.l.b16 %v29
  %v79 = vunpack.c.l.b16 %v30
  %v80 = vpack.c.b16 %v68, %v67
  %v81 = vpack.c.b16 %v70, %v69
  %v82 = vpack.c.b16 %v72, %v71
  %v83 = vpack.c.b16 %v74, %v73
  %v84 = vpack.c.b16 %v76, %v75
  %v85 = vpack.c.b16 %v78, %v77
  %v86 = vpack.c.b16 %v79, %v79
  %v110 = vunpack.c.l.b16 %v31
  %v111 = vunpack.c.l.b16 %v32
  %v112 = vunpack.c.l.b16 %v33
  %v113 = vunpack.c.l.b16 %v34
  %v114 = vunpack.c.l.b16 %v35
  %v115 = vunpack.c.l.b16 %v36
  %v116 = vunpack.c.l.b16 %v37
  %v117 = vunpack.c.l.b16 %v38
  %v118 = vunpack.c.l.b16 %v39
  %v119 = vunpack.c.l.b16 %v40
  %v120 = vunpack.c.l.b16 %v41
  %v121 = vunpack.c.l.b16 %v42
  %v122 = vunpack.c.l.b16 %v43
  %v123 = vunpack.c.l.b16 %v44
  %v124 = vunpack.c.l.b16 %v45
  %v125 = vunpack.c.l.b16 %v46
  %v126 = vpack.c.b16 %v111, %v110
  %v127 = vpack.c.b16 %v113, %v112
  %v128 = vpack.c.b16 %v115, %v114
  %v129 = vpack.c.b16 %v117, %v116
  %v130 = vpack.c.b16 %v119, %v118
  %v131 = vpack.c.b16 %v121, %v120
  %v132 = vpack.c.b16 %v123, %v122
  %v133 = vpack.c.b16 %v125, %v124
  %142 = vmatprep.subr.bf16.mxu0 0
  %143 = vmatpush1.bf16.msra.mxu0 %v126
  %144 = vmatprep.subr.bf16.mxu0 0
  %145 = vmatpush1.bf16.msra.mxu0 %v127
  %146 = vmatprep.subr.bf16.mxu0 0
  %147 = vmatpush1.bf16.msra.mxu0 %v128
  %148 = vmatprep.subr.bf16.mxu0 0
  %149 = vmatpush1.bf16.msra.mxu0 %v129
  %150 = vmatprep.subr.bf16.mxu0 0
  %151 = vmatpush1.bf16.msra.mxu0 %v130
  %152 = vmatprep.subr.bf16.mxu0 0
  %153 = vmatpush1.bf16.msra.mxu0 %v131
  %154 = vmatprep.subr.bf16.mxu0 0
  %155 = vmatpush1.bf16.msra.mxu0 %v132
  %156 = vmatprep.subr.bf16.mxu0 0
  %157 = vmatpush1.bf16.msra.mxu0 %v133
  %158 = vmatprep.subr.bf16.mxu0 0
  %159 = vmatpush1.bf16.msra.mxu0 0
  %160 = vmatprep.subr.bf16.mxu0 0
  %161 = vmatpush1.bf16.msra.mxu0 0
  %162 = vmatprep.subr.bf16.mxu0 0
  %163 = vmatpush1.bf16.msra.mxu0 0
  %164 = vmatprep.subr.bf16.mxu0 0
  %165 = vmatpush1.bf16.msra.mxu0 0
  %166 = vmatprep.subr.bf16.mxu0 0
  %167 = vmatpush1.bf16.msra.mxu0 0
  %168 = vmatprep.subr.bf16.mxu0 0
  %169 = vmatpush1.bf16.msra.mxu0 0
  %170 = vmatprep.subr.bf16.mxu0 0
  %171 = vmatpush1.bf16.msra.mxu0 0
  %172 = vmatprep.subr.bf16.mxu0 0
  %173 = vmatpush1.bf16.msra.mxu0 0
  %174 = vmatprep.mubr.bf16.mxu0 0
  %175 = vmatmul.mubr.bf16.gmra.mrb[0].mxu0 %v80
  %v176 = vpop.f32.mrb[0].mxu0
  %v177 = vadd.f32 %v52, %v176
  %v178 = vpop.f32.mrb[0].mxu0
  %v179 = vpop.f32.mrb[0].mxu0
  %v180 = vadd.f32 %v52, %v179
  %v181 = vpop.f32.mrb[0].mxu0
  %182 = vmatprep.mubr.bf16.mxu0 0
  %183 = vmatmul.mubr.bf16.gmra.mrb[0].mxu0 %v81
  %v184 = vpop.f32.mrb[0].mxu0
  %v185 = vadd.f32 %v52, %v184
  %v186 = vpop.f32.mrb[0].mxu0
  %v187 = vpop.f32.mrb[0].mxu0
  %v188 = vadd.f32 %v52, %v187
  %v189 = vpop.f32.mrb[0].mxu0
  %190 = vmatprep.mubr.bf16.mxu0 0
  %191 = vmatmul.mubr.bf16.gmra.mrb[0].mxu0 %v82
  %v192 = vpop.f32.mrb[0].mxu0
  %v193 = vadd.f32 %v52, %v192
  %v194 = vpop.f32.mrb[0].mxu0
  %v195 = vpop.f32.mrb[0].mxu0
  %v196 = vadd.f32 %v52, %v195
  %v197 = vpop.f32.mrb[0].mxu0
  %198 = vmatprep.mubr.bf16.mxu0 0
  %199 = vmatmul.mubr.bf16.gmra.mrb[0].mxu0 %v83
  %v200 = vpop.f32.mrb[0].mxu0
  %v201 = vadd.f32 %v52, %v200
  %v202 = vpop.f32.mrb[0].mxu0
  %v203 = vpop.f32.mrb[0].mxu0
  %v204 = vadd.f32 %v52, %v203
  %v205 = vpop.f32.mrb[0].mxu0
  %206 = vmatprep.mubr.bf16.mxu0 0
  %207 = vmatmul.mubr.bf16.gmra.mrb[0].mxu0 %v84
  %v208 = vpop.f32.mrb[0].mxu0
  %v209 = vadd.f32 %v52, %v208
  %v210 = vpop.f32.mrb[0].mxu0
  %v211 = vpop.f32.mrb[0].mxu0
  %v212 = vadd.f32 %v52, %v211
  %v213 = vpop.f32.mrb[0].mxu0
  %214 = vmatprep.mubr.bf16.mxu0 0
  %215 = vmatmul.mubr.bf16.gmra.mrb[0].mxu0 %v85
  %v216 = vpop.f32.mrb[0].mxu0
  %v217 = vadd.f32 %v52, %v216
  %v218 = vpop.f32.mrb[0].mxu0
  %v219 = vpop.f32.mrb[0].mxu0
  %v220 = vadd.f32 %v52, %v219
  %v221 = vpop.f32.mrb[0].mxu0
  %222 = vmatprep.mubr.bf16.mxu0 0
  %223 = vmatmul.mubr.bf16.gmra.mrb[0].mxu0 %v86
  %v224 = vpop.f32.mrb[0].mxu0
  %v225 = vadd.f32 %v52, %v224
  %v226 = vpop.f32.mrb[0].mxu0
  %v227 = vpop.f32.mrb[0].mxu0
  %v228 = vpop.f32.mrb[0].mxu0
  %229 = vdwg.mxu0
  %v230 = vld [vmem:[%s3] sm:$0xff]
  %v231 = vld [vmem:[%s3 + $0x8] sm:$0xff]
  %v232 = vld [vmem:[%s3 + $0x10] sm:$0xff]
  %v233 = vld [vmem:[%s3 + $0x18] sm:$0xff]
  %v234 = vld [vmem:[%s3 + $0x20] sm:$0xff]
  %v235 = vld [vmem:[%s3 + $0x28] sm:$0xff]
  %v236 = vld [vmem:[%s3 + $0x30] sm:$0xff]
  %v237 = vld [vmem:[%s3 + $0x38] sm:$0xff]
  %v238 = vld [vmem:[%s3 + $0x40] sm:$0xff]
  %v239 = vld [vmem:[%s3 + $0x48] sm:$0xff]
  %v240 = vld [vmem:[%s3 + $0x50] sm:$0xff]
  %v241 = vld [vmem:[%s3 + $0x58] sm:$0xff]
  %v242 = vld [vmem:[%s3 + $0x60] sm:$0x3]
  %v243 = vadd.f32 %v177, %v230
  %v244 = vadd.f32 %v180, %v231
  %v245 = vadd.f32 %v185, %v232
  %v246 = vadd.f32 %v188, %v233
  %v247 = vadd.f32 %v193, %v234
  %v248 = vadd.f32 %v196, %v235
  %v249 = vadd.f32 %v201, %v236
  %v250 = vadd.f32 %v204, %v237
  %v251 = vadd.f32 %v209, %v238
  %v252 = vadd.f32 %v212, %v239
  %v253 = vadd.f32 %v217, %v240
  %v254 = vadd.f32 %v220, %v241
  %v255 = vadd.f32 %v225, %v242
  %256 = vst [vmem:[%s4] sm:$0xff] %v243
  %257 = vst [vmem:[%s4 + $0x8] sm:$0xff] %v244
  %258 = vst [vmem:[%s4 + $0x10] sm:$0xff] %v245
  %259 = vst [vmem:[%s4 + $0x18] sm:$0xff] %v246
  %260 = vst [vmem:[%s4 + $0x20] sm:$0xff] %v247
  %261 = vst [vmem:[%s4 + $0x28] sm:$0xff] %v248
  %262 = vst [vmem:[%s4 + $0x30] sm:$0xff] %v249
  %263 = vst [vmem:[%s4 + $0x38] sm:$0xff] %v250
  %264 = vst [vmem:[%s4 + $0x40] sm:$0xff] %v251
  %265 = vst [vmem:[%s4 + $0x48] sm:$0xff] %v252
  %266 = vst [vmem:[%s4 + $0x50] sm:$0xff] %v253
  %267 = vst [vmem:[%s4 + $0x58] sm:$0xff] %v254
  %268 = vst [vmem:[%s4 + $0x60] sm:$0x3] %v255
  // Predicated region
  $region18: #{swin_block_forward.7} parent=0 // pred_check
    _
  $region19: #{swin_block_forward.7} parent=0 // pred_check_branch
    %270 = sbr.rel (0) target = $region21
  $region20: #{swin_block_forward.7} parent=0 // pred_region
    _
  $region21: #{swin_block_forward.7} parent=0 // pred_fallthru
    _
  // Predicated region
  $region22: #{swin_block_forward.7} parent=0 // pred_check
    _
  $region23: #{swin_block_forward.7} parent=0 // pred_check_branch
    %272 = sbr.rel (0) target = $region25
  $region24: #{swin_block_forward.7} parent=0 // pred_region
    _
  $region25: #{swin_block_forward.7} parent=0 // pred_fallthru
    _

// kernel: swin_block_forward.9
$region0: #{swin_block_forward.9}
  #allocation0 [shape = 'u32[]', space=smem, size = 0x4, offset = 0x4, fixed_abs, tag = 'smem constant byte address 0x4 - core index']
  #allocation1 [shape = 'u32[144,128]{1,0:T(1,128)}', space=vmem, size = 0x12000, scoped, tag = 'internal scratch']
  %s0 = inlined_call_operand.vmem [shape: bf16[98,512], index: 0, kind: input, shape index: {}]
  %s1 = inlined_call_operand.vmem [shape: bf16[512,128], index: 1, kind: input, shape index: {}]
  %s2 = inlined_call_operand.vmem [shape: f32[1,128], index: 2, kind: input, shape index: {}]
  %s3 = inlined_call_operand.vmem [shape: f32[98,128], index: 3, kind: input, shape index: {}]
  %s4 = inlined_call_operand.vmem [shape: f32[98,128], index: 4, kind: output, shape index: {}]
  %s5 = sld [smem:[#allocation0]]
  $region26: #{swin_block_forward.9} parent=0
    _
  %s7 = ssub.s32 1, %s5
  %s8 = scalar_select 0, %s7, %s5
  // Predicated region
  $region2: #{swin_block_forward.9} parent=0 // pred_check
    _
  $region3: #{swin_block_forward.9} parent=0 // pred_check_branch
    %10 = sbr.rel (0) target = $region5
  $region4: #{swin_block_forward.9} parent=0 // pred_region
    _
  $region5: #{swin_block_forward.9} parent=0 // pred_fallthru
    _
  // Predicated region
  $region6: #{swin_block_forward.9} parent=0 // pred_check
    _
  $region7: #{swin_block_forward.9} parent=0 // pred_check_branch
    %12 = sbr.rel (0) target = $region9
  $region8: #{swin_block_forward.9} parent=0 // pred_region
    _
  $region9: #{swin_block_forward.9} parent=0 // pred_fallthru
    _
  // Predicated region
  $region10: #{swin_block_forward.9} parent=0 // pred_check
    _
  $region11: #{swin_block_forward.9} parent=0 // pred_check_branch
    %14 = sbr.rel (0) target = $region13
  $region12: #{swin_block_forward.9} parent=0 // pred_region
    _
  $region13: #{swin_block_forward.9} parent=0 // pred_fallthru
    _
  // Predicated region
  $region14: #{swin_block_forward.9} parent=0 // pred_check
    _
  $region15: #{swin_block_forward.9} parent=0 // pred_check_branch
    %16 = sbr.rel (0) target = $region17
  $region16: #{swin_block_forward.9} parent=0 // pred_region
    _
  $region17: #{swin_block_forward.9} parent=0 // pred_fallthru
    _
  %v18 = vld [vmem:[%s0] sm:$0xff]
  %v19 = vld [vmem:[%s0 + $0x8] sm:$0xff]
  %v20 = vld [vmem:[%s0 + $0x10] sm:$0xff]
  %v21 = vld [vmem:[%s0 + $0x18] sm:$0xff]
  %v22 = vld [vmem:[%s0 + $0x20] sm:$0xff]
  %v23 = vld [vmem:[%s0 + $0x28] sm:$0xff]
  %v24 = vld [vmem:[%s0 + $0x30] sm:$0xff]
  %v25 = vld [vmem:[%s0 + $0x38] sm:$0xff]
  %v26 = vld [vmem:[%s0 + $0x40] sm:$0xff]
  %v27 = vld [vmem:[%s0 + $0x48] sm:$0xff]
  %v28 = vld [vmem:[%s0 + $0x50] sm:$0xff]
  %v29 = vld [vmem:[%s0 + $0x58] sm:$0xff]
  %v30 = vld [vmem:[%s0 + $0x60] sm:$0xff]
  %v31 = vld [vmem:[%s0 + $0x68] sm:$0xff]
  %v32 = vld [vmem:[%s0 + $0x70] sm:$0xff]
  %v33 = vld [vmem:[%s0 + $0x78] sm:$0xff]
  %v34 = vld [vmem:[%s0 + $0x80] sm:$0xff]
  %v35 = vld [vmem:[%s0 + $0x88] sm:$0xff]
  %v36 = vld [vmem:[%s0 + $0x90] sm:$0xff]
  %v37 = vld [vmem:[%s0 + $0x98] sm:$0xff]
  %v38 = vld [vmem:[%s0 + $0xa0] sm:$0xff]
  %v39 = vld [vmem:[%s0 + $0xa8] sm:$0xff]
  %v40 = vld [vmem:[%s0 + $0xb0] sm:$0xff]
  %v41 = vld [vmem:[%s0 + $0xb8] sm:$0xff]
  %v42 = vld [vmem:[%s0 + $0xc0] sm:$0x11]
  %v43 = vld [vmem:[%s0 + $0xc8] sm:$0x11]
  %v44 = vld [vmem:[%s1] sm:$0xf]
  %v45 = vld [vmem:[%s1 + $0x4] sm:$0xf]
  %v46 = vld [vmem:[%s1 + $0x8] sm:$0xf]
  %v47 = vld [vmem:[%s1 + $0xc] sm:$0xf]
  %v48 = vld [vmem:[%s1 + $0x10] sm:$0xf]
  %v49 = vld [vmem:[%s1 + $0x14] sm:$0xf]
  %v50 = vld [vmem:[%s1 + $0x18] sm:$0xf]
  %v51 = vld [vmem:[%s1 + $0x1c] sm:$0xf]
  %v52 = vld [vmem:[%s1 + $0x20] sm:$0xf]
  %v53 = vld [vmem:[%s1 + $0x24] sm:$0xf]
  %v54 = vld [vmem:[%s1 + $0x28] sm:$0xf]
  %v55 = vld [vmem:[%s1 + $0x2c] sm:$0xf]
  %v56 = vld [vmem:[%s1 + $0x30] sm:$0xf]
  %v57 = vld [vmem:[%s1 + $0x34] sm:$0xf]
  %v58 = vld [vmem:[%s1 + $0x38] sm:$0xf]
  %v59 = vld [vmem:[%s1 + $0x3c] sm:$0xf]
  %v60 = vld [vmem:[%s1 + $0x40] sm:$0xf]
  %v61 = vld [vmem:[%s1 + $0x44] sm:$0xf]
  %v62 = vld [vmem:[%s1 + $0x48] sm:$0xf]
  %v63 = vld [vmem:[%s1 + $0x4c] sm:$0xf]
  %v64 = vld [vmem:[%s1 + $0x50] sm:$0xf]
  %v65 = vld [vmem:[%s1 + $0x54] sm:$0xf]
  %v66 = vld [vmem:[%s1 + $0x58] sm:$0xf]
  %v67 = vld [vmem:[%s1 + $0x5c] sm:$0xf]
  %v68 = vld [vmem:[%s1 + $0x60] sm:$0xf]
  %v69 = vld [vmem:[%s1 + $0x64] sm:$0xf]
  %v70 = vld [vmem:[%s1 + $0x68] sm:$0xf]
  %v71 = vld [vmem:[%s1 + $0x6c] sm:$0xf]
  %v72 = vld [vmem:[%s1 + $0x70] sm:$0xf]
  %v73 = vld [vmem:[%s1 + $0x74] sm:$0xf]
  %v74 = vld [vmem:[%s1 + $0x78] sm:$0xf]
  %v75 = vld [vmem:[%s1 + $0x7c] sm:$0xf]
  %v76 = vld [vmem:[%s1 + $0x80] sm:$0xf]
  %v77 = vld [vmem:[%s1 + $0x84] sm:$0xf]
  %v78 = vld [vmem:[%s1 + $0x88] sm:$0xf]
  %v79 = vld [vmem:[%s1 + $0x8c] sm:$0xf]
  %v80 = vld [vmem:[%s1 + $0x90] sm:$0xf]
  %v81 = vld [vmem:[%s1 + $0x94] sm:$0xf]
  %v82 = vld [vmem:[%s1 + $0x98] sm:$0xf]
  %v83 = vld [vmem:[%s1 + $0x9c] sm:$0xf]
  %v84 = vld [vmem:[%s1 + $0xa0] sm:$0xf]
  %v85 = vld [vmem:[%s1 + $0xa4] sm:$0xf]
  %v86 = vld [vmem:[%s1 + $0xa8] sm:$0xf]
  %v87 = vld [vmem:[%s1 + $0xac] sm:$0xf]
  %v88 = vld [vmem:[%s1 + $0xb0] sm:$0xf]
  %v89 = vld [vmem:[%s1 + $0xb4] sm:$0xf]
  %v90 = vld [vmem:[%s1 + $0xb8] sm:$0xf]
  %v91 = vld [vmem:[%s1 + $0xbc] sm:$0xf]
  %v92 = vld [vmem:[%s1 + $0xc0] sm:$0xf]
  %v93 = vld [vmem:[%s1 + $0xc4] sm:$0xf]
  %v94 = vld [vmem:[%s1 + $0xc8] sm:$0xf]
  %v95 = vld [vmem:[%s1 + $0xcc] sm:$0xf]
  %v96 = vld [vmem:[%s1 + $0xd0] sm:$0xf]
  %v97 = vld [vmem:[%s1 + $0xd4] sm:$0xf]
  %v98 = vld [vmem:[%s1 + $0xd8] sm:$0xf]
  %v99 = vld [vmem:[%s1 + $0xdc] sm:$0xf]
  %v100 = vld [vmem:[%s1 + $0xe0] sm:$0xf]
  %v101 = vld [vmem:[%s1 + $0xe4] sm:$0xf]
  %v102 = vld [vmem:[%s1 + $0xe8] sm:$0xf]
  %v103 = vld [vmem:[%s1 + $0xec] sm:$0xf]
  %v104 = vld [vmem:[%s1 + $0xf0] sm:$0xf]
  %v105 = vld [vmem:[%s1 + $0xf4] sm:$0xf]
  %v106 = vld [vmem:[%s1 + $0xf8] sm:$0xf]
  %v107 = vld [vmem:[%s1 + $0xfc] sm:$0xf]
  %v108 = vld [vmem:[%s2] sm:$0x1]
  %v110 = vlaneseq
  %v111 = vshrl.u32 %v110, 7
  %v112 = vsub.s32 0, %v111
  %v113 = vrot.slane %v108, %v112
  %v141 = vunpack.c.l.b16 %v18
  %v142 = vunpack.c.h.b16 %v18
  %v143 = vunpack.c.l.b16 %v19
  %v144 = vunpack.c.h.b16 %v19
  %v145 = vunpack.c.l.b16 %v20
  %v146 = vunpack.c.h.b16 %v20
  %v147 = vunpack.c.l.b16 %v21
  %v148 = vunpack.c.h.b16 %v21
  %v149 = vunpack.c.l.b16 %v22
  %v150 = vunpack.c.h.b16 %v22
  %v151 = vunpack.c.l.b16 %v23
  %v152 = vunpack.c.h.b16 %v23
  %v153 = vunpack.c.l.b16 %v24
  %v154 = vunpack.c.h.b16 %v24
  %v155 = vunpack.c.l.b16 %v25
  %v156 = vunpack.c.h.b16 %v25
  %v157 = vunpack.c.l.b16 %v26
  %v158 = vunpack.c.h.b16 %v26
  %v159 = vunpack.c.l.b16 %v27
  %v160 = vunpack.c.h.b16 %v27
  %v161 = vunpack.c.l.b16 %v28
  %v162 = vunpack.c.h.b16 %v28
  %v163 = vunpack.c.l.b16 %v29
  %v164 = vunpack.c.h.b16 %v29
  %v165 = vunpack.c.l.b16 %v30
  %v166 = vunpack.c.h.b16 %v30
  %v167 = vunpack.c.l.b16 %v31
  %v168 = vunpack.c.h.b16 %v31
  %v169 = vunpack.c.l.b16 %v32
  %v170 = vunpack.c.h.b16 %v32
  %v171 = vunpack.c.l.b16 %v33
  %v172 = vunpack.c.h.b16 %v33
  %v173 = vunpack.c.l.b16 %v34
  %v174 = vunpack.c.h.b16 %v34
  %v175 = vunpack.c.l.b16 %v35
  %v176 = vunpack.c.h.b16 %v35
  %v177 = vunpack.c.l.b16 %v36
  %v178 = vunpack.c.h.b16 %v36
  %v179 = vunpack.c.l.b16 %v37
  %v180 = vunpack.c.h.b16 %v37
  %v181 = vunpack.c.l.b16 %v38
  %v182 = vunpack.c.h.b16 %v38
  %v183 = vunpack.c.l.b16 %v39
  %v184 = vunpack.c.h.b16 %v39
  %v185 = vunpack.c.l.b16 %v40
  %v186 = vunpack.c.h.b16 %v40
  %v187 = vunpack.c.l.b16 %v41
  %v188 = vunpack.c.h.b16 %v41
  %v189 = vunpack.c.l.b16 %v42
  %v190 = vunpack.c.h.b16 %v42
  %v191 = vunpack.c.l.b16 %v43
  %v192 = vunpack.c.h.b16 %v43
  %v193 = vpack.c.b16 %v145, %v141
  %v194 = vpack.c.b16 %v146, %v142
  %v195 = vpack.c.b16 %v147, %v143
  %v196 = vpack.c.b16 %v148, %v144
  %v197 = vpack.c.b16 %v153, %v149
  %v198 = vpack.c.b16 %v154, %v150
  %v199 = vpack.c.b16 %v155, %v151
  %v200 = vpack.c.b16 %v156, %v152
  %v201 = vpack.c.b16 %v161, %v157
  %v202 = vpack.c.b16 %v162, %v158
  %v203 = vpack.c.b16 %v163, %v159
  %v204 = vpack.c.b16 %v164, %v160
  %v205 = vpack.c.b16 %v169, %v165
  %v206 = vpack.c.b16 %v170, %v166
  %v207 = vpack.c.b16 %v171, %v167
  %v208 = vpack.c.b16 %v172, %v168
  %v209 = vpack.c.b16 %v177, %v173
  %v210 = vpack.c.b16 %v178, %v174
  %v211 = vpack.c.b16 %v179, %v175
  %v212 = vpack.c.b16 %v180, %v176
  %v213 = vpack.c.b16 %v185, %v181
  %v214 = vpack.c.b16 %v186, %v182
  %v215 = vpack.c.b16 %v187, %v183
  %v216 = vpack.c.b16 %v188, %v184
  %v217 = vpack.c.b16 %v189, %v189
  %v218 = vpack.c.b16 %v190, %v190
  %v219 = vpack.c.b16 %v191, %v191
  %v220 = vpack.c.b16 %v192, %v192
  %v313 = vunpack.c.l.b16 %v44
  %v314 = vunpack.c.l.b16 %v45
  %v315 = vunpack.c.l.b16 %v46
  %v316 = vunpack.c.l.b16 %v47
  %v317 = vunpack.c.l.b16 %v48
  %v318 = vunpack.c.l.b16 %v49
  %v319 = vunpack.c.l.b16 %v50
  %v320 = vunpack.c.l.b16 %v51
  %v321 = vunpack.c.l.b16 %v52
  %v322 = vunpack.c.l.b16 %v53
  %v323 = vunpack.c.l.b16 %v54
  %v324 = vunpack.c.l.b16 %v55
  %v325 = vunpack.c.l.b16 %v56
  %v326 = vunpack.c.l.b16 %v57
  %v327 = vunpack.c.l.b16 %v58
  %v328 = vunpack.c.l.b16 %v59
  %v329 = vunpack.c.l.b16 %v60
  %v330 = vunpack.c.l.b16 %v61
  %v331 = vunpack.c.l.b16 %v62
  %v332 = vunpack.c.l.b16 %v63
  %v333 = vunpack.c.l.b16 %v64
  %v334 = vunpack.c.l.b16 %v65
  %v335 = vunpack.c.l.b16 %v66
  %v336 = vunpack.c.l.b16 %v67
  %v337 = vunpack.c.l.b16 %v68
  %v338 = vunpack.c.l.b16 %v69
  %v339 = vunpack.c.l.b16 %v70
  %v340 = vunpack.c.l.b16 %v71
  %v341 = vunpack.c.l.b16 %v72
  %v342 = vunpack.c.l.b16 %v73
  %v343 = vunpack.c.l.b16 %v74
  %v344 = vunpack.c.l.b16 %v75
  %v345 = vunpack.c.l.b16 %v76
  %v346 = vunpack.c.l.b16 %v77
  %v347 = vunpack.c.l.b16 %v78
  %v348 = vunpack.c.l.b16 %v79
  %v349 = vunpack.c.l.b16 %v80
  %v350 = vunpack.c.l.b16 %v81
  %v351 = vunpack.c.l.b16 %v82
  %v352 = vunpack.c.l.b16 %v83
  %v353 = vunpack.c.l.b16 %v84
  %v354 = vunpack.c.l.b16 %v85
  %v355 = vunpack.c.l.b16 %v86
  %v356 = vunpack.c.l.b16 %v87
  %v357 = vunpack.c.l.b16 %v88
  %v358 = vunpack.c.l.b16 %v89
  %v359 = vunpack.c.l.b16 %v90
  %v360 = vunpack.c.l.b16 %v91
  %v361 = vunpack.c.l.b16 %v92
  %v362 = vunpack.c.l.b16 %v93
  %v363 = vunpack.c.l.b16 %v94
  %v364 = vunpack.c.l.b16 %v95
  %v365 = vunpack.c.l.b16 %v96
  %v366 = vunpack.c.l.b16 %v97
  %v367 = vunpack.c.l.b16 %v98
  %v368 = vunpack.c.l.b16 %v99
  %v369 = vunpack.c.l.b16 %v100
  %v370 = vunpack.c.l.b16 %v101
  %v371 = vunpack.c.l.b16 %v102
  %v372 = vunpack.c.l.b16 %v103
  %v373 = vunpack.c.l.b16 %v104
  %v374 = vunpack.c.l.b16 %v105
  %v375 = vunpack.c.l.b16 %v106
  %v376 = vunpack.c.l.b16 %v107
  %v377 = vpack.c.b16 %v314, %v313
  %v378 = vpack.c.b16 %v316, %v315
  %v379 = vpack.c.b16 %v318, %v317
  %v380 = vpack.c.b16 %v320, %v319
  %v381 = vpack.c.b16 %v322, %v321
  %v382 = vpack.c.b16 %v324, %v323
  %v383 = vpack.c.b16 %v326, %v325
  %v384 = vpack.c.b16 %v328, %v327
  %v385 = vpack.c.b16 %v330, %v329
  %v386 = vpack.c.b16 %v332, %v331
  %v387 = vpack.c.b16 %v334, %v333
  %v388 = vpack.c.b16 %v336, %v335
  %v389 = vpack.c.b16 %v338, %v337
  %v390 = vpack.c.b16 %v340, %v339
  %v391 = vpack.c.b16 %v342, %v341
  %v392 = vpack.c.b16 %v344, %v343
  %v393 = vpack.c.b16 %v346, %v345
  %v394 = vpack.c.b16 %v348, %v347
  %v395 = vpack.c.b16 %v350, %v349
  %v396 = vpack.c.b16 %v352, %v351
  %v397 = vpack.c.b16 %v354, %v353
  %v398 = vpack.c.b16 %v356, %v355
  %v399 = vpack.c.b16 %v358, %v357
  %v400 = vpack.c.b16 %v360, %v359
  %v401 = vpack.c.b16 %v362, %v361
  %v402 = vpack.c.b16 %v364, %v363
  %v403 = vpack.c.b16 %v366, %v365
  %v404 = vpack.c.b16 %v368, %v367
  %v405 = vpack.c.b16 %v370, %v369
  %v406 = vpack.c.b16 %v372, %v371
  %v407 = vpack.c.b16 %v374, %v373
  %v408 = vpack.c.b16 %v376, %v375
  %441 = vmatprep.subr.bf16.mxu0 0
  %442 = vmatpush1.bf16.msra.mxu0 %v377
  %443 = vmatprep.subr.bf16.mxu0 0
  %444 = vmatpush1.bf16.msra.mxu0 %v378
  %445 = vmatprep.subr.bf16.mxu0 0
  %446 = vmatpush1.bf16.msra.mxu0 %v379
  %447 = vmatprep.subr.bf16.mxu0 0
  %448 = vmatpush1.bf16.msra.mxu0 %v380
  %449 = vmatprep.subr.bf16.mxu0 0
  %450 = vmatpush1.bf16.msra.mxu0 %v381
  %451 = vmatprep.subr.bf16.mxu0 0
  %452 = vmatpush1.bf16.msra.mxu0 %v382
  %453 = vmatprep.subr.bf16.mxu0 0
  %454 = vmatpush1.bf16.msra.mxu0 %v383
  %455 = vmatprep.subr.bf16.mxu0 0
  %456 = vmatpush1.bf16.msra.mxu0 %v384
  %457 = vmatprep.subr.bf16.mxu0 0
  %458 = vmatpush1.bf16.msra.mxu0 %v385
  %459 = vmatprep.subr.bf16.mxu0 0
  %460 = vmatpush1.bf16.msra.mxu0 %v386
  %461 = vmatprep.subr.bf16.mxu0 0
  %462 = vmatpush1.bf16.msra.mxu0 %v387
  %463 = vmatprep.subr.bf16.mxu0 0
  %464 = vmatpush1.bf16.msra.mxu0 %v388
  %465 = vmatprep.subr.bf16.mxu0 0
  %466 = vmatpush1.bf16.msra.mxu0 %v389
  %467 = vmatprep.subr.bf16.mxu0 0
  %468 = vmatpush1.bf16.msra.mxu0 %v390
  %469 = vmatprep.subr.bf16.mxu0 0
  %470 = vmatpush1.bf16.msra.mxu0 %v391
  %471 = vmatprep.subr.bf16.mxu0 0
  %472 = vmatpush1.bf16.msra.mxu0 %v392
  %473 = vmatprep.mubr.bf16.mxu0 %v194
  %474 = vmatmul.mubr.bf16.gmra.mrb[0].mxu0 %v193
  %v475 = vpop.f32.mrb[0].mxu0
  %v476 = vadd.f32 %v113, %v475
  %v477 = vpop.f32.mrb[0].mxu0
  %v478 = vpop.f32.mrb[0].mxu0
  %v479 = vadd.f32 %v113, %v478
  %v480 = vpop.f32.mrb[0].mxu0
  %481 = vmatprep.mubr.bf16.mxu0 %v198
  %482 = vmatmul.mubr.bf16.gmra.mrb[0].mxu0 %v197
  %v483 = vpop.f32.mrb[0].mxu0
  %v484 = vadd.f32 %v113, %v483
  %v485 = vpop.f32.mrb[0].mxu0
  %v486 = vpop.f32.mrb[0].mxu0
  %v487 = vadd.f32 %v113, %v486
  %v488 = vpop.f32.mrb[0].mxu0
  %489 = vmatprep.mubr.bf16.mxu0 %v202
  %490 = vmatmul.mubr.bf16.gmra.mrb[0].mxu0 %v201
  %v491 = vpop.f32.mrb[0].mxu0
  %v492 = vadd.f32 %v113, %v491
  %v493 = vpop.f32.mrb[0].mxu0
  %v494 = vpop.f32.mrb[0].mxu0
  %v495 = vadd.f32 %v113, %v494
  %v496 = vpop.f32.mrb[0].mxu0
  %497 = vmatprep.mubr.bf16.mxu0 %v206
  %498 = vmatmul.mubr.bf16.gmra.mrb[0].mxu0 %v205
  %v499 = vpop.f32.mrb[0].mxu0
  %v500 = vadd.f32 %v113, %v499
  %v501 = vpop.f32.mrb[0].mxu0
  %v502 = vpop.f32.mrb[0].mxu0
  %v503 = vadd.f32 %v113, %v502
  %v504 = vpop.f32.mrb[0].mxu0
  %505 = vmatprep.mubr.bf16.mxu0 %v210
  %506 = vmatmul.mubr.bf16.gmra.mrb[0].mxu0 %v209
  %v507 = vpop.f32.mrb[0].mxu0
  %v508 = vadd.f32 %v113, %v507
  %v509 = vpop.f32.mrb[0].mxu0
  %v510 = vpop.f32.mrb[0].mxu0
  %v511 = vadd.f32 %v113, %v510
  %v512 = vpop.f32.mrb[0].mxu0
  %513 = vmatprep.mubr.bf16.mxu0 %v214
  %514 = vmatmul.mubr.bf16.gmra.mrb[0].mxu0 %v213
  %v515 = vpop.f32.mrb[0].mxu0
  %v516 = vadd.f32 %v113, %v515
  %v517 = vpop.f32.mrb[0].mxu0
  %v518 = vpop.f32.mrb[0].mxu0
  %v519 = vadd.f32 %v113, %v518
  %v520 = vpop.f32.mrb[0].mxu0
  %521 = vmatprep.mubr.bf16.mxu0 %v218
  %522 = vmatmul.mubr.bf16.gmra.mrb[0].mxu0 %v217
  %v523 = vpop.f32.mrb[0].mxu0
  %v524 = vadd.f32 %v113, %v523
  %v525 = vpop.f32.mrb[0].mxu0
  %v526 = vpop.f32.mrb[0].mxu0
  %v527 = vpop.f32.mrb[0].mxu0
  %528 = vdwg.mxu0
  %529 = vmatprep.subr.bf16.mxu0 0
  %530 = vmatpush1.bf16.msra.mxu0 %v393
  %531 = vmatprep.subr.bf16.mxu0 0
  %532 = vmatpush1.bf16.msra.mxu0 %v394
  %533 = vmatprep.subr.bf16.mxu0 0
  %534 = vmatpush1.bf16.msra.mxu0 %v395
  %535 = vmatprep.subr.bf16.mxu0 0
  %536 = vmatpush1.bf16.msra.mxu0 %v396
  %537 = vmatprep.subr.bf16.mxu0 0
  %538 = vmatpush1.bf16.msra.mxu0 %v397
  %539 = vmatprep.subr.bf16.mxu0 0
  %540 = vmatpush1.bf16.msra.mxu0 %v398
  %541 = vmatprep.subr.bf16.mxu0 0
  %542 = vmatpush1.bf16.msra.mxu0 %v399
  %543 = vmatprep.subr.bf16.mxu0 0
  %544 = vmatpush1.bf16.msra.mxu0 %v400
  %545 = vmatprep.subr.bf16.mxu0 0
  %546 = vmatpush1.bf16.msra.mxu0 %v401
  %547 = vmatprep.subr.bf16.mxu0 0
  %548 = vmatpush1.bf16.msra.mxu0 %v402
  %549 = vmatprep.subr.bf16.mxu0 0
  %550 = vmatpush1.bf16.msra.mxu0 %v403
  %551 = vmatprep.subr.bf16.mxu0 0
  %552 = vmatpush1.bf16.msra.mxu0 %v404
  %553 = vmatprep.subr.bf16.mxu0 0
  %554 = vmatpush1.bf16.msra.mxu0 %v405
  %555 = vmatprep.subr.bf16.mxu0 0
  %556 = vmatpush1.bf16.msra.mxu0 %v406
  %557 = vmatprep.subr.bf16.mxu0 0
  %558 = vmatpush1.bf16.msra.mxu0 %v407
  %559 = vmatprep.subr.bf16.mxu0 0
  %560 = vmatpush1.bf16.msra.mxu0 %v408
  %561 = vmatprep.mubr.bf16.mxu0 %v196
  %562 = vmatmul.mubr.bf16.gmra.mrb[0].mxu0 %v195
  %v563 = vpop.f32.mrb[0].mxu0
  %v564 = vadd.f32 %v476, %v563
  %v565 = vpop.f32.mrb[0].mxu0
  %v566 = vpop.f32.mrb[0].mxu0
  %v567 = vadd.f32 %v479, %v566
  %v568 = vpop.f32.mrb[0].mxu0
  %569 = vmatprep.mubr.bf16.mxu0 %v200
  %570 = vmatmul.mubr.bf16.gmra.mrb[0].mxu0 %v199
  %v571 = vpop.f32.mrb[0].mxu0
  %v572 = vadd.f32 %v484, %v571
  %v573 = vpop.f32.mrb[0].mxu0
  %v574 = vpop.f32.mrb[0].mxu0
  %v575 = vadd.f32 %v487, %v574
  %v576 = vpop.f32.mrb[0].mxu0
  %577 = vmatprep.mubr.bf16.mxu0 %v204
  %578 = vmatmul.mubr.bf16.gmra.mrb[0].mxu0 %v203
  %v579 = vpop.f32.mrb[0].mxu0
  %v580 = vadd.f32 %v492, %v579
  %v581 = vpop.f32.mrb[0].mxu0
  %v582 = vpop.f32.mrb[0].mxu0
  %v583 = vadd.f32 %v495, %v582
  %v584 = vpop.f32.mrb[0].mxu0
  %585 = vmatprep.mubr.bf16.mxu0 %v208
  %586 = vmatmul.mubr.bf16.gmra.mrb[0].mxu0 %v207
  %v587 = vpop.f32.mrb[0].mxu0
  %v588 = vadd.f32 %v500, %v587
  %v589 = vpop.f32.mrb[0].mxu0
  %v590 = vpop.f32.mrb[0].mxu0
  %v591 = vadd.f32 %v503, %v590
  %v592 = vpop.f32.mrb[0].mxu0
  %593 = vmatprep.mubr.bf16.mxu0 %v212
  %594 = vmatmul.mubr.bf16.gmra.mrb[0].mxu0 %v211
  %v595 = vpop.f32.mrb[0].mxu0
  %v596 = vadd.f32 %v508, %v595
  %v597 = vpop.f32.mrb[0].mxu0
  %v598 = vpop.f32.mrb[0].mxu0
  %v599 = vadd.f32 %v511, %v598
  %v600 = vpop.f32.mrb[0].mxu0
  %601 = vmatprep.mubr.bf16.mxu0 %v216
  %602 = vmatmul.mubr.bf16.gmra.mrb[0].mxu0 %v215
  %v603 = vpop.f32.mrb[0].mxu0
  %v604 = vadd.f32 %v516, %v603
  %v605 = vpop.f32.mrb[0].mxu0
  %v606 = vpop.f32.mrb[0].mxu0
  %v607 = vadd.f32 %v519, %v606
  %v608 = vpop.f32.mrb[0].mxu0
  %609 = vmatprep.mubr.bf16.mxu0 %v220
  %610 = vmatmul.mubr.bf16.gmra.mrb[0].mxu0 %v219
  %v611 = vpop.f32.mrb[0].mxu0
  %v612 = vadd.f32 %v524, %v611
  %v613 = vpop.f32.mrb[0].mxu0
  %v614 = vpop.f32.mrb[0].mxu0
  %v615 = vpop.f32.mrb[0].mxu0
  %616 = vdwg.mxu0
  %v617 = vld [vmem:[%s3] sm:$0xff]
  %v618 = vld [vmem:[%s3 + $0x8] sm:$0xff]
  %v619 = vld [vmem:[%s3 + $0x10] sm:$0xff]
  %v620 = vld [vmem:[%s3 + $0x18] sm:$0xff]
  %v621 = vld [vmem:[%s3 + $0x20] sm:$0xff]
  %v622 = vld [vmem:[%s3 + $0x28] sm:$0xff]
  %v623 = vld [vmem:[%s3 + $0x30] sm:$0xff]
  %v624 = vld [vmem:[%s3 + $0x38] sm:$0xff]
  %v625 = vld [vmem:[%s3 + $0x40] sm:$0xff]
  %v626 = vld [vmem:[%s3 + $0x48] sm:$0xff]
  %v627 = vld [vmem:[%s3 + $0x50] sm:$0xff]
  %v628 = vld [vmem:[%s3 + $0x58] sm:$0xff]
  %v629 = vld [vmem:[%s3 + $0x60] sm:$0x3]
  %v630 = vadd.f32 %v564, %v617
  %v631 = vadd.f32 %v567, %v618
  %v632 = vadd.f32 %v572, %v619
  %v633 = vadd.f32 %v575, %v620
  %v634 = vadd.f32 %v580, %v621
  %v635 = vadd.f32 %v583, %v622
  %v636 = vadd.f32 %v588, %v623
  %v637 = vadd.f32 %v591, %v624
  %v638 = vadd.f32 %v596, %v625
  %v639 = vadd.f32 %v599, %v626
  %v640 = vadd.f32 %v604, %v627
  %v641 = vadd.f32 %v607, %v628
  %v642 = vadd.f32 %v612, %v629
  %643 = vst [vmem:[%s4] sm:$0xff] %v630
  %644 = vst [vmem:[%s4 + $0x8] sm:$0xff] %v631
  %645 = vst [vmem:[%s4 + $0x10] sm:$0xff] %v632
  %646 = vst [vmem:[%s4 + $0x18] sm:$0xff] %v633
  %647 = vst [vmem:[%s4 + $0x20] sm:$0xff] %v634
  %648 = vst [vmem:[%s4 + $0x28] sm:$0xff] %v635
  %649 = vst [vmem:[%s4 + $0x30] sm:$0xff] %v636
  %650 = vst [vmem:[%s4 + $0x38] sm:$0xff] %v637
  %651 = vst [vmem:[%s4 + $0x40] sm:$0xff] %v638
  %652 = vst [vmem:[%s4 + $0x48] sm:$0xff] %v639
  %653 = vst [vmem:[%s4 + $0x50] sm:$0xff] %v640
  %654 = vst [vmem:[%s4 + $0x58] sm:$0xff] %v641
  %655 = vst [vmem:[%s4 + $0x60] sm:$0x3] %v642
  // Predicated region
  $region18: #{swin_block_forward.9} parent=0 // pred_check
    _
  $region19: #{swin_block_forward.9} parent=0 // pred_check_branch
    %657 = sbr.rel (0) target = $region21
  $region20: #{swin_block_forward.9} parent=0 // pred_region
    _
  $region21: #{swin_block_forward.9} parent=0 // pred_fallthru
    _
  // Predicated region
  $region22: #{swin_block_forward.9} parent=0 // pred_check
    _
  $region23: #{swin_block_forward.9} parent=0 // pred_check_branch
    %659 = sbr.rel (0) target = $region25
  $region24: #{swin_block_forward.9} parent=0 // pred_region
    _
  $region25: #{swin_block_forward.9} parent=0 // pred_fallthru
    _

// kernel: swin_block_forward.8
$region0: #{swin_block_forward.8}
  #allocation0 [shape = 'u32[]', space=smem, size = 0x4, offset = 0x4, fixed_abs, tag = 'smem constant byte address 0x4 - core index']
  #allocation1 [shape = 'u32[144,128]{1,0:T(1,128)}', space=vmem, size = 0x12000, scoped, tag = 'internal scratch']
  %s0 = inlined_call_operand.vmem [shape: f32[98,128], index: 0, kind: input, shape index: {}]
  %s1 = inlined_call_operand.vmem [shape: f32[1,128], index: 1, kind: input, shape index: {}]
  %s2 = inlined_call_operand.vmem [shape: f32[1,128], index: 2, kind: input, shape index: {}]
  %s3 = inlined_call_operand.vmem [shape: bf16[128,512], index: 3, kind: input, shape index: {}]
  %s4 = inlined_call_operand.vmem [shape: f32[1,512], index: 4, kind: input, shape index: {}]
  %s5 = inlined_call_operand.vmem [shape: bf16[98,512], index: 5, kind: output, shape index: {}]
  %s6 = sld [smem:[#allocation0]]
  $region30: #{swin_block_forward.8} parent=0
    _
  %s8 = ssub.s32 1, %s6
  %s9 = scalar_select 0, %s8, %s6
  // Predicated region
  $region2: #{swin_block_forward.8} parent=0 // pred_check
    _
  $region3: #{swin_block_forward.8} parent=0 // pred_check_branch
    %11 = sbr.rel (0) target = $region5
  $region4: #{swin_block_forward.8} parent=0 // pred_region
    _
  $region5: #{swin_block_forward.8} parent=0 // pred_fallthru
    _
  // Predicated region
  $region6: #{swin_block_forward.8} parent=0 // pred_check
    _
  $region7: #{swin_block_forward.8} parent=0 // pred_check_branch
    %13 = sbr.rel (0) target = $region9
  $region8: #{swin_block_forward.8} parent=0 // pred_region
    _
  $region9: #{swin_block_forward.8} parent=0 // pred_fallthru
    _
  // Predicated region
  $region10: #{swin_block_forward.8} parent=0 // pred_check
    _
  $region11: #{swin_block_forward.8} parent=0 // pred_check_branch
    %15 = sbr.rel (0) target = $region13
  $region12: #{swin_block_forward.8} parent=0 // pred_region
    _
  $region13: #{swin_block_forward.8} parent=0 // pred_fallthru
    _
  // Predicated region
  $region14: #{swin_block_forward.8} parent=0 // pred_check
    _
  $region15: #{swin_block_forward.8} parent=0 // pred_check_branch
    %17 = sbr.rel (0) target = $region17
  $region16: #{swin_block_forward.8} parent=0 // pred_region
    _
  $region17: #{swin_block_forward.8} parent=0 // pred_fallthru
    _
  // Predicated region
  $region18: #{swin_block_forward.8} parent=0 // pred_check
    _
  $region19: #{swin_block_forward.8} parent=0 // pred_check_branch
    %19 = sbr.rel (0) target = $region21
  $region20: #{swin_block_forward.8} parent=0 // pred_region
    _
  $region21: #{swin_block_forward.8} parent=0 // pred_fallthru
    _
  %v21 = vld [vmem:[%s0] sm:$0xff]
  %v22 = vld [vmem:[%s0 + $0x8] sm:$0xff]
  %v23 = vld [vmem:[%s0 + $0x10] sm:$0xff]
  %v24 = vld [vmem:[%s0 + $0x18] sm:$0xff]
  %v25 = vld [vmem:[%s0 + $0x20] sm:$0xff]
  %v26 = vld [vmem:[%s0 + $0x28] sm:$0xff]
  %v27 = vld [vmem:[%s0 + $0x30] sm:$0xff]
  %v28 = vld [vmem:[%s0 + $0x38] sm:$0xff]
  %v29 = vld [vmem:[%s0 + $0x40] sm:$0xff]
  %v30 = vld [vmem:[%s0 + $0x48] sm:$0xff]
  %v31 = vld [vmem:[%s0 + $0x50] sm:$0xff]
  %v32 = vld [vmem:[%s0 + $0x58] sm:$0xff]
  %v33 = vld [vmem:[%s0 + $0x60] sm:$0x3]
  %34 = vadd.xlane.f32.xlu0 %v21
  %v35 = vpop.xlane.xlu0 %34
  %36 = vadd.xlane.f32.xlu0 %v22
  %v37 = vpop.xlane.xlu0 %36
  %38 = vadd.xlane.f32.xlu0 %v23
  %v39 = vpop.xlane.xlu0 %38
  %40 = vadd.xlane.f32.xlu0 %v24
  %v41 = vpop.xlane.xlu0 %40
  %42 = vadd.xlane.f32.xlu0 %v25
  %v43 = vpop.xlane.xlu0 %42
  %44 = vadd.xlane.f32.xlu0 %v26
  %v45 = vpop.xlane.xlu0 %44
  %46 = vadd.xlane.f32.xlu0 %v27
  %v47 = vpop.xlane.xlu0 %46
  %48 = vadd.xlane.f32.xlu0 %v28
  %v49 = vpop.xlane.xlu0 %48
  %50 = vadd.xlane.f32.xlu0 %v29
  %v51 = vpop.xlane.xlu0 %50
  %52 = vadd.xlane.f32.xlu0 %v30
  %v53 = vpop.xlane.xlu0 %52
  %54 = vadd.xlane.f32.xlu0 %v31
  %v55 = vpop.xlane.xlu0 %54
  %56 = vadd.xlane.f32.xlu0 %v32
  %v57 = vpop.xlane.xlu0 %56
  %vm58 = vcmask 1041408
  %v59 = vsel %vm58, %v33, 0.0
  %60 = vadd.xlane.f32.xlu0 %v59
  %v61 = vpop.xlane.xlu0 %60
  %v62 = vrcp.pop 128.0
  %v63 = vmul.f32 %v35, %v62
  %v64 = vmul.f32 %v37, %v62
  %v65 = vmul.f32 %v39, %v62
  %v66 = vmul.f32 %v41, %v62
  %v67 = vmul.f32 %v43, %v62
  %v68 = vmul.f32 %v45, %v62
  %v69 = vmul.f32 %v47, %v62
  %v70 = vmul.f32 %v49, %v62
  %v71 = vmul.f32 %v51, %v62
  %v72 = vmul.f32 %v53, %v62
  %v73 = vmul.f32 %v55, %v62
  %v74 = vmul.f32 %v57, %v62
  %v75 = vmul.f32 %v61, %v62
  %v76 = vsub.f32 %v21, %v63
  %v77 = vsub.f32 %v22, %v64
  %v78 = vsub.f32 %v23, %v65
  %v79 = vsub.f32 %v24, %v66
  %v80 = vsub.f32 %v25, %v67
  %v81 = vsub.f32 %v26, %v68
  %v82 = vsub.f32 %v27, %v69
  %v83 = vsub.f32 %v28, %v70
  %v84 = vsub.f32 %v29, %v71
  %v85 = vsub.f32 %v30, %v72
  %v86 = vsub.f32 %v31, %v73
  %v87 = vsub.f32 %v32, %v74
  %v88 = vsub.f32 %v33, %v75
  %v89 = vmul.f32 %v76, %v76
  %v90 = vmul.f32 %v77, %v77
  %v91 = vmul.f32 %v78, %v78
  %v92 = vmul.f32 %v79, %v79
  %v93 = vmul.f32 %v80, %v80
  %v94 = vmul.f32 %v81, %v81
  %v95 = vmul.f32 %v82, %v82
  %v96 = vmul.f32 %v83, %v83
  %v97 = vmul.f32 %v84, %v84
  %v98 = vmul.f32 %v85, %v85
  %v99 = vmul.f32 %v86, %v86
  %v100 = vmul.f32 %v87, %v87
  %v101 = vmul.f32 %v88, %v88
  %102 = vadd.xlane.f32.xlu0 %v89
  %v103 = vpop.xlane.xlu0 %102
  %104 = vadd.xlane.f32.xlu0 %v90
  %v105 = vpop.xlane.xlu0 %104
  %106 = vadd.xlane.f32.xlu0 %v91
  %v107 = vpop.xlane.xlu0 %106
  %108 = vadd.xlane.f32.xlu0 %v92
  %v109 = vpop.xlane.xlu0 %108
  %110 = vadd.xlane.f32.xlu0 %v93
  %v111 = vpop.xlane.xlu0 %110
  %112 = vadd.xlane.f32.xlu0 %v94
  %v113 = vpop.xlane.xlu0 %112
  %114 = vadd.xlane.f32.xlu0 %v95
  %v115 = vpop.xlane.xlu0 %114
  %116 = vadd.xlane.f32.xlu0 %v96
  %v117 = vpop.xlane.xlu0 %116
  %118 = vadd.xlane.f32.xlu0 %v97
  %v119 = vpop.xlane.xlu0 %118
  %120 = vadd.xlane.f32.xlu0 %v98
  %v121 = vpop.xlane.xlu0 %120
  %122 = vadd.xlane.f32.xlu0 %v99
  %v123 = vpop.xlane.xlu0 %122
  %124 = vadd.xlane.f32.xlu0 %v100
  %v125 = vpop.xlane.xlu0 %124
  %v126 = vsel %vm58, %v101, 0.0
  %127 = vadd.xlane.f32.xlu0 %v126
  %v128 = vpop.xlane.xlu0 %127
  %v129 = vmul.f32 %v103, %v62
  %v130 = vmul.f32 %v105, %v62
  %v131 = vmul.f32 %v107, %v62
  %v132 = vmul.f32 %v109, %v62
  %v133 = vmul.f32 %v111, %v62
  %v134 = vmul.f32 %v113, %v62
  %v135 = vmul.f32 %v115, %v62
  %v136 = vmul.f32 %v117, %v62
  %v137 = vmul.f32 %v119, %v62
  %v138 = vmul.f32 %v121, %v62
  %v139 = vmul.f32 %v123, %v62
  %v140 = vmul.f32 %v125, %v62
  %v141 = vmul.f32 %v128, %v62
  %v142 = vadd.f32 %v129, 1e-05
  %v143 = vadd.f32 %v130, 1e-05
  %v144 = vadd.f32 %v131, 1e-05
  %v145 = vadd.f32 %v132, 1e-05
  %v146 = vadd.f32 %v133, 1e-05
  %v147 = vadd.f32 %v134, 1e-05
  %v148 = vadd.f32 %v135, 1e-05
  %v149 = vadd.f32 %v136, 1e-05
  %v150 = vadd.f32 %v137, 1e-05
  %v151 = vadd.f32 %v138, 1e-05
  %v152 = vadd.f32 %v139, 1e-05
  %v153 = vadd.f32 %v140, 1e-05
  %v154 = vadd.f32 %v141, 1e-05
  %v155 = vrsqrt.pop %v142
  %v156 = vrsqrt.pop %v143
  %v157 = vrsqrt.pop %v144
  %v158 = vrsqrt.pop %v145
  %v159 = vrsqrt.pop %v146
  %v160 = vrsqrt.pop %v147
  %v161 = vrsqrt.pop %v148
  %v162 = vrsqrt.pop %v149
  %v163 = vrsqrt.pop %v150
  %v164 = vrsqrt.pop %v151
  %v165 = vrsqrt.pop %v152
  %v166 = vrsqrt.pop %v153
  %v167 = vrsqrt.pop %v154
  %v168 = vmul.f32 %v76, %v155
  %v169 = vmul.f32 %v77, %v156
  %v170 = vmul.f32 %v78, %v157
  %v171 = vmul.f32 %v79, %v158
  %v172 = vmul.f32 %v80, %v159
  %v173 = vmul.f32 %v81, %v160
  %v174 = vmul.f32 %v82, %v161
  %v175 = vmul.f32 %v83, %v162
  %v176 = vmul.f32 %v84, %v163
  %v177 = vmul.f32 %v85, %v164
  %v178 = vmul.f32 %v86, %v165
  %v179 = vmul.f32 %v87, %v166
  %v180 = vmul.f32 %v88, %v167
  %v181 = vld [vmem:[%s1] sm:$0x1]
  %v183 = vlaneseq
  %v184 = vshrl.u32 %v183, 7
  %v185 = vsub.s32 0, %v184
  %v186 = vrot.slane %v181, %v185
  %v188 = vmul.f32 %v168, %v186
  %v189 = vmul.f32 %v169, %v186
  %v190 = vmul.f32 %v170, %v186
  %v191 = vmul.f32 %v171, %v186
  %v192 = vmul.f32 %v172, %v186
  %v193 = vmul.f32 %v173, %v186
  %v194 = vmul.f32 %v174, %v186
  %v195 = vmul.f32 %v175, %v186
  %v196 = vmul.f32 %v176, %v186
  %v197 = vmul.f32 %v177, %v186
  %v198 = vmul.f32 %v178, %v186
  %v199 = vmul.f32 %v179, %v186
  %v200 = vmul.f32 %v180, %v186
  %v201 = vld [vmem:[%s2] sm:$0x1]
  %v203 = vlaneseq
  %v204 = vshrl.u32 %v203, 7
  %v205 = vsub.s32 0, %v204
  %v206 = vrot.slane %v201, %v205
  %v208 = vadd.f32 %v188, %v206
  %v209 = vadd.f32 %v189, %v206
  %v210 = vadd.f32 %v190, %v206
  %v211 = vadd.f32 %v191, %v206
  %v212 = vadd.f32 %v192, %v206
  %v213 = vadd.f32 %v193, %v206
  %v214 = vadd.f32 %v194, %v206
  %v215 = vadd.f32 %v195, %v206
  %v216 = vadd.f32 %v196, %v206
  %v217 = vadd.f32 %v197, %v206
  %v218 = vadd.f32 %v198, %v206
  %v219 = vadd.f32 %v199, %v206
  %v220 = vadd.f32 %v200, %v206
  %v221 = vpack.c.bf16 %v209, %v208
  %v222 = vpack.c.bf16 %v211, %v210
  %v223 = vpack.c.bf16 %v213, %v212
  %v224 = vpack.c.bf16 %v215, %v214
  %v225 = vpack.c.bf16 %v217, %v216
  %v226 = vpack.c.bf16 %v219, %v218
  %v227 = vpack.c.bf16 %v220, %v220
  %v228 = vld [vmem:[%s3] sm:$0xff]
  %v229 = vld [vmem:[%s3 + $0x8] sm:$0xff]
  %v230 = vld [vmem:[%s3 + $0x10] sm:$0xff]
  %v231 = vld [vmem:[%s3 + $0x18] sm:$0xff]
  %v232 = vld [vmem:[%s3 + $0x20] sm:$0xff]
  %v233 = vld [vmem:[%s3 + $0x28] sm:$0xff]
  %v234 = vld [vmem:[%s3 + $0x30] sm:$0xff]
  %v235 = vld [vmem:[%s3 + $0x38] sm:$0xff]
  %v236 = vld [vmem:[%s3 + $0x40] sm:$0xff]
  %v237 = vld [vmem:[%s3 + $0x48] sm:$0xff]
  %v238 = vld [vmem:[%s3 + $0x50] sm:$0xff]
  %v239 = vld [vmem:[%s3 + $0x58] sm:$0xff]
  %v240 = vld [vmem:[%s3 + $0x60] sm:$0xff]
  %v241 = vld [vmem:[%s3 + $0x68] sm:$0xff]
  %v242 = vld [vmem:[%s3 + $0x70] sm:$0xff]
  %v243 = vld [vmem:[%s3 + $0x78] sm:$0xff]
  %v244 = vld [vmem:[%s3 + $0x80] sm:$0xff]
  %v245 = vld [vmem:[%s3 + $0x88] sm:$0xff]
  %v246 = vld [vmem:[%s3 + $0x90] sm:$0xff]
  %v247 = vld [vmem:[%s3 + $0x98] sm:$0xff]
  %v248 = vld [vmem:[%s3 + $0xa0] sm:$0xff]
  %v249 = vld [vmem:[%s3 + $0xa8] sm:$0xff]
  %v250 = vld [vmem:[%s3 + $0xb0] sm:$0xff]
  %v251 = vld [vmem:[%s3 + $0xb8] sm:$0xff]
  %v252 = vld [vmem:[%s3 + $0xc0] sm:$0xff]
  %v253 = vld [vmem:[%s3 + $0xc8] sm:$0xff]
  %v254 = vld [vmem:[%s3 + $0xd0] sm:$0xff]
  %v255 = vld [vmem:[%s3 + $0xd8] sm:$0xff]
  %v256 = vld [vmem:[%s3 + $0xe0] sm:$0xff]
  %v257 = vld [vmem:[%s3 + $0xe8] sm:$0xff]
  %v258 = vld [vmem:[%s3 + $0xf0] sm:$0xff]
  %v259 = vld [vmem:[%s3 + $0xf8] sm:$0xff]
  %v260 = vld [vmem:[%s4] sm:$0xf]
  %v262 = vlaneseq
  %v263 = vshrl.u32 %v262, 7
  %v264 = vsub.s32 0, %v263
  %v265 = vrot.slane %v260, %v264
  %v266 = vlaneseq
  %v267 = vshrl.u32 %v266, 7
  %v268 = vsub.s32 1, %v267
  %v269 = vrot.slane %v260, %v268
  %v270 = vlaneseq
  %v271 = vshrl.u32 %v270, 7
  %v272 = vsub.s32 2, %v271
  %v273 = vrot.slane %v260, %v272
  %v274 = vlaneseq
  %v275 = vshrl.u32 %v274, 7
  %v276 = vsub.s32 3, %v275
  %v277 = vrot.slane %v260, %v276
  %v314 = vunpack.c.l.b16 %v228
  %v315 = vunpack.c.h.b16 %v228
  %v316 = vunpack.c.l.b16 %v229
  %v317 = vunpack.c.h.b16 %v229
  %v318 = vunpack.c.l.b16 %v230
  %v319 = vunpack.c.h.b16 %v230
  %v320 = vunpack.c.l.b16 %v231
  %v321 = vunpack.c.h.b16 %v231
  %v322 = vunpack.c.l.b16 %v232
  %v323 = vunpack.c.h.b16 %v232
  %v324 = vunpack.c.l.b16 %v233
  %v325 = vunpack.c.h.b16 %v233
  %v326 = vunpack.c.l.b16 %v234
  %v327 = vunpack.c.h.b16 %v234
  %v328 = vunpack.c.l.b16 %v235
  %v329 = vunpack.c.h.b16 %v235
  %v330 = vunpack.c.l.b16 %v236
  %v331 = vunpack.c.h.b16 %v236
  %v332 = vunpack.c.l.b16 %v237
  %v333 = vunpack.c.h.b16 %v237
  %v334 = vunpack.c.l.b16 %v238
  %v335 = vunpack.c.h.b16 %v238
  %v336 = vunpack.c.l.b16 %v239
  %v337 = vunpack.c.h.b16 %v239
  %v338 = vunpack.c.l.b16 %v240
  %v339 = vunpack.c.h.b16 %v240
  %v340 = vunpack.c.l.b16 %v241
  %v341 = vunpack.c.h.b16 %v241
  %v342 = vunpack.c.l.b16 %v242
  %v343 = vunpack.c.h.b16 %v242
  %v344 = vunpack.c.l.b16 %v243
  %v345 = vunpack.c.h.b16 %v243
  %v346 = vunpack.c.l.b16 %v244
  %v347 = vunpack.c.h.b16 %v244
  %v348 = vunpack.c.l.b16 %v245
  %v349 = vunpack.c.h.b16 %v245
  %v350 = vunpack.c.l.b16 %v246
  %v351 = vunpack.c.h.b16 %v246
  %v352 = vunpack.c.l.b16 %v247
  %v353 = vunpack.c.h.b16 %v247
  %v354 = vunpack.c.l.b16 %v248
  %v355 = vunpack.c.h.b16 %v248
  %v356 = vunpack.c.l.b16 %v249
  %v357 = vunpack.c.h.b16 %v249
  %v358 = vunpack.c.l.b16 %v250
  %v359 = vunpack.c.h.b16 %v250
  %v360 = vunpack.c.l.b16 %v251
  %v361 = vunpack.c.h.b16 %v251
  %v362 = vunpack.c.l.b16 %v252
  %v363 = vunpack.c.h.b16 %v252
  %v364 = vunpack.c.l.b16 %v253
  %v365 = vunpack.c.h.b16 %v253
  %v366 = vunpack.c.l.b16 %v254
  %v367 = vunpack.c.h.b16 %v254
  %v368 = vunpack.c.l.b16 %v255
  %v369 = vunpack.c.h.b16 %v255
  %v370 = vunpack.c.l.b16 %v256
  %v371 = vunpack.c.h.b16 %v256
  %v372 = vunpack.c.l.b16 %v257
  %v373 = vunpack.c.h.b16 %v257
  %v374 = vunpack.c.l.b16 %v258
  %v375 = vunpack.c.h.b16 %v258
  %v376 = vunpack.c.l.b16 %v259
  %v377 = vunpack.c.h.b16 %v259
  %v378 = vpack.c.b16 %v318, %v314
  %v379 = vpack.c.b16 %v319, %v315
  %v380 = vpack.c.b16 %v320, %v316
  %v381 = vpack.c.b16 %v321, %v317
  %v382 = vpack.c.b16 %v326, %v322
  %v383 = vpack.c.b16 %v327, %v323
  %v384 = vpack.c.b16 %v328, %v324
  %v385 = vpack.c.b16 %v329, %v325
  %v386 = vpack.c.b16 %v334, %v330
  %v387 = vpack.c.b16 %v335, %v331
  %v388 = vpack.c.b16 %v336, %v332
  %v389 = vpack.c.b16 %v337, %v333
  %v390 = vpack.c.b16 %v342, %v338
  %v391 = vpack.c.b16 %v343, %v339
  %v392 = vpack.c.b16 %v344, %v340
  %v393 = vpack.c.b16 %v345, %v341
  %v394 = vpack.c.b16 %v350, %v346
  %v395 = vpack.c.b16 %v351, %v347
  %v396 = vpack.c.b16 %v352, %v348
  %v397 = vpack.c.b16 %v353, %v349
  %v398 = vpack.c.b16 %v358, %v354
  %v399 = vpack.c.b16 %v359, %v355
  %v400 = vpack.c.b16 %v360, %v356
  %v401 = vpack.c.b16 %v361, %v357
  %v402 = vpack.c.b16 %v366, %v362
  %v403 = vpack.c.b16 %v367, %v363
  %v404 = vpack.c.b16 %v368, %v364
  %v405 = vpack.c.b16 %v369, %v365
  %v406 = vpack.c.b16 %v374, %v370
  %v407 = vpack.c.b16 %v375, %v371
  %v408 = vpack.c.b16 %v376, %v372
  %v409 = vpack.c.b16 %v377, %v373
  %442 = vmatprep.subr.bf16.mxu0 %v379
  %443 = vmatpush1.bf16.msra.mxu0 %v378
  %444 = vmatprep.subr.bf16.mxu0 %v383
  %445 = vmatpush1.bf16.msra.mxu0 %v382
  %446 = vmatprep.subr.bf16.mxu0 %v387
  %447 = vmatpush1.bf16.msra.mxu0 %v386
  %448 = vmatprep.subr.bf16.mxu0 %v391
  %449 = vmatpush1.bf16.msra.mxu0 %v390
  %450 = vmatprep.subr.bf16.mxu0 %v395
  %451 = vmatpush1.bf16.msra.mxu0 %v394
  %452 = vmatprep.subr.bf16.mxu0 %v399
  %453 = vmatpush1.bf16.msra.mxu0 %v398
  %454 = vmatprep.subr.bf16.mxu0 %v403
  %455 = vmatpush1.bf16.msra.mxu0 %v402
  %456 = vmatprep.subr.bf16.mxu0 %v407
  %457 = vmatpush1.bf16.msra.mxu0 %v406
  %458 = vmatprep.subr.bf16.mxu0 0
  %459 = vmatpush1.bf16.msra.mxu0 0
  %460 = vmatprep.subr.bf16.mxu0 0
  %461 = vmatpush1.bf16.msra.mxu0 0
  %462 = vmatprep.subr.bf16.mxu0 0
  %463 = vmatpush1.bf16.msra.mxu0 0
  %464 = vmatprep.subr.bf16.mxu0 0
  %465 = vmatpush1.bf16.msra.mxu0 0
  %466 = vmatprep.subr.bf16.mxu0 0
  %467 = vmatpush1.bf16.msra.mxu0 0
  %468 = vmatprep.subr.bf16.mxu0 0
  %469 = vmatpush1.bf16.msra.mxu0 0
  %470 = vmatprep.subr.bf16.mxu0 0
  %471 = vmatpush1.bf16.msra.mxu0 0
  %472 = vmatprep.subr.bf16.mxu0 0
  %473 = vmatpush1.bf16.msra.mxu0 0
  %474 = vmatprep.mubr.bf16.mxu0 0
  %475 = vmatmul.mubr.bf16.gmra.mrb[0].mxu0 %v221
  %v476 = vpop.f32.mrb[0].mxu0
  %v477 = vadd.f32 %v265, %v476
  %v478 = vpop.f32.mrb[0].mxu0
  %v479 = vadd.f32 %v269, %v478
  %v480 = vpop.f32.mrb[0].mxu0
  %v481 = vadd.f32 %v265, %v480
  %v482 = vpop.f32.mrb[0].mxu0
  %v483 = vadd.f32 %v269, %v482
  %484 = vmatprep.mubr.bf16.mxu0 0
  %485 = vmatmul.mubr.bf16.gmra.mrb[0].mxu0 %v222
  %v486 = vpop.f32.mrb[0].mxu0
  %v487 = vadd.f32 %v265, %v486
  %v488 = vpop.f32.mrb[0].mxu0
  %v489 = vadd.f32 %v269, %v488
  %v490 = vpop.f32.mrb[0].mxu0
  %v491 = vadd.f32 %v265, %v490
  %v492 = vpop.f32.mrb[0].mxu0
  %v493 = vadd.f32 %v269, %v492
  %494 = vmatprep.mubr.bf16.mxu0 0
  %495 = vmatmul.mubr.bf16.gmra.mrb[0].mxu0 %v223
  %v496 = vpop.f32.mrb[0].mxu0
  %v497 = vadd.f32 %v265, %v496
  %v498 = vpop.f32.mrb[0].mxu0
  %v499 = vadd.f32 %v269, %v498
  %v500 = vpop.f32.mrb[0].mxu0
  %v501 = vadd.f32 %v265, %v500
  %v502 = vpop.f32.mrb[0].mxu0
  %v503 = vadd.f32 %v269, %v502
  %504 = vmatprep.mubr.bf16.mxu0 0
  %505 = vmatmul.mubr.bf16.gmra.mrb[0].mxu0 %v224
  %v506 = vpop.f32.mrb[0].mxu0
  %v507 = vadd.f32 %v265, %v506
  %v508 = vpop.f32.mrb[0].mxu0
  %v509 = vadd.f32 %v269, %v508
  %v510 = vpop.f32.mrb[0].mxu0
  %v511 = vadd.f32 %v265, %v510
  %v512 = vpop.f32.mrb[0].mxu0
  %v513 = vadd.f32 %v269, %v512
  %514 = vmatprep.mubr.bf16.mxu0 0
  %515 = vmatmul.mubr.bf16.gmra.mrb[0].mxu0 %v225
  %v516 = vpop.f32.mrb[0].mxu0
  %v517 = vadd.f32 %v265, %v516
  %v518 = vpop.f32.mrb[0].mxu0
  %v519 = vadd.f32 %v269, %v518
  %v520 = vpop.f32.mrb[0].mxu0
  %v521 = vadd.f32 %v265, %v520
  %v522 = vpop.f32.mrb[0].mxu0
  %v523 = vadd.f32 %v269, %v522
  %524 = vmatprep.mubr.bf16.mxu0 0
  %525 = vmatmul.mubr.bf16.gmra.mrb[0].mxu0 %v226
  %v526 = vpop.f32.mrb[0].mxu0
  %v527 = vadd.f32 %v265, %v526
  %v528 = vpop.f32.mrb[0].mxu0
  %v529 = vadd.f32 %v269, %v528
  %v530 = vpop.f32.mrb[0].mxu0
  %v531 = vadd.f32 %v265, %v530
  %v532 = vpop.f32.mrb[0].mxu0
  %v533 = vadd.f32 %v269, %v532
  %534 = vmatprep.mubr.bf16.mxu0 0
  %535 = vmatmul.mubr.bf16.gmra.mrb[0].mxu0 %v227
  %v536 = vpop.f32.mrb[0].mxu0
  %v537 = vadd.f32 %v265, %v536
  %v538 = vpop.f32.mrb[0].mxu0
  %v539 = vadd.f32 %v269, %v538
  %v540 = vpop.f32.mrb[0].mxu0
  %v541 = vpop.f32.mrb[0].mxu0
  %542 = vdwg.mxu0
  %543 = vmatprep.subr.bf16.mxu0 %v381
  %544 = vmatpush1.bf16.msra.mxu0 %v380
  %545 = vmatprep.subr.bf16.mxu0 %v385
  %546 = vmatpush1.bf16.msra.mxu0 %v384
  %547 = vmatprep.subr.bf16.mxu0 %v389
  %548 = vmatpush1.bf16.msra.mxu0 %v388
  %549 = vmatprep.subr.bf16.mxu0 %v393
  %550 = vmatpush1.bf16.msra.mxu0 %v392
  %551 = vmatprep.subr.bf16.mxu0 %v397
  %552 = vmatpush1.bf16.msra.mxu0 %v396
  %553 = vmatprep.subr.bf16.mxu0 %v401
  %554 = vmatpush1.bf16.msra.mxu0 %v400
  %555 = vmatprep.subr.bf16.mxu0 %v405
  %556 = vmatpush1.bf16.msra.mxu0 %v404
  %557 = vmatprep.subr.bf16.mxu0 %v409
  %558 = vmatpush1.bf16.msra.mxu0 %v408
  %559 = vmatprep.subr.bf16.mxu0 0
  %560 = vmatpush1.bf16.msra.mxu0 0
  %561 = vmatprep.subr.bf16.mxu0 0
  %562 = vmatpush1.bf16.msra.mxu0 0
  %563 = vmatprep.subr.bf16.mxu0 0
  %564 = vmatpush1.bf16.msra.mxu0 0
  %565 = vmatprep.subr.bf16.mxu0 0
  %566 = vmatpush1.bf16.msra.mxu0 0
  %567 = vmatprep.subr.bf16.mxu0 0
  %568 = vmatpush1.bf16.msra.mxu0 0
  %569 = vmatprep.subr.bf16.mxu0 0
  %570 = vmatpush1.bf16.msra.mxu0 0
  %571 = vmatprep.subr.bf16.mxu0 0
  %572 = vmatpush1.bf16.msra.mxu0 0
  %573 = vmatprep.subr.bf16.mxu0 0
  %574 = vmatpush1.bf16.msra.mxu0 0
  %575 = vmatprep.mubr.bf16.mxu0 0
  %576 = vmatmul.mubr.bf16.gmra.mrb[0].mxu0 %v221
  %v577 = vpop.f32.mrb[0].mxu0
  %v578 = vadd.f32 %v273, %v577
  %v579 = vpop.f32.mrb[0].mxu0
  %v580 = vadd.f32 %v277, %v579
  %v581 = vpop.f32.mrb[0].mxu0
  %v582 = vadd.f32 %v273, %v581
  %v583 = vpop.f32.mrb[0].mxu0
  %v584 = vadd.f32 %v277, %v583
  %585 = vmatprep.mubr.bf16.mxu0 0
  %586 = vmatmul.mubr.bf16.gmra.mrb[0].mxu0 %v222
  %v587 = vpop.f32.mrb[0].mxu0
  %v588 = vadd.f32 %v273, %v587
  %v589 = vpop.f32.mrb[0].mxu0
  %v590 = vadd.f32 %v277, %v589
  %v591 = vpop.f32.mrb[0].mxu0
  %v592 = vadd.f32 %v273, %v591
  %v593 = vpop.f32.mrb[0].mxu0
  %v594 = vadd.f32 %v277, %v593
  %595 = vmatprep.mubr.bf16.mxu0 0
  %596 = vmatmul.mubr.bf16.gmra.mrb[0].mxu0 %v223
  %v597 = vpop.f32.mrb[0].mxu0
  %v598 = vadd.f32 %v273, %v597
  %v599 = vpop.f32.mrb[0].mxu0
  %v600 = vadd.f32 %v277, %v599
  %v601 = vpop.f32.mrb[0].mxu0
  %v602 = vadd.f32 %v273, %v601
  %v603 = vpop.f32.mrb[0].mxu0
  %v604 = vadd.f32 %v277, %v603
  %605 = vmatprep.mubr.bf16.mxu0 0
  %606 = vmatmul.mubr.bf16.gmra.mrb[0].mxu0 %v224
  %v607 = vpop.f32.mrb[0].mxu0
  %v608 = vadd.f32 %v273, %v607
  %v609 = vpop.f32.mrb[0].mxu0
  %v610 = vadd.f32 %v277, %v609
  %v611 = vpop.f32.mrb[0].mxu0
  %v612 = vadd.f32 %v273, %v611
  %v613 = vpop.f32.mrb[0].mxu0
  %v614 = vadd.f32 %v277, %v613
  %615 = vmatprep.mubr.bf16.mxu0 0
  %616 = vmatmul.mubr.bf16.gmra.mrb[0].mxu0 %v225
  %v617 = vpop.f32.mrb[0].mxu0
  %v618 = vadd.f32 %v273, %v617
  %v619 = vpop.f32.mrb[0].mxu0
  %v620 = vadd.f32 %v277, %v619
  %v621 = vpop.f32.mrb[0].mxu0
  %v622 = vadd.f32 %v273, %v621
  %v623 = vpop.f32.mrb[0].mxu0
  %v624 = vadd.f32 %v277, %v623
  %625 = vmatprep.mubr.bf16.mxu0 0
  %626 = vmatmul.mubr.bf16.gmra.mrb[0].mxu0 %v226
  %v627 = vpop.f32.mrb[0].mxu0
  %v628 = vadd.f32 %v273, %v627
  %v629 = vpop.f32.mrb[0].mxu0
  %v630 = vadd.f32 %v277, %v629
  %v631 = vpop.f32.mrb[0].mxu0
  %v632 = vadd.f32 %v273, %v631
  %v633 = vpop.f32.mrb[0].mxu0
  %v634 = vadd.f32 %v277, %v633
  %635 = vmatprep.mubr.bf16.mxu0 0
  %636 = vmatmul.mubr.bf16.gmra.mrb[0].mxu0 %v227
  %v637 = vpop.f32.mrb[0].mxu0
  %v638 = vadd.f32 %v273, %v637
  %v639 = vpop.f32.mrb[0].mxu0
  %v640 = vadd.f32 %v277, %v639
  %v641 = vpop.f32.mrb[0].mxu0
  %v642 = vpop.f32.mrb[0].mxu0
  %643 = vdwg.mxu0
  %v644 = vmul.f32 %v477, %v477
  %v645 = vmul.f32 %v479, %v479
  %v646 = vmul.f32 %v578, %v578
  %v647 = vmul.f32 %v580, %v580
  %v648 = vmul.f32 %v481, %v481
  %v649 = vmul.f32 %v483, %v483
  %v650 = vmul.f32 %v582, %v582
  %v651 = vmul.f32 %v584, %v584
  %v652 = vmul.f32 %v487, %v487
  %v653 = vmul.f32 %v489, %v489
  %v654 = vmul.f32 %v588, %v588
  %v655 = vmul.f32 %v590, %v590
  %v656 = vmul.f32 %v491, %v491
  %v657 = vmul.f32 %v493, %v493
  %v658 = vmul.f32 %v592, %v592
  %v659 = vmul.f32 %v594, %v594
  %v660 = vmul.f32 %v497, %v497
  %v661 = vmul.f32 %v499, %v499
  %v662 = vmul.f32 %v598, %v598
  %v663 = vmul.f32 %v600, %v600
  %v664 = vmul.f32 %v501, %v501
  %v665 = vmul.f32 %v503, %v503
  %v666 = vmul.f32 %v602, %v602
  %v667 = vmul.f32 %v604, %v604
  %v668 = vmul.f32 %v507, %v507
  %v669 = vmul.f32 %v509, %v509
  %v670 = vmul.f32 %v608, %v608
  %v671 = vmul.f32 %v610, %v610
  %v672 = vmul.f32 %v511, %v511
  %v673 = vmul.f32 %v513, %v513
  %v674 = vmul.f32 %v612, %v612
  %v675 = vmul.f32 %v614, %v614
  %v676 = vmul.f32 %v517, %v517
  %v677 = vmul.f32 %v519, %v519
  %v678 = vmul.f32 %v618, %v618
  %v679 = vmul.f32 %v620, %v620
  %v680 = vmul.f32 %v521, %v521
  %v681 = vmul.f32 %v523, %v523
  %v682 = vmul.f32 %v622, %v622
  %v683 = vmul.f32 %v624, %v624
  %v684 = vmul.f32 %v527, %v527
  %v685 = vmul.f32 %v529, %v529
  %v686 = vmul.f32 %v628, %v628
  %v687 = vmul.f32 %v630, %v630
  %v688 = vmul.f32 %v531, %v531
  %v689 = vmul.f32 %v533, %v533
  %v690 = vmul.f32 %v632, %v632
  %v691 = vmul.f32 %v634, %v634
  %v692 = vmul.f32 %v537, %v537
  %v693 = vmul.f32 %v539, %v539
  %v694 = vmul.f32 %v638, %v638
  %v695 = vmul.f32 %v640, %v640
  %v696 = vmul.f32 %v477, %v644
  %v697 = vmul.f32 %v479, %v645
  %v698 = vmul.f32 %v578, %v646
  %v699 = vmul.f32 %v580, %v647
  %v700 = vmul.f32 %v481, %v648
  %v701 = vmul.f32 %v483, %v649
  %v702 = vmul.f32 %v582, %v650
  %v703 = vmul.f32 %v584, %v651
  %v704 = vmul.f32 %v487, %v652
  %v705 = vmul.f32 %v489, %v653
  %v706 = vmul.f32 %v588, %v654
  %v707 = vmul.f32 %v590, %v655
  %v708 = vmul.f32 %v491, %v656
  %v709 = vmul.f32 %v493, %v657
  %v710 = vmul.f32 %v592, %v658
  %v711 = vmul.f32 %v594, %v659
  %v712 = vmul.f32 %v497, %v660
  %v713 = vmul.f32 %v499, %v661
  %v714 = vmul.f32 %v598, %v662
  %v715 = vmul.f32 %v600, %v663
  %v716 = vmul.f32 %v501, %v664
  %v717 = vmul.f32 %v503, %v665
  %v718 = vmul.f32 %v602, %v666
  %v719 = vmul.f32 %v604, %v667
  %v720 = vmul.f32 %v507, %v668
  %v721 = vmul.f32 %v509, %v669
  %v722 = vmul.f32 %v608, %v670
  %v723 = vmul.f32 %v610, %v671
  %v724 = vmul.f32 %v511, %v672
  %v725 = vmul.f32 %v513, %v673
  %v726 = vmul.f32 %v612, %v674
  %v727 = vmul.f32 %v614, %v675
  %v728 = vmul.f32 %v517, %v676
  %v729 = vmul.f32 %v519, %v677
  %v730 = vmul.f32 %v618, %v678
  %v731 = vmul.f32 %v620, %v679
  %v732 = vmul.f32 %v521, %v680
  %v733 = vmul.f32 %v523, %v681
  %v734 = vmul.f32 %v622, %v682
  %v735 = vmul.f32 %v624, %v683
  %v736 = vmul.f32 %v527, %v684
  %v737 = vmul.f32 %v529, %v685
  %v738 = vmul.f32 %v628, %v686
  %v739 = vmul.f32 %v630, %v687
  %v740 = vmul.f32 %v531, %v688
  %v741 = vmul.f32 %v533, %v689
  %v742 = vmul.f32 %v632, %v690
  %v743 = vmul.f32 %v634, %v691
  %v744 = vmul.f32 %v537, %v692
  %v745 = vmul.f32 %v539, %v693
  %v746 = vmul.f32 %v638, %v694
  %v747 = vmul.f32 %v640, %v695
  %v748 = vmul.f32 %v696, 0.044715
  %v749 = vmul.f32 %v697, 0.044715
  %v750 = vmul.f32 %v698, 0.044715
  %v751 = vmul.f32 %v699, 0.044715
  %v752 = vmul.f32 %v700, 0.044715
  %v753 = vmul.f32 %v701, 0.044715
  %v754 = vmul.f32 %v702, 0.044715
  %v755 = vmul.f32 %v703, 0.044715
  %v756 = vmul.f32 %v704, 0.044715
  %v757 = vmul.f32 %v705, 0.044715
  %v758 = vmul.f32 %v706, 0.044715
  %v759 = vmul.f32 %v707, 0.044715
  %v760 = vmul.f32 %v708, 0.044715
  %v761 = vmul.f32 %v709, 0.044715
  %v762 = vmul.f32 %v710, 0.044715
  %v763 = vmul.f32 %v711, 0.044715
  %v764 = vmul.f32 %v712, 0.044715
  %v765 = vmul.f32 %v713, 0.044715
  %v766 = vmul.f32 %v714, 0.044715
  %v767 = vmul.f32 %v715, 0.044715
  %v768 = vmul.f32 %v716, 0.044715
  %v769 = vmul.f32 %v717, 0.044715
  %v770 = vmul.f32 %v718, 0.044715
  %v771 = vmul.f32 %v719, 0.044715
  %v772 = vmul.f32 %v720, 0.044715
  %v773 = vmul.f32 %v721, 0.044715
  %v774 = vmul.f32 %v722, 0.044715
  %v775 = vmul.f32 %v723, 0.044715
  %v776 = vmul.f32 %v724, 0.044715
  %v777 = vmul.f32 %v725, 0.044715
  %v778 = vmul.f32 %v726, 0.044715
  %v779 = vmul.f32 %v727, 0.044715
  %v780 = vmul.f32 %v728, 0.044715
  %v781 = vmul.f32 %v729, 0.044715
  %v782 = vmul.f32 %v730, 0.044715
  %v783 = vmul.f32 %v731, 0.044715
  %v784 = vmul.f32 %v732, 0.044715
  %v785 = vmul.f32 %v733, 0.044715
  %v786 = vmul.f32 %v734, 0.044715
  %v787 = vmul.f32 %v735, 0.044715
  %v788 = vmul.f32 %v736, 0.044715
  %v789 = vmul.f32 %v737, 0.044715
  %v790 = vmul.f32 %v738, 0.044715
  %v791 = vmul.f32 %v739, 0.044715
  %v792 = vmul.f32 %v740, 0.044715
  %v793 = vmul.f32 %v741, 0.044715
  %v794 = vmul.f32 %v742, 0.044715
  %v795 = vmul.f32 %v743, 0.044715
  %v796 = vmul.f32 %v744, 0.044715
  %v797 = vmul.f32 %v745, 0.044715
  %v798 = vmul.f32 %v746, 0.044715
  %v799 = vmul.f32 %v747, 0.044715
  %v800 = vadd.f32 %v477, %v748
  %v801 = vadd.f32 %v479, %v749
  %v802 = vadd.f32 %v578, %v750
  %v803 = vadd.f32 %v580, %v751
  %v804 = vadd.f32 %v481, %v752
  %v805 = vadd.f32 %v483, %v753
  %v806 = vadd.f32 %v582, %v754
  %v807 = vadd.f32 %v584, %v755
  %v808 = vadd.f32 %v487, %v756
  %v809 = vadd.f32 %v489, %v757
  %v810 = vadd.f32 %v588, %v758
  %v811 = vadd.f32 %v590, %v759
  %v812 = vadd.f32 %v491, %v760
  %v813 = vadd.f32 %v493, %v761
  %v814 = vadd.f32 %v592, %v762
  %v815 = vadd.f32 %v594, %v763
  %v816 = vadd.f32 %v497, %v764
  %v817 = vadd.f32 %v499, %v765
  %v818 = vadd.f32 %v598, %v766
  %v819 = vadd.f32 %v600, %v767
  %v820 = vadd.f32 %v501, %v768
  %v821 = vadd.f32 %v503, %v769
  %v822 = vadd.f32 %v602, %v770
  %v823 = vadd.f32 %v604, %v771
  %v824 = vadd.f32 %v507, %v772
  %v825 = vadd.f32 %v509, %v773
  %v826 = vadd.f32 %v608, %v774
  %v827 = vadd.f32 %v610, %v775
  %v828 = vadd.f32 %v511, %v776
  %v829 = vadd.f32 %v513, %v777
  %v830 = vadd.f32 %v612, %v778
  %v831 = vadd.f32 %v614, %v779
  %v832 = vadd.f32 %v517, %v780
  %v833 = vadd.f32 %v519, %v781
  %v834 = vadd.f32 %v618, %v782
  %v835 = vadd.f32 %v620, %v783
  %v836 = vadd.f32 %v521, %v784
  %v837 = vadd.f32 %v523, %v785
  %v838 = vadd.f32 %v622, %v786
  %v839 = vadd.f32 %v624, %v787
  %v840 = vadd.f32 %v527, %v788
  %v841 = vadd.f32 %v529, %v789
  %v842 = vadd.f32 %v628, %v790
  %v843 = vadd.f32 %v630, %v791
  %v844 = vadd.f32 %v531, %v792
  %v845 = vadd.f32 %v533, %v793
  %v846 = vadd.f32 %v632, %v794
  %v847 = vadd.f32 %v634, %v795
  %v848 = vadd.f32 %v537, %v796
  %v849 = vadd.f32 %v539, %v797
  %v850 = vadd.f32 %v638, %v798
  %v851 = vadd.f32 %v640, %v799
  %v852 = vmul.f32 %v800, 0.7978846
  %v853 = vmul.f32 %v801, 0.7978846
  %v854 = vmul.f32 %v802, 0.7978846
  %v855 = vmul.f32 %v803, 0.7978846
  %v856 = vmul.f32 %v804, 0.7978846
  %v857 = vmul.f32 %v805, 0.7978846
  %v858 = vmul.f32 %v806, 0.7978846
  %v859 = vmul.f32 %v807, 0.7978846
  %v860 = vmul.f32 %v808, 0.7978846
  %v861 = vmul.f32 %v809, 0.7978846
  %v862 = vmul.f32 %v810, 0.7978846
  %v863 = vmul.f32 %v811, 0.7978846
  %v864 = vmul.f32 %v812, 0.7978846
  %v865 = vmul.f32 %v813, 0.7978846
  %v866 = vmul.f32 %v814, 0.7978846
  %v867 = vmul.f32 %v815, 0.7978846
  %v868 = vmul.f32 %v816, 0.7978846
  %v869 = vmul.f32 %v817, 0.7978846
  %v870 = vmul.f32 %v818, 0.7978846
  %v871 = vmul.f32 %v819, 0.7978846
  %v872 = vmul.f32 %v820, 0.7978846
  %v873 = vmul.f32 %v821, 0.7978846
  %v874 = vmul.f32 %v822, 0.7978846
  %v875 = vmul.f32 %v823, 0.7978846
  %v876 = vmul.f32 %v824, 0.7978846
  %v877 = vmul.f32 %v825, 0.7978846
  %v878 = vmul.f32 %v826, 0.7978846
  %v879 = vmul.f32 %v827, 0.7978846
  %v880 = vmul.f32 %v828, 0.7978846
  %v881 = vmul.f32 %v829, 0.7978846
  %v882 = vmul.f32 %v830, 0.7978846
  %v883 = vmul.f32 %v831, 0.7978846
  %v884 = vmul.f32 %v832, 0.7978846
  %v885 = vmul.f32 %v833, 0.7978846
  %v886 = vmul.f32 %v834, 0.7978846
  %v887 = vmul.f32 %v835, 0.7978846
  %v888 = vmul.f32 %v836, 0.7978846
  %v889 = vmul.f32 %v837, 0.7978846
  %v890 = vmul.f32 %v838, 0.7978846
  %v891 = vmul.f32 %v839, 0.7978846
  %v892 = vmul.f32 %v840, 0.7978846
  %v893 = vmul.f32 %v841, 0.7978846
  %v894 = vmul.f32 %v842, 0.7978846
  %v895 = vmul.f32 %v843, 0.7978846
  %v896 = vmul.f32 %v844, 0.7978846
  %v897 = vmul.f32 %v845, 0.7978846
  %v898 = vmul.f32 %v846, 0.7978846
  %v899 = vmul.f32 %v847, 0.7978846
  %v900 = vmul.f32 %v848, 0.7978846
  %v901 = vmul.f32 %v849, 0.7978846
  %v902 = vmul.f32 %v850, 0.7978846
  %v903 = vmul.f32 %v851, 0.7978846
  %v904 = vtanh.pop %v852
  %v905 = vtanh.pop %v853
  %v906 = vtanh.pop %v854
  %v907 = vtanh.pop %v855
  %v908 = vtanh.pop %v856
  %v909 = vtanh.pop %v857
  %v910 = vtanh.pop %v858
  %v911 = vtanh.pop %v859
  %v912 = vtanh.pop %v860
  %v913 = vtanh.pop %v861
  %v914 = vtanh.pop %v862
  %v915 = vtanh.pop %v863
  %v916 = vtanh.pop %v864
  %v917 = vtanh.pop %v865
  %v918 = vtanh.pop %v866
  %v919 = vtanh.pop %v867
  %v920 = vtanh.pop %v868
  %v921 = vtanh.pop %v869
  %v922 = vtanh.pop %v870
  %v923 = vtanh.pop %v871
  %v924 = vtanh.pop %v872
  %v925 = vtanh.pop %v873
  %v926 = vtanh.pop %v874
  %v927 = vtanh.pop %v875
  %v928 = vtanh.pop %v876
  %v929 = vtanh.pop %v877
  %v930 = vtanh.pop %v878
  %v931 = vtanh.pop %v879
  %v932 = vtanh.pop %v880
  %v933 = vtanh.pop %v881
  %v934 = vtanh.pop %v882
  %v935 = vtanh.pop %v883
  %v936 = vtanh.pop %v884
  %v937 = vtanh.pop %v885
  %v938 = vtanh.pop %v886
  %v939 = vtanh.pop %v887
  %v940 = vtanh.pop %v888
  %v941 = vtanh.pop %v889
  %v942 = vtanh.pop %v890
  %v943 = vtanh.pop %v891
  %v944 = vtanh.pop %v892
  %v945 = vtanh.pop %v893
  %v946 = vtanh.pop %v894
  %v947 = vtanh.pop %v895
  %v948 = vtanh.pop %v896
  %v949 = vtanh.pop %v897
  %v950 = vtanh.pop %v898
  %v951 = vtanh.pop %v899
  %v952 = vtanh.pop %v900
  %v953 = vtanh.pop %v901
  %v954 = vtanh.pop %v902
  %v955 = vtanh.pop %v903
  %v956 = vadd.f32 %v904, 1.0
  %v957 = vadd.f32 %v905, 1.0
  %v958 = vadd.f32 %v906, 1.0
  %v959 = vadd.f32 %v907, 1.0
  %v960 = vadd.f32 %v908, 1.0
  %v961 = vadd.f32 %v909, 1.0
  %v962 = vadd.f32 %v910, 1.0
  %v963 = vadd.f32 %v911, 1.0
  %v964 = vadd.f32 %v912, 1.0
  %v965 = vadd.f32 %v913, 1.0
  %v966 = vadd.f32 %v914, 1.0
  %v967 = vadd.f32 %v915, 1.0
  %v968 = vadd.f32 %v916, 1.0
  %v969 = vadd.f32 %v917, 1.0
  %v970 = vadd.f32 %v918, 1.0
  %v971 = vadd.f32 %v919, 1.0
  %v972 = vadd.f32 %v920, 1.0
  %v973 = vadd.f32 %v921, 1.0
  %v974 = vadd.f32 %v922, 1.0
  %v975 = vadd.f32 %v923, 1.0
  %v976 = vadd.f32 %v924, 1.0
  %v977 = vadd.f32 %v925, 1.0
  %v978 = vadd.f32 %v926, 1.0
  %v979 = vadd.f32 %v927, 1.0
  %v980 = vadd.f32 %v928, 1.0
  %v981 = vadd.f32 %v929, 1.0
  %v982 = vadd.f32 %v930, 1.0
  %v983 = vadd.f32 %v931, 1.0
  %v984 = vadd.f32 %v932, 1.0
  %v985 = vadd.f32 %v933, 1.0
  %v986 = vadd.f32 %v934, 1.0
  %v987 = vadd.f32 %v935, 1.0
  %v988 = vadd.f32 %v936, 1.0
  %v989 = vadd.f32 %v937, 1.0
  %v990 = vadd.f32 %v938, 1.0
  %v991 = vadd.f32 %v939, 1.0
  %v992 = vadd.f32 %v940, 1.0
  %v993 = vadd.f32 %v941, 1.0
  %v994 = vadd.f32 %v942, 1.0
  %v995 = vadd.f32 %v943, 1.0
  %v996 = vadd.f32 %v944, 1.0
  %v997 = vadd.f32 %v945, 1.0
  %v998 = vadd.f32 %v946, 1.0
  %v999 = vadd.f32 %v947, 1.0
  %v1000 = vadd.f32 %v948, 1.0
  %v1001 = vadd.f32 %v949, 1.0
  %v1002 = vadd.f32 %v950, 1.0
  %v1003 = vadd.f32 %v951, 1.0
  %v1004 = vadd.f32 %v952, 1.0
  %v1005 = vadd.f32 %v953, 1.0
  %v1006 = vadd.f32 %v954, 1.0
  %v1007 = vadd.f32 %v955, 1.0
  %v1008 = vmul.f32 %v956, 0.5
  %v1009 = vmul.f32 %v957, 0.5
  %v1010 = vmul.f32 %v958, 0.5
  %v1011 = vmul.f32 %v959, 0.5
  %v1012 = vmul.f32 %v960, 0.5
  %v1013 = vmul.f32 %v961, 0.5
  %v1014 = vmul.f32 %v962, 0.5
  %v1015 = vmul.f32 %v963, 0.5
  %v1016 = vmul.f32 %v964, 0.5
  %v1017 = vmul.f32 %v965, 0.5
  %v1018 = vmul.f32 %v966, 0.5
  %v1019 = vmul.f32 %v967, 0.5
  %v1020 = vmul.f32 %v968, 0.5
  %v1021 = vmul.f32 %v969, 0.5
  %v1022 = vmul.f32 %v970, 0.5
  %v1023 = vmul.f32 %v971, 0.5
  %v1024 = vmul.f32 %v972, 0.5
  %v1025 = vmul.f32 %v973, 0.5
  %v1026 = vmul.f32 %v974, 0.5
  %v1027 = vmul.f32 %v975, 0.5
  %v1028 = vmul.f32 %v976, 0.5
  %v1029 = vmul.f32 %v977, 0.5
  %v1030 = vmul.f32 %v978, 0.5
  %v1031 = vmul.f32 %v979, 0.5
  %v1032 = vmul.f32 %v980, 0.5
  %v1033 = vmul.f32 %v981, 0.5
  %v1034 = vmul.f32 %v982, 0.5
  %v1035 = vmul.f32 %v983, 0.5
  %v1036 = vmul.f32 %v984, 0.5
  %v1037 = vmul.f32 %v985, 0.5
  %v1038 = vmul.f32 %v986, 0.5
  %v1039 = vmul.f32 %v987, 0.5
  %v1040 = vmul.f32 %v988, 0.5
  %v1041 = vmul.f32 %v989, 0.5
  %v1042 = vmul.f32 %v990, 0.5
  %v1043 = vmul.f32 %v991, 0.5
  %v1044 = vmul.f32 %v992, 0.5
  %v1045 = vmul.f32 %v993, 0.5
  %v1046 = vmul.f32 %v994, 0.5
  %v1047 = vmul.f32 %v995, 0.5
  %v1048 = vmul.f32 %v996, 0.5
  %v1049 = vmul.f32 %v997, 0.5
  %v1050 = vmul.f32 %v998, 0.5
  %v1051 = vmul.f32 %v999, 0.5
  %v1052 = vmul.f32 %v1000, 0.5
  %v1053 = vmul.f32 %v1001, 0.5
  %v1054 = vmul.f32 %v1002, 0.5
  %v1055 = vmul.f32 %v1003, 0.5
  %v1056 = vmul.f32 %v1004, 0.5
  %v1057 = vmul.f32 %v1005, 0.5
  %v1058 = vmul.f32 %v1006, 0.5
  %v1059 = vmul.f32 %v1007, 0.5
  %v1060 = vmul.f32 %v477, %v1008
  %v1061 = vmul.f32 %v479, %v1009
  %v1062 = vmul.f32 %v578, %v1010
  %v1063 = vmul.f32 %v580, %v1011
  %v1064 = vmul.f32 %v481, %v1012
  %v1065 = vmul.f32 %v483, %v1013
  %v1066 = vmul.f32 %v582, %v1014
  %v1067 = vmul.f32 %v584, %v1015
  %v1068 = vmul.f32 %v487, %v1016
  %v1069 = vmul.f32 %v489, %v1017
  %v1070 = vmul.f32 %v588, %v1018
  %v1071 = vmul.f32 %v590, %v1019
  %v1072 = vmul.f32 %v491, %v1020
  %v1073 = vmul.f32 %v493, %v1021
  %v1074 = vmul.f32 %v592, %v1022
  %v1075 = vmul.f32 %v594, %v1023
  %v1076 = vmul.f32 %v497, %v1024
  %v1077 = vmul.f32 %v499, %v1025
  %v1078 = vmul.f32 %v598, %v1026
  %v1079 = vmul.f32 %v600, %v1027
  %v1080 = vmul.f32 %v501, %v1028
  %v1081 = vmul.f32 %v503, %v1029
  %v1082 = vmul.f32 %v602, %v1030
  %v1083 = vmul.f32 %v604, %v1031
  %v1084 = vmul.f32 %v507, %v1032
  %v1085 = vmul.f32 %v509, %v1033
  %v1086 = vmul.f32 %v608, %v1034
  %v1087 = vmul.f32 %v610, %v1035
  %v1088 = vmul.f32 %v511, %v1036
  %v1089 = vmul.f32 %v513, %v1037
  %v1090 = vmul.f32 %v612, %v1038
  %v1091 = vmul.f32 %v614, %v1039
  %v1092 = vmul.f32 %v517, %v1040
  %v1093 = vmul.f32 %v519, %v1041
  %v1094 = vmul.f32 %v618, %v1042
  %v1095 = vmul.f32 %v620, %v1043
  %v1096 = vmul.f32 %v521, %v1044
  %v1097 = vmul.f32 %v523, %v1045
  %v1098 = vmul.f32 %v622, %v1046
  %v1099 = vmul.f32 %v624, %v1047
  %v1100 = vmul.f32 %v527, %v1048
  %v1101 = vmul.f32 %v529, %v1049
  %v1102 = vmul.f32 %v628, %v1050
  %v1103 = vmul.f32 %v630, %v1051
  %v1104 = vmul.f32 %v531, %v1052
  %v1105 = vmul.f32 %v533, %v1053
  %v1106 = vmul.f32 %v632, %v1054
  %v1107 = vmul.f32 %v634, %v1055
  %v1108 = vmul.f32 %v537, %v1056
  %v1109 = vmul.f32 %v539, %v1057
  %v1110 = vmul.f32 %v638, %v1058
  %v1111 = vmul.f32 %v640, %v1059
  %v1112 = vpack.c.bf16 %v1064, %v1060
  %v1113 = vpack.c.bf16 %v1065, %v1061
  %v1114 = vpack.c.bf16 %v1066, %v1062
  %v1115 = vpack.c.bf16 %v1067, %v1063
  %v1116 = vpack.c.bf16 %v1072, %v1068
  %v1117 = vpack.c.bf16 %v1073, %v1069
  %v1118 = vpack.c.bf16 %v1074, %v1070
  %v1119 = vpack.c.bf16 %v1075, %v1071
  %v1120 = vpack.c.bf16 %v1080, %v1076
  %v1121 = vpack.c.bf16 %v1081, %v1077
  %v1122 = vpack.c.bf16 %v1082, %v1078
  %v1123 = vpack.c.bf16 %v1083, %v1079
  %v1124 = vpack.c.bf16 %v1088, %v1084
  %v1125 = vpack.c.bf16 %v1089, %v1085
  %v1126 = vpack.c.bf16 %v1090, %v1086
  %v1127 = vpack.c.bf16 %v1091, %v1087
  %v1128 = vpack.c.bf16 %v1096, %v1092
  %v1129 = vpack.c.bf16 %v1097, %v1093
  %v1130 = vpack.c.bf16 %v1098, %v1094
  %v1131 = vpack.c.bf16 %v1099, %v1095
  %v1132 = vpack.c.bf16 %v1104, %v1100
  %v1133 = vpack.c.bf16 %v1105, %v1101
  %v1134 = vpack.c.bf16 %v1106, %v1102
  %v1135 = vpack.c.bf16 %v1107, %v1103
  %v1136 = vpack.c.bf16 %v1108, %v1108
  %v1137 = vpack.c.bf16 %v1109, %v1109
  %v1138 = vpack.c.bf16 %v1110, %v1110
  %v1139 = vpack.c.bf16 %v1111, %v1111
  %v1168 = vunpack.c.l.b16 %v1112
  %v1169 = vunpack.c.l.b16 %v1113
  %v1170 = vunpack.c.l.b16 %v1114
  %v1171 = vunpack.c.l.b16 %v1115
  %v1172 = vunpack.c.h.b16 %v1112
  %v1173 = vunpack.c.h.b16 %v1113
  %v1174 = vunpack.c.h.b16 %v1114
  %v1175 = vunpack.c.h.b16 %v1115
  %v1176 = vunpack.c.l.b16 %v1116
  %v1177 = vunpack.c.l.b16 %v1117
  %v1178 = vunpack.c.l.b16 %v1118
  %v1179 = vunpack.c.l.b16 %v1119
  %v1180 = vunpack.c.h.b16 %v1116
  %v1181 = vunpack.c.h.b16 %v1117
  %v1182 = vunpack.c.h.b16 %v1118
  %v1183 = vunpack.c.h.b16 %v1119
  %v1184 = vunpack.c.l.b16 %v1120
  %v1185 = vunpack.c.l.b16 %v1121
  %v1186 = vunpack.c.l.b16 %v1122
  %v1187 = vunpack.c.l.b16 %v1123
  %v1188 = vunpack.c.h.b16 %v1120
  %v1189 = vunpack.c.h.b16 %v1121
  %v1190 = vunpack.c.h.b16 %v1122
  %v1191 = vunpack.c.h.b16 %v1123
  %v1192 = vunpack.c.l.b16 %v1124
  %v1193 = vunpack.c.l.b16 %v1125
  %v1194 = vunpack.c.l.b16 %v1126
  %v1195 = vunpack.c.l.b16 %v1127
  %v1196 = vunpack.c.h.b16 %v1124
  %v1197 = vunpack.c.h.b16 %v1125
  %v1198 = vunpack.c.h.b16 %v1126
  %v1199 = vunpack.c.h.b16 %v1127
  %v1200 = vunpack.c.l.b16 %v1128
  %v1201 = vunpack.c.l.b16 %v1129
  %v1202 = vunpack.c.l.b16 %v1130
  %v1203 = vunpack.c.l.b16 %v1131
  %v1204 = vunpack.c.h.b16 %v1128
  %v1205 = vunpack.c.h.b16 %v1129
  %v1206 = vunpack.c.h.b16 %v1130
  %v1207 = vunpack.c.h.b16 %v1131
  %v1208 = vunpack.c.l.b16 %v1132
  %v1209 = vunpack.c.l.b16 %v1133
  %v1210 = vunpack.c.l.b16 %v1134
  %v1211 = vunpack.c.l.b16 %v1135
  %v1212 = vunpack.c.h.b16 %v1132
  %v1213 = vunpack.c.h.b16 %v1133
  %v1214 = vunpack.c.h.b16 %v1134
  %v1215 = vunpack.c.h.b16 %v1135
  %v1216 = vunpack.c.l.b16 %v1136
  %v1217 = vunpack.c.l.b16 %v1137
  %v1218 = vunpack.c.l.b16 %v1138
  %v1219 = vunpack.c.l.b16 %v1139
  %v1220 = vpack.c.b16 %v1169, %v1168
  %v1221 = vpack.c.b16 %v1171, %v1170
  %v1222 = vpack.c.b16 %v1173, %v1172
  %v1223 = vpack.c.b16 %v1175, %v1174
  %v1224 = vpack.c.b16 %v1177, %v1176
  %v1225 = vpack.c.b16 %v1179, %v1178
  %v1226 = vpack.c.b16 %v1181, %v1180
  %v1227 = vpack.c.b16 %v1183, %v1182
  %v1228 = vpack.c.b16 %v1185, %v1184
  %v1229 = vpack.c.b16 %v1187, %v1186
  %v1230 = vpack.c.b16 %v1189, %v1188
  %v1231 = vpack.c.b16 %v1191, %v1190
  %v1232 = vpack.c.b16 %v1193, %v1192
  %v1233 = vpack.c.b16 %v1195, %v1194
  %v1234 = vpack.c.b16 %v1197, %v1196
  %v1235 = vpack.c.b16 %v1199, %v1198
  %v1236 = vpack.c.b16 %v1201, %v1200
  %v1237 = vpack.c.b16 %v1203, %v1202
  %v1238 = vpack.c.b16 %v1205, %v1204
  %v1239 = vpack.c.b16 %v1207, %v1206
  %v1240 = vpack.c.b16 %v1209, %v1208
  %v1241 = vpack.c.b16 %v1211, %v1210
  %v1242 = vpack.c.b16 %v1213, %v1212
  %v1243 = vpack.c.b16 %v1215, %v1214
  %v1244 = vpack.c.b16 %v1217, %v1216
  %v1245 = vpack.c.b16 %v1219, %v1218
  %1272 = vst [vmem:[%s5] sm:$0xff] %v1220
  %1273 = vst [vmem:[%s5 + $0x8] sm:$0xff] %v1221
  %1274 = vst [vmem:[%s5 + $0x10] sm:$0xff] %v1222
  %1275 = vst [vmem:[%s5 + $0x18] sm:$0xff] %v1223
  %1276 = vst [vmem:[%s5 + $0x20] sm:$0xff] %v1224
  %1277 = vst [vmem:[%s5 + $0x28] sm:$0xff] %v1225
  %1278 = vst [vmem:[%s5 + $0x30] sm:$0xff] %v1226
  %1279 = vst [vmem:[%s5 + $0x38] sm:$0xff] %v1227
  %1280 = vst [vmem:[%s5 + $0x40] sm:$0xff] %v1228
  %1281 = vst [vmem:[%s5 + $0x48] sm:$0xff] %v1229
  %1282 = vst [vmem:[%s5 + $0x50] sm:$0xff] %v1230
  %1283 = vst [vmem:[%s5 + $0x58] sm:$0xff] %v1231
  %1284 = vst [vmem:[%s5 + $0x60] sm:$0xff] %v1232
  %1285 = vst [vmem:[%s5 + $0x68] sm:$0xff] %v1233
  %1286 = vst [vmem:[%s5 + $0x70] sm:$0xff] %v1234
  %1287 = vst [vmem:[%s5 + $0x78] sm:$0xff] %v1235
  %1288 = vst [vmem:[%s5 + $0x80] sm:$0xff] %v1236
  %1289 = vst [vmem:[%s5 + $0x88] sm:$0xff] %v1237
  %1290 = vst [vmem:[%s5 + $0x90] sm:$0xff] %v1238
  %1291 = vst [vmem:[%s5 + $0x98] sm:$0xff] %v1239
  %1292 = vst [vmem:[%s5 + $0xa0] sm:$0xff] %v1240
  %1293 = vst [vmem:[%s5 + $0xa8] sm:$0xff] %v1241
  %1294 = vst [vmem:[%s5 + $0xb0] sm:$0xff] %v1242
  %1295 = vst [vmem:[%s5 + $0xb8] sm:$0xff] %v1243
  %1296 = vst [vmem:[%s5 + $0xc0] sm:$0x11] %v1244
  %1297 = vst [vmem:[%s5 + $0xc8] sm:$0x11] %v1245
  // Predicated region
  $region22: #{swin_block_forward.8} parent=0 // pred_check
    _
  $region23: #{swin_block_forward.8} parent=0 // pred_check_branch
    %1299 = sbr.rel (0) target = $region25
  $region24: #{swin_block_forward.8} parent=0 // pred_region
    _
  $region25: #{swin_block_forward.8} parent=0 // pred_fallthru
    _
  // Predicated region
  $region26: #{swin_block_forward.8} parent=0 // pred_check
    _
  $region27: #{swin_block_forward.8} parent=0 // pred_check_branch
    %1301 = sbr.rel (0) target = $region29
  $region28: #{swin_block_forward.8} parent=0 // pred_region
    _
  $region29: #{swin_block_forward.8} parent=0 // pred_fallthru
    _

// kernel: swin_block_forward.6
$region0: #{swin_block_forward.6}
  #allocation0 [shape = 'u32[]', space=smem, size = 0x4, offset = 0x4, fixed_abs, tag = 'smem constant byte address 0x4 - core index']
  #allocation1 [shape = 'u32[144,128]{1,0:T(1,128)}', space=vmem, size = 0x12000, scoped, tag = 'internal scratch']
  %s0 = inlined_call_operand.vmem [shape: bf16[8,4,16,32], index: 0, kind: input, shape index: {}]
  %s1 = inlined_call_operand.vmem [shape: bf16[8,4,16,32], index: 1, kind: input, shape index: {}]
  %s2 = inlined_call_operand.vmem [shape: bf16[8,4,16,32], index: 2, kind: input, shape index: {}]
  %s3 = inlined_call_operand.vmem [shape: f32[4,16,16], index: 3, kind: input, shape index: {}]
  %s4 = inlined_call_operand.vmem [shape: f32[4,16,16], index: 4, kind: input, shape index: {}]
  %s5 = inlined_call_operand.vmem [shape: bf16[8,4,16,32], index: 5, kind: output, shape index: {}]
  %s6 = sld [smem:[#allocation0]]
  $region53: #{swin_block_forward.6} parent=0
    _
  %s8 = ssub.s32 1, %s6
  %s9 = scalar_select 0, %s8, %s6
  loop: start=0, step=1, limit=4
  $region2: #{swin_block_forward.6} parent=0 // loop_pre_header
    _
  $region3: #{swin_block_forward.6} parent=0 // loop_header
    %s11 = sphi 0, %s15
    %p12 = scmp.ge.s32.totalorder %s11, 4
    %s21 = sphi 0, %s23
    %s24 = sphi 0, %s21
    %s25 = sphi 0, %s24
    %s41 = sphi 0, %s25
    %s47 = sphi 0, %s49
    %s50 = sphi 0, %s47
    %s51 = sphi 0, %s50
    %s67 = sphi 0, %s51
    %s73 = sphi 0, %s75
    %s76 = sphi 0, %s73
    %s77 = sphi 0, %s76
    %s93 = sphi 0, %s77
    %s97 = sphi 0, %s97
    %s99 = sphi 0, %s97
    %s100 = sphi 0, %s99
    %s114 = sphi 0, %s100
    %s118 = sphi 0, %s118
    %s120 = sphi 0, %s118
    %s121 = sphi 0, %s120
    %s135 = sphi 0, %s121
    %s141 = sphi 0, %s143
    %s144 = sphi 0, %s141
    %s145 = sphi 0, %s144
    %s161 = sphi 0, %s145
  $region4: #{swin_block_forward.6} parent=0 // loop_header_branch
    %14 = sbr.rel (%p12) target = $region8
  $region5: #{swin_block_forward.6} parent=0 // loop_body
    %s16 = ssub.s32 %s11, 1
    %s17 = ssub.s32 %s11, 2
    %s18 = sadd.s32 %s11, 1
    %s19 = ssub.s32 %s11, %s18
    %p20 = scmp.eq.s32.totalorder %s19, 0
    %s22 = sadd.s32 %s21, 1
    %s23 = scalar_select %p20, %s21, %s22
    %p26 = pneg %p20
    %p27 = scmp.eq.s32.totalorder %s11, 1
    %p28 = por %p26, %p27
    %p29 = scmp.ne.s32.totalorder %s21, %s24
    %p30 = scmp.eq.s32.totalorder %s11, 0
    %p31 = por %p29, %p30
    %p32 = scmp.ne.s32.totalorder %s21, %s24
    %p33 = scmp.eq.s32.totalorder %s16, 1
    %p34 = por %p32, %p33
    %p35 = scmp.ne.s32.totalorder %s24, %s25
    %p36 = scmp.eq.s32.totalorder %s16, 0
    %p37 = por %p35, %p36
    %p38 = scmp.ne.s32.totalorder %s24, %s25
    %p39 = scmp.eq.s32.totalorder %s17, 1
    %p40 = por %p38, %p39
    %p42 = scmp.ne.s32.totalorder %s25, %s41
    %p43 = scmp.eq.s32.totalorder %s17, 0
    %p44 = por %p42, %p43
    %s45 = ssub.s32 %s11, %s18
    %p46 = scmp.eq.s32.totalorder %s45, 0
    %s48 = sadd.s32 %s47, 1
    %s49 = scalar_select %p46, %s47, %s48
    %p52 = pneg %p46
    %p53 = scmp.eq.s32.totalorder %s11, 1
    %p54 = por %p52, %p53
    %p55 = scmp.ne.s32.totalorder %s47, %s50
    %p56 = scmp.eq.s32.totalorder %s11, 0
    %p57 = por %p55, %p56
    %p58 = scmp.ne.s32.totalorder %s47, %s50
    %p59 = scmp.eq.s32.totalorder %s16, 1
    %p60 = por %p58, %p59
    %p61 = scmp.ne.s32.totalorder %s50, %s51
    %p62 = scmp.eq.s32.totalorder %s16, 0
    %p63 = por %p61, %p62
    %p64 = scmp.ne.s32.totalorder %s50, %s51
    %p65 = scmp.eq.s32.totalorder %s17, 1
    %p66 = por %p64, %p65
    %p68 = scmp.ne.s32.totalorder %s51, %s67
    %p69 = scmp.eq.s32.totalorder %s17, 0
    %p70 = por %p68, %p69
    %s71 = ssub.s32 %s11, %s18
    %p72 = scmp.eq.s32.totalorder %s71, 0
    %s74 = sadd.s32 %s73, 1
    %s75 = scalar_select %p72, %s73, %s74
    %p78 = pneg %p72
    %p79 = scmp.eq.s32.totalorder %s11, 1
    %p80 = por %p78, %p79
    %p81 = scmp.ne.s32.totalorder %s73, %s76
    %p82 = scmp.eq.s32.totalorder %s11, 0
    %p83 = por %p81, %p82
    %p84 = scmp.ne.s32.totalorder %s73, %s76
    %p85 = scmp.eq.s32.totalorder %s16, 1
    %p86 = por %p84, %p85
    %p87 = scmp.ne.s32.totalorder %s76, %s77
    %p88 = scmp.eq.s32.totalorder %s16, 0
    %p89 = por %p87, %p88
    %p90 = scmp.ne.s32.totalorder %s76, %s77
    %p91 = scmp.eq.s32.totalorder %s17, 1
    %p92 = por %p90, %p91
    %p94 = scmp.ne.s32.totalorder %s77, %s93
    %p95 = scmp.eq.s32.totalorder %s17, 0
    %p96 = por %p94, %p95
    %s98 = sadd.s32 %s97, 1
    %p101 = scmp.eq.s32.totalorder %s11, 1
    %p102 = scmp.ne.s32.totalorder %s97, %s99
    %p103 = scmp.eq.s32.totalorder %s11, 0
    %p104 = por %p102, %p103
    %p105 = scmp.ne.s32.totalorder %s97, %s99
    %p106 = scmp.eq.s32.totalorder %s16, 1
    %p107 = por %p105, %p106
    %p108 = scmp.ne.s32.totalorder %s99, %s100
    %p109 = scmp.eq.s32.totalorder %s16, 0
    %p110 = por %p108, %p109
    %p111 = scmp.ne.s32.totalorder %s99, %s100
    %p112 = scmp.eq.s32.totalorder %s17, 1
    %p113 = por %p111, %p112
    %p115 = scmp.ne.s32.totalorder %s100, %s114
    %p116 = scmp.eq.s32.totalorder %s17, 0
    %p117 = por %p115, %p116
    %s119 = sadd.s32 %s118, 1
    %p122 = scmp.eq.s32.totalorder %s11, 1
    %p123 = scmp.ne.s32.totalorder %s118, %s120
    %p124 = scmp.eq.s32.totalorder %s11, 0
    %p125 = por %p123, %p124
    %p126 = scmp.ne.s32.totalorder %s118, %s120
    %p127 = scmp.eq.s32.totalorder %s16, 1
    %p128 = por %p126, %p127
    %p129 = scmp.ne.s32.totalorder %s120, %s121
    %p130 = scmp.eq.s32.totalorder %s16, 0
    %p131 = por %p129, %p130
    %p132 = scmp.ne.s32.totalorder %s120, %s121
    %p133 = scmp.eq.s32.totalorder %s17, 1
    %p134 = por %p132, %p133
    %p136 = scmp.ne.s32.totalorder %s121, %s135
    %p137 = scmp.eq.s32.totalorder %s17, 0
    %p138 = por %p136, %p137
    %s139 = ssub.s32 %s11, %s18
    %p140 = scmp.eq.s32.totalorder %s139, 0
    %s142 = sadd.s32 %s141, 1
    %s143 = scalar_select %p140, %s141, %s142
    %p146 = pneg %p140
    %p147 = scmp.eq.s32.totalorder %s11, 1
    %p148 = por %p146, %p147
    %p149 = scmp.ne.s32.totalorder %s141, %s144
    %p150 = scmp.eq.s32.totalorder %s11, 0
    %p151 = por %p149, %p150
    %p152 = scmp.ne.s32.totalorder %s141, %s144
    %p153 = scmp.eq.s32.totalorder %s16, 1
    %p154 = por %p152, %p153
    %p155 = scmp.ne.s32.totalorder %s144, %s145
    %p156 = scmp.eq.s32.totalorder %s16, 0
    %p157 = por %p155, %p156
    %p158 = scmp.ne.s32.totalorder %s144, %s145
    %p159 = scmp.eq.s32.totalorder %s17, 1
    %p160 = por %p158, %p159
    %p162 = scmp.ne.s32.totalorder %s145, %s161
    %p163 = scmp.eq.s32.totalorder %s17, 0
    %p164 = por %p162, %p163
    %p165 = scmp.le.s32.totalorder 1, %s11
    %p166 = scmp.lt.s32.totalorder %s11, 3
    %p167 = pnand %p165, %p166
    %p168 = pneg %p167
    // Predicated region
    $region9: #{swin_block_forward.6} parent=5 // pred_check
      _
    $region10: #{swin_block_forward.6} parent=5 // pred_check_branch
      %170 = sbr.rel (%p167) target = $region12
    $region11: #{swin_block_forward.6} parent=5 // pred_region
      %s171 = ssub.s32 %s11, 1
      // Predicated region
      $region13: #{swin_block_forward.6} parent=11 // pred_check
        %p172 = pneg %p110
      $region14: #{swin_block_forward.6} parent=11 // pred_check_branch
        %174 = sbr.rel (%p172) target = $region16
      $region15: #{swin_block_forward.6} parent=11 // pred_region
        _
      $region16: #{swin_block_forward.6} parent=11 // pred_fallthru
        _
      // Predicated region
      $region17: #{swin_block_forward.6} parent=11 // pred_check
        %p175 = pneg %p131
      $region18: #{swin_block_forward.6} parent=11 // pred_check_branch
        %177 = sbr.rel (%p175) target = $region20
      $region19: #{swin_block_forward.6} parent=11 // pred_region
        _
      $region20: #{swin_block_forward.6} parent=11 // pred_fallthru
        _
    $region12: #{swin_block_forward.6} parent=5 // pred_fallthru
      _
    %p178 = scmp.lt.s32.totalorder %s11, 2
    // Predicated region
    $region21: #{swin_block_forward.6} parent=5 // pred_check
      %p179 = pneg %p178
    $region22: #{swin_block_forward.6} parent=5 // pred_check_branch
      %181 = sbr.rel (%p179) target = $region24
    $region23: #{swin_block_forward.6} parent=5 // pred_region
      // Predicated region
      $region25: #{swin_block_forward.6} parent=23 // pred_check
        %p182 = pneg %p31
      $region26: #{swin_block_forward.6} parent=23 // pred_check_branch
        %184 = sbr.rel (%p182) target = $region28
      $region27: #{swin_block_forward.6} parent=23 // pred_region
        %s185 = smul.u32 4, %s11
        %p186 = scmp.lt.s32.totalorder %s185, 7
        %s187 = scalar_select %p186, %s185, 7
        %s188 = smul.addr %s187, 8
        %s189 = smul.addr %s188, 4
        %s190 = scalar_lea.vmem %s0, %s189
        %s191 = smul.u32 4, %s11
      $region28: #{swin_block_forward.6} parent=23 // pred_fallthru
        _
      // Predicated region
      $region29: #{swin_block_forward.6} parent=23 // pred_check
        %p192 = pneg %p57
      $region30: #{swin_block_forward.6} parent=23 // pred_check_branch
        %194 = sbr.rel (%p192) target = $region32
      $region31: #{swin_block_forward.6} parent=23 // pred_region
        %s195 = smul.u32 4, %s11
        %p196 = scmp.lt.s32.totalorder %s195, 7
        %s197 = scalar_select %p196, %s195, 7
        %s198 = smul.addr %s197, 8
        %s199 = smul.addr %s198, 4
        %s200 = scalar_lea.vmem %s1, %s199
        %s201 = smul.u32 4, %s11
      $region32: #{swin_block_forward.6} parent=23 // pred_fallthru
        _
      // Predicated region
      $region33: #{swin_block_forward.6} parent=23 // pred_check
        %p202 = pneg %p83
      $region34: #{swin_block_forward.6} parent=23 // pred_check_branch
        %204 = sbr.rel (%p202) target = $region36
      $region35: #{swin_block_forward.6} parent=23 // pred_region
        %s205 = smul.u32 4, %s11
        %p206 = scmp.lt.s32.totalorder %s205, 7
        %s207 = scalar_select %p206, %s205, 7
        %s208 = smul.addr %s207, 8
        %s209 = smul.addr %s208, 4
        %s210 = scalar_lea.vmem %s2, %s209
        %s211 = smul.u32 4, %s11
      $region36: #{swin_block_forward.6} parent=23 // pred_fallthru
        _
    $region24: #{swin_block_forward.6} parent=5 // pred_fallthru
      _
    %p212 = scmp.le.s32.totalorder 1, %s11
    %p213 = scmp.lt.s32.totalorder %s11, 3
    %p214 = pnand %p212, %p213
    %p215 = pneg %p214
    // Predicated region
    $region37: #{swin_block_forward.6} parent=5 // pred_check
      _
    $region38: #{swin_block_forward.6} parent=5 // pred_check_branch
      %217 = sbr.rel (%p214) target = $region40
    $region39: #{swin_block_forward.6} parent=5 // pred_region
      %s218 = ssub.s32 %s11, 1
      %s219 = smul.u32 4, %s16
      %p220 = scmp.lt.s32.totalorder %s219, 7
      %s221 = scalar_select %p220, %s219, 7
      %s222 = smul.addr %s221, 8
      %s223 = smul.addr %s222, 4
      %s224 = scalar_lea.vmem %s0, %s223
      %p225 = pneg %p37
      %p226 = pneg %p34
      %s227 = smul.u32 4, %s16
      %p228 = scmp.lt.s32.totalorder %s227, 7
      %s229 = scalar_select %p228, %s227, 7
      %s230 = smul.addr %s229, 8
      %s231 = smul.addr %s230, 4
      %s232 = scalar_lea.vmem %s1, %s231
      %p233 = pneg %p63
      %p234 = pneg %p60
      %s235 = smul.u32 4, %s16
      %p236 = scmp.lt.s32.totalorder %s235, 7
      %s237 = scalar_select %p236, %s235, 7
      %s238 = smul.addr %s237, 8
      %s239 = smul.addr %s238, 4
      %s240 = scalar_lea.vmem %s2, %s239
      %p241 = pneg %p89
      %p242 = pneg %p86
      %p243 = pneg %p110
      %p244 = pneg %p107
      %p245 = pneg %p131
      %p246 = pneg %p128
      %p247 = pneg %p157
      %p248 = pneg %p154
      %s249 = smul.u32 4, %s16
      %p250 = scmp.lt.s32.totalorder %s249, 7
      %s251 = scalar_select %p250, %s249, 7
      %s252 = smul.addr %s251, 8
      %s253 = smul.addr %s252, 4
      %s254 = scalar_lea.vmem %s5, %s253
      %s255 = smul.u32 4, %s16
      %p256 = scmp.lt.s32.totalorder %s255, 7
      %s257 = scalar_select %p256, %s255, 7
      %s258 = smul.addr %s257, 8
      %s259 = smul.addr %s258, 4
      %s260 = scalar_lea.vmem %s0, %s259
      %s261 = smul.u32 4, %s16
      %s262 = smul.u32 4, %s16
      %p263 = scmp.lt.s32.totalorder %s262, 7
      %s264 = scalar_select %p263, %s262, 7
      %s265 = smul.addr %s264, 8
      %s266 = smul.addr %s265, 4
      %s267 = scalar_lea.vmem %s1, %s266
      %s268 = smul.u32 4, %s16
      %s269 = smul.u32 4, %s16
      %p270 = scmp.lt.s32.totalorder %s269, 7
      %s271 = scalar_select %p270, %s269, 7
      %s272 = smul.addr %s271, 8
      %s273 = smul.addr %s272, 4
      %s274 = scalar_lea.vmem %s2, %s273
      %s275 = smul.u32 4, %s16
      %s276 = smul.u32 4, %s16
      %p277 = scmp.lt.s32.totalorder %s276, 7
      %s278 = scalar_select %p277, %s276, 7
      %s279 = smul.addr %s278, 8
      %s280 = smul.addr %s279, 4
      %s281 = scalar_lea.vmem %s5, %s280
      %s282 = smul.u32 4, %s16
      %v284 = vld [vmem:[%s260] sm:$0xf]
      %v285 = vld [vmem:[%s260 + $0x4] sm:$0xf]
      %v286 = vld [vmem:[%s260 + $0x8] sm:$0xf]
      %v287 = vld [vmem:[%s260 + $0xc] sm:$0xf]
      %v288 = vld [vmem:[%s260 + $0x10] sm:$0xf]
      %v289 = vld [vmem:[%s260 + $0x14] sm:$0xf]
      %v290 = vld [vmem:[%s260 + $0x18] sm:$0xf]
      %v291 = vld [vmem:[%s260 + $0x1c] sm:$0xf]
      %v292 = vld [vmem:[%s260 + $0x20] sm:$0xf]
      %v293 = vld [vmem:[%s260 + $0x24] sm:$0xf]
      %v294 = vld [vmem:[%s260 + $0x28] sm:$0xf]
      %v295 = vld [vmem:[%s260 + $0x2c] sm:$0xf]
      %v296 = vld [vmem:[%s260 + $0x30] sm:$0xf]
      %v297 = vld [vmem:[%s260 + $0x34] sm:$0xf]
      %v298 = vld [vmem:[%s260 + $0x38] sm:$0xf]
      %v299 = vld [vmem:[%s260 + $0x3c] sm:$0xf]
      %v300 = vld [vmem:[%s260 + $0x40] sm:$0xf]
      %v301 = vld [vmem:[%s260 + $0x44] sm:$0xf]
      %v302 = vld [vmem:[%s260 + $0x48] sm:$0xf]
      %v303 = vld [vmem:[%s260 + $0x4c] sm:$0xf]
      %v304 = vld [vmem:[%s260 + $0x50] sm:$0xf]
      %v305 = vld [vmem:[%s260 + $0x54] sm:$0xf]
      %v306 = vld [vmem:[%s260 + $0x58] sm:$0xf]
      %v307 = vld [vmem:[%s260 + $0x5c] sm:$0xf]
      %v308 = vld [vmem:[%s260 + $0x60] sm:$0xf]
      %v309 = vld [vmem:[%s260 + $0x64] sm:$0xf]
      %v310 = vld [vmem:[%s260 + $0x68] sm:$0xf]
      %v311 = vld [vmem:[%s260 + $0x6c] sm:$0xf]
      %v312 = vld [vmem:[%s260 + $0x70] sm:$0xf]
      %v313 = vld [vmem:[%s260 + $0x74] sm:$0xf]
      %v314 = vld [vmem:[%s260 + $0x78] sm:$0xf]
      %v315 = vld [vmem:[%s260 + $0x7c] sm:$0xf]
      %v316 = vld [vmem:[%s267] sm:$0xf]
      %v317 = vld [vmem:[%s267 + $0x4] sm:$0xf]
      %v318 = vld [vmem:[%s267 + $0x8] sm:$0xf]
      %v319 = vld [vmem:[%s267 + $0xc] sm:$0xf]
      %v320 = vld [vmem:[%s267 + $0x10] sm:$0xf]
      %v321 = vld [vmem:[%s267 + $0x14] sm:$0xf]
      %v322 = vld [vmem:[%s267 + $0x18] sm:$0xf]
      %v323 = vld [vmem:[%s267 + $0x1c] sm:$0xf]
      %v324 = vld [vmem:[%s267 + $0x20] sm:$0xf]
      %v325 = vld [vmem:[%s267 + $0x24] sm:$0xf]
      %v326 = vld [vmem:[%s267 + $0x28] sm:$0xf]
      %v327 = vld [vmem:[%s267 + $0x2c] sm:$0xf]
      %v328 = vld [vmem:[%s267 + $0x30] sm:$0xf]
      %v329 = vld [vmem:[%s267 + $0x34] sm:$0xf]
      %v330 = vld [vmem:[%s267 + $0x38] sm:$0xf]
      %v331 = vld [vmem:[%s267 + $0x3c] sm:$0xf]
      %v332 = vld [vmem:[%s267 + $0x40] sm:$0xf]
      %v333 = vld [vmem:[%s267 + $0x44] sm:$0xf]
      %v334 = vld [vmem:[%s267 + $0x48] sm:$0xf]
      %v335 = vld [vmem:[%s267 + $0x4c] sm:$0xf]
      %v336 = vld [vmem:[%s267 + $0x50] sm:$0xf]
      %v337 = vld [vmem:[%s267 + $0x54] sm:$0xf]
      %v338 = vld [vmem:[%s267 + $0x58] sm:$0xf]
      %v339 = vld [vmem:[%s267 + $0x5c] sm:$0xf]
      %v340 = vld [vmem:[%s267 + $0x60] sm:$0xf]
      %v341 = vld [vmem:[%s267 + $0x64] sm:$0xf]
      %v342 = vld [vmem:[%s267 + $0x68] sm:$0xf]
      %v343 = vld [vmem:[%s267 + $0x6c] sm:$0xf]
      %v344 = vld [vmem:[%s267 + $0x70] sm:$0xf]
      %v345 = vld [vmem:[%s267 + $0x74] sm:$0xf]
      %v346 = vld [vmem:[%s267 + $0x78] sm:$0xf]
      %v347 = vld [vmem:[%s267 + $0x7c] sm:$0xf]
      %v350 = vunpack.c.l.b16 %v284
      %v351 = vunpack.c.l.b16 %v285
      %v352 = vpack.c.b16 %v351, %v350
      %v355 = vunpack.c.l.b16 %v316
      %v356 = vunpack.c.l.b16 %v317
      %v357 = vpack.c.b16 %v356, %v355
      %vm358 = vcmask 261120
      %v360 = vsel %vm358, %v352, 0
      %v363 = vsel %vm358, %v357, 0
      %365 = vmatprep.subr.bf16.mxu0 0
      %366 = vmatpush1.bf16.xpose.msra.mxu0 %v363
      %367 = vmatprep.subr.bf16.mxu0 0
      %368 = vmatpush1.bf16.xpose.msra.mxu0 0
      %369 = vmatprep.subr.bf16.mxu0 0
      %370 = vmatpush1.bf16.xpose.msra.mxu0 0
      %371 = vmatprep.subr.bf16.mxu0 0
      %372 = vmatpush1.bf16.xpose.msra.mxu0 0
      %373 = vmatprep.subr.bf16.mxu0 0
      %374 = vmatpush1.bf16.xpose.msra.mxu0 0
      %375 = vmatprep.subr.bf16.mxu0 0
      %376 = vmatpush1.bf16.xpose.msra.mxu0 0
      %377 = vmatprep.subr.bf16.mxu0 0
      %378 = vmatpush1.bf16.xpose.msra.mxu0 0
      %379 = vmatprep.subr.bf16.mxu0 0
      %380 = vmatpush1.bf16.xpose.msra.mxu0 0
      %381 = vmatprep.subr.bf16.mxu0 0
      %382 = vmatpush1.bf16.xpose.msra.mxu0 0
      %383 = vmatprep.subr.bf16.mxu0 0
      %384 = vmatpush1.bf16.xpose.msra.mxu0 0
      %385 = vmatprep.subr.bf16.mxu0 0
      %386 = vmatpush1.bf16.xpose.msra.mxu0 0
      %387 = vmatprep.subr.bf16.mxu0 0
      %388 = vmatpush1.bf16.xpose.msra.mxu0 0
      %389 = vmatprep.subr.bf16.mxu0 0
      %390 = vmatpush1.bf16.xpose.msra.mxu0 0
      %391 = vmatprep.subr.bf16.mxu0 0
      %392 = vmatpush1.bf16.xpose.msra.mxu0 0
      %393 = vmatprep.subr.bf16.mxu0 0
      %394 = vmatpush1.bf16.xpose.msra.mxu0 0
      %395 = vmatprep.subr.bf16.mxu0 0
      %396 = vmatpush1.bf16.xpose.msra.mxu0 0
      %397 = vmatprep.mubr.bf16.mxu0 0
      %398 = vmatmul.mubr.bf16.gmra.mrb[0].mxu0 %v360
      %v399 = vpop.f32.mrb[0].mxu0
      %v400 = vadd.f32 0.0, %v399
      %v401 = vpop.f32.mrb[0].mxu0
      %v402 = vpop.f32.mrb[0].mxu0
      %v403 = vadd.f32 0.0, %v402
      %v404 = vpop.f32.mrb[0].mxu0
      %405 = vdwg.mxu0
      %v408 = vunpack.c.l.b16 %v286
      %v409 = vunpack.c.l.b16 %v287
      %v410 = vpack.c.b16 %v409, %v408
      %v413 = vunpack.c.l.b16 %v318
      %v414 = vunpack.c.l.b16 %v319
      %v415 = vpack.c.b16 %v414, %v413
      %v417 = vsel %vm358, %v410, 0
      %v420 = vsel %vm358, %v415, 0
      %422 = vmatprep.subr.bf16.mxu0 0
      %423 = vmatpush1.bf16.xpose.msra.mxu0 %v420
      %424 = vmatprep.subr.bf16.mxu0 0
      %425 = vmatpush1.bf16.xpose.msra.mxu0 0
      %426 = vmatprep.subr.bf16.mxu0 0
      %427 = vmatpush1.bf16.xpose.msra.mxu0 0
      %428 = vmatprep.subr.bf16.mxu0 0
      %429 = vmatpush1.bf16.xpose.msra.mxu0 0
      %430 = vmatprep.subr.bf16.mxu0 0
      %431 = vmatpush1.bf16.xpose.msra.mxu0 0
      %432 = vmatprep.subr.bf16.mxu0 0
      %433 = vmatpush1.bf16.xpose.msra.mxu0 0
      %434 = vmatprep.subr.bf16.mxu0 0
      %435 = vmatpush1.bf16.xpose.msra.mxu0 0
      %436 = vmatprep.subr.bf16.mxu0 0
      %437 = vmatpush1.bf16.xpose.msra.mxu0 0
      %438 = vmatprep.subr.bf16.mxu0 0
      %439 = vmatpush1.bf16.xpose.msra.mxu0 0
      %440 = vmatprep.subr.bf16.mxu0 0
      %441 = vmatpush1.bf16.xpose.msra.mxu0 0
      %442 = vmatprep.subr.bf16.mxu0 0
      %443 = vmatpush1.bf16.xpose.msra.mxu0 0
      %444 = vmatprep.subr.bf16.mxu0 0
      %445 = vmatpush1.bf16.xpose.msra.mxu0 0
      %446 = vmatprep.subr.bf16.mxu0 0
      %447 = vmatpush1.bf16.xpose.msra.mxu0 0
      %448 = vmatprep.subr.bf16.mxu0 0
      %449 = vmatpush1.bf16.xpose.msra.mxu0 0
      %450 = vmatprep.subr.bf16.mxu0 0
      %451 = vmatpush1.bf16.xpose.msra.mxu0 0
      %452 = vmatprep.subr.bf16.mxu0 0
      %453 = vmatpush1.bf16.xpose.msra.mxu0 0
      %454 = vmatprep.mubr.bf16.mxu0 0
      %455 = vmatmul.mubr.bf16.gmra.mrb[0].mxu0 %v417
      %v456 = vpop.f32.mrb[0].mxu0
      %v457 = vadd.f32 0.0, %v456
      %v458 = vpop.f32.mrb[0].mxu0
      %v459 = vpop.f32.mrb[0].mxu0
      %v460 = vadd.f32 0.0, %v459
      %v461 = vpop.f32.mrb[0].mxu0
      %462 = vdwg.mxu0
      %v465 = vunpack.c.l.b16 %v288
      %v466 = vunpack.c.l.b16 %v289
      %v467 = vpack.c.b16 %v466, %v465
      %v470 = vunpack.c.l.b16 %v320
      %v471 = vunpack.c.l.b16 %v321
      %v472 = vpack.c.b16 %v471, %v470
      %v474 = vsel %vm358, %v467, 0
      %v477 = vsel %vm358, %v472, 0
      %479 = vmatprep.subr.bf16.mxu0 0
      %480 = vmatpush1.bf16.xpose.msra.mxu0 %v477
      %481 = vmatprep.subr.bf16.mxu0 0
      %482 = vmatpush1.bf16.xpose.msra.mxu0 0
      %483 = vmatprep.subr.bf16.mxu0 0
      %484 = vmatpush1.bf16.xpose.msra.mxu0 0
      %485 = vmatprep.subr.bf16.mxu0 0
      %486 = vmatpush1.bf16.xpose.msra.mxu0 0
      %487 = vmatprep.subr.bf16.mxu0 0
      %488 = vmatpush1.bf16.xpose.msra.mxu0 0
      %489 = vmatprep.subr.bf16.mxu0 0
      %490 = vmatpush1.bf16.xpose.msra.mxu0 0
      %491 = vmatprep.subr.bf16.mxu0 0
      %492 = vmatpush1.bf16.xpose.msra.mxu0 0
      %493 = vmatprep.subr.bf16.mxu0 0
      %494 = vmatpush1.bf16.xpose.msra.mxu0 0
      %495 = vmatprep.subr.bf16.mxu0 0
      %496 = vmatpush1.bf16.xpose.msra.mxu0 0
      %497 = vmatprep.subr.bf16.mxu0 0
      %498 = vmatpush1.bf16.xpose.msra.mxu0 0
      %499 = vmatprep.subr.bf16.mxu0 0
      %500 = vmatpush1.bf16.xpose.msra.mxu0 0
      %501 = vmatprep.subr.bf16.mxu0 0
      %502 = vmatpush1.bf16.xpose.msra.mxu0 0
      %503 = vmatprep.subr.bf16.mxu0 0
      %504 = vmatpush1.bf16.xpose.msra.mxu0 0
      %505 = vmatprep.subr.bf16.mxu0 0
      %506 = vmatpush1.bf16.xpose.msra.mxu0 0
      %507 = vmatprep.subr.bf16.mxu0 0
      %508 = vmatpush1.bf16.xpose.msra.mxu0 0
      %509 = vmatprep.subr.bf16.mxu0 0
      %510 = vmatpush1.bf16.xpose.msra.mxu0 0
      %511 = vmatprep.mubr.bf16.mxu0 0
      %512 = vmatmul.mubr.bf16.gmra.mrb[0].mxu0 %v474
      %v513 = vpop.f32.mrb[0].mxu0
      %v514 = vadd.f32 0.0, %v513
      %v515 = vpop.f32.mrb[0].mxu0
      %v516 = vpop.f32.mrb[0].mxu0
      %v517 = vadd.f32 0.0, %v516
      %v518 = vpop.f32.mrb[0].mxu0
      %519 = vdwg.mxu0
      %v522 = vunpack.c.l.b16 %v290
      %v523 = vunpack.c.l.b16 %v291
      %v524 = vpack.c.b16 %v523, %v522
      %v527 = vunpack.c.l.b16 %v322
      %v528 = vunpack.c.l.b16 %v323
      %v529 = vpack.c.b16 %v528, %v527
      %v531 = vsel %vm358, %v524, 0
      %v534 = vsel %vm358, %v529, 0
      %536 = vmatprep.subr.bf16.mxu0 0
      %537 = vmatpush1.bf16.xpose.msra.mxu0 %v534
      %538 = vmatprep.subr.bf16.mxu0 0
      %539 = vmatpush1.bf16.xpose.msra.mxu0 0
      %540 = vmatprep.subr.bf16.mxu0 0
      %541 = vmatpush1.bf16.xpose.msra.mxu0 0
      %542 = vmatprep.subr.bf16.mxu0 0
      %543 = vmatpush1.bf16.xpose.msra.mxu0 0
      %544 = vmatprep.subr.bf16.mxu0 0
      %545 = vmatpush1.bf16.xpose.msra.mxu0 0
      %546 = vmatprep.subr.bf16.mxu0 0
      %547 = vmatpush1.bf16.xpose.msra.mxu0 0
      %548 = vmatprep.subr.bf16.mxu0 0
      %549 = vmatpush1.bf16.xpose.msra.mxu0 0
      %550 = vmatprep.subr.bf16.mxu0 0
      %551 = vmatpush1.bf16.xpose.msra.mxu0 0
      %552 = vmatprep.subr.bf16.mxu0 0
      %553 = vmatpush1.bf16.xpose.msra.mxu0 0
      %554 = vmatprep.subr.bf16.mxu0 0
      %555 = vmatpush1.bf16.xpose.msra.mxu0 0
      %556 = vmatprep.subr.bf16.mxu0 0
      %557 = vmatpush1.bf16.xpose.msra.mxu0 0
      %558 = vmatprep.subr.bf16.mxu0 0
      %559 = vmatpush1.bf16.xpose.msra.mxu0 0
      %560 = vmatprep.subr.bf16.mxu0 0
      %561 = vmatpush1.bf16.xpose.msra.mxu0 0
      %562 = vmatprep.subr.bf16.mxu0 0
      %563 = vmatpush1.bf16.xpose.msra.mxu0 0
      %564 = vmatprep.subr.bf16.mxu0 0
      %565 = vmatpush1.bf16.xpose.msra.mxu0 0
      %566 = vmatprep.subr.bf16.mxu0 0
      %567 = vmatpush1.bf16.xpose.msra.mxu0 0
      %568 = vmatprep.mubr.bf16.mxu0 0
      %569 = vmatmul.mubr.bf16.gmra.mrb[0].mxu0 %v531
      %v570 = vpop.f32.mrb[0].mxu0
      %v571 = vadd.f32 0.0, %v570
      %v572 = vpop.f32.mrb[0].mxu0
      %v573 = vpop.f32.mrb[0].mxu0
      %v574 = vadd.f32 0.0, %v573
      %v575 = vpop.f32.mrb[0].mxu0
      %576 = vdwg.mxu0
      %v579 = vunpack.c.l.b16 %v292
      %v580 = vunpack.c.l.b16 %v293
      %v581 = vpack.c.b16 %v580, %v579
      %v584 = vunpack.c.l.b16 %v324
      %v585 = vunpack.c.l.b16 %v325
      %v586 = vpack.c.b16 %v585, %v584
      %v588 = vsel %vm358, %v581, 0
      %v591 = vsel %vm358, %v586, 0
      %593 = vmatprep.subr.bf16.mxu0 0
      %594 = vmatpush1.bf16.xpose.msra.mxu0 %v591
      %595 = vmatprep.subr.bf16.mxu0 0
      %596 = vmatpush1.bf16.xpose.msra.mxu0 0
      %597 = vmatprep.subr.bf16.mxu0 0
      %598 = vmatpush1.bf16.xpose.msra.mxu0 0
      %599 = vmatprep.subr.bf16.mxu0 0
      %600 = vmatpush1.bf16.xpose.msra.mxu0 0
      %601 = vmatprep.subr.bf16.mxu0 0
      %602 = vmatpush1.bf16.xpose.msra.mxu0 0
      %603 = vmatprep.subr.bf16.mxu0 0
      %604 = vmatpush1.bf16.xpose.msra.mxu0 0
      %605 = vmatprep.subr.bf16.mxu0 0
      %606 = vmatpush1.bf16.xpose.msra.mxu0 0
      %607 = vmatprep.subr.bf16.mxu0 0
      %608 = vmatpush1.bf16.xpose.msra.mxu0 0
      %609 = vmatprep.subr.bf16.mxu0 0
      %610 = vmatpush1.bf16.xpose.msra.mxu0 0
      %611 = vmatprep.subr.bf16.mxu0 0
      %612 = vmatpush1.bf16.xpose.msra.mxu0 0
      %613 = vmatprep.subr.bf16.mxu0 0
      %614 = vmatpush1.bf16.xpose.msra.mxu0 0
      %615 = vmatprep.subr.bf16.mxu0 0
      %616 = vmatpush1.bf16.xpose.msra.mxu0 0
      %617 = vmatprep.subr.bf16.mxu0 0
      %618 = vmatpush1.bf16.xpose.msra.mxu0 0
      %619 = vmatprep.subr.bf16.mxu0 0
      %620 = vmatpush1.bf16.xpose.msra.mxu0 0
      %621 = vmatprep.subr.bf16.mxu0 0
      %622 = vmatpush1.bf16.xpose.msra.mxu0 0
      %623 = vmatprep.subr.bf16.mxu0 0
      %624 = vmatpush1.bf16.xpose.msra.mxu0 0
      %625 = vmatprep.mubr.bf16.mxu0 0
      %626 = vmatmul.mubr.bf16.gmra.mrb[0].mxu0 %v588
      %v627 = vpop.f32.mrb[0].mxu0
      %v628 = vadd.f32 0.0, %v627
      %v629 = vpop.f32.mrb[0].mxu0
      %v630 = vpop.f32.mrb[0].mxu0
      %v631 = vadd.f32 0.0, %v630
      %v632 = vpop.f32.mrb[0].mxu0
      %633 = vdwg.mxu0
      %v636 = vunpack.c.l.b16 %v294
      %v637 = vunpack.c.l.b16 %v295
      %v638 = vpack.c.b16 %v637, %v636
      %v641 = vunpack.c.l.b16 %v326
      %v642 = vunpack.c.l.b16 %v327
      %v643 = vpack.c.b16 %v642, %v641
      %v645 = vsel %vm358, %v638, 0
      %v648 = vsel %vm358, %v643, 0
      %650 = vmatprep.subr.bf16.mxu0 0
      %651 = vmatpush1.bf16.xpose.msra.mxu0 %v648
      %652 = vmatprep.subr.bf16.mxu0 0
      %653 = vmatpush1.bf16.xpose.msra.mxu0 0
      %654 = vmatprep.subr.bf16.mxu0 0
      %655 = vmatpush1.bf16.xpose.msra.mxu0 0
      %656 = vmatprep.subr.bf16.mxu0 0
      %657 = vmatpush1.bf16.xpose.msra.mxu0 0
      %658 = vmatprep.subr.bf16.mxu0 0
      %659 = vmatpush1.bf16.xpose.msra.mxu0 0
      %660 = vmatprep.subr.bf16.mxu0 0
      %661 = vmatpush1.bf16.xpose.msra.mxu0 0
      %662 = vmatprep.subr.bf16.mxu0 0
      %663 = vmatpush1.bf16.xpose.msra.mxu0 0
      %664 = vmatprep.subr.bf16.mxu0 0
      %665 = vmatpush1.bf16.xpose.msra.mxu0 0
      %666 = vmatprep.subr.bf16.mxu0 0
      %667 = vmatpush1.bf16.xpose.msra.mxu0 0
      %668 = vmatprep.subr.bf16.mxu0 0
      %669 = vmatpush1.bf16.xpose.msra.mxu0 0
      %670 = vmatprep.subr.bf16.mxu0 0
      %671 = vmatpush1.bf16.xpose.msra.mxu0 0
      %672 = vmatprep.subr.bf16.mxu0 0
      %673 = vmatpush1.bf16.xpose.msra.mxu0 0
      %674 = vmatprep.subr.bf16.mxu0 0
      %675 = vmatpush1.bf16.xpose.msra.mxu0 0
      %676 = vmatprep.subr.bf16.mxu0 0
      %677 = vmatpush1.bf16.xpose.msra.mxu0 0
      %678 = vmatprep.subr.bf16.mxu0 0
      %679 = vmatpush1.bf16.xpose.msra.mxu0 0
      %680 = vmatprep.subr.bf16.mxu0 0
      %681 = vmatpush1.bf16.xpose.msra.mxu0 0
      %682 = vmatprep.mubr.bf16.mxu0 0
      %683 = vmatmul.mubr.bf16.gmra.mrb[0].mxu0 %v645
      %v684 = vpop.f32.mrb[0].mxu0
      %v685 = vadd.f32 0.0, %v684
      %v686 = vpop.f32.mrb[0].mxu0
      %v687 = vpop.f32.mrb[0].mxu0
      %v688 = vadd.f32 0.0, %v687
      %v689 = vpop.f32.mrb[0].mxu0
      %690 = vdwg.mxu0
      %v693 = vunpack.c.l.b16 %v296
      %v694 = vunpack.c.l.b16 %v297
      %v695 = vpack.c.b16 %v694, %v693
      %v698 = vunpack.c.l.b16 %v328
      %v699 = vunpack.c.l.b16 %v329
      %v700 = vpack.c.b16 %v699, %v698
      %v702 = vsel %vm358, %v695, 0
      %v705 = vsel %vm358, %v700, 0
      %707 = vmatprep.subr.bf16.mxu0 0
      %708 = vmatpush1.bf16.xpose.msra.mxu0 %v705
      %709 = vmatprep.subr.bf16.mxu0 0
      %710 = vmatpush1.bf16.xpose.msra.mxu0 0
      %711 = vmatprep.subr.bf16.mxu0 0
      %712 = vmatpush1.bf16.xpose.msra.mxu0 0
      %713 = vmatprep.subr.bf16.mxu0 0
      %714 = vmatpush1.bf16.xpose.msra.mxu0 0
      %715 = vmatprep.subr.bf16.mxu0 0
      %716 = vmatpush1.bf16.xpose.msra.mxu0 0
      %717 = vmatprep.subr.bf16.mxu0 0
      %718 = vmatpush1.bf16.xpose.msra.mxu0 0
      %719 = vmatprep.subr.bf16.mxu0 0
      %720 = vmatpush1.bf16.xpose.msra.mxu0 0
      %721 = vmatprep.subr.bf16.mxu0 0
      %722 = vmatpush1.bf16.xpose.msra.mxu0 0
      %723 = vmatprep.subr.bf16.mxu0 0
      %724 = vmatpush1.bf16.xpose.msra.mxu0 0
      %725 = vmatprep.subr.bf16.mxu0 0
      %726 = vmatpush1.bf16.xpose.msra.mxu0 0
      %727 = vmatprep.subr.bf16.mxu0 0
      %728 = vmatpush1.bf16.xpose.msra.mxu0 0
      %729 = vmatprep.subr.bf16.mxu0 0
      %730 = vmatpush1.bf16.xpose.msra.mxu0 0
      %731 = vmatprep.subr.bf16.mxu0 0
      %732 = vmatpush1.bf16.xpose.msra.mxu0 0
      %733 = vmatprep.subr.bf16.mxu0 0
      %734 = vmatpush1.bf16.xpose.msra.mxu0 0
      %735 = vmatprep.subr.bf16.mxu0 0
      %736 = vmatpush1.bf16.xpose.msra.mxu0 0
      %737 = vmatprep.subr.bf16.mxu0 0
      %738 = vmatpush1.bf16.xpose.msra.mxu0 0
      %739 = vmatprep.mubr.bf16.mxu0 0
      %740 = vmatmul.mubr.bf16.gmra.mrb[0].mxu0 %v702
      %v741 = vpop.f32.mrb[0].mxu0
      %v742 = vadd.f32 0.0, %v741
      %v743 = vpop.f32.mrb[0].mxu0
      %v744 = vpop.f32.mrb[0].mxu0
      %v745 = vadd.f32 0.0, %v744
      %v746 = vpop.f32.mrb[0].mxu0
      %747 = vdwg.mxu0
      %v750 = vunpack.c.l.b16 %v298
      %v751 = vunpack.c.l.b16 %v299
      %v752 = vpack.c.b16 %v751, %v750
      %v755 = vunpack.c.l.b16 %v330
      %v756 = vunpack.c.l.b16 %v331
      %v757 = vpack.c.b16 %v756, %v755
      %v759 = vsel %vm358, %v752, 0
      %v762 = vsel %vm358, %v757, 0
      %764 = vmatprep.subr.bf16.mxu0 0
      %765 = vmatpush1.bf16.xpose.msra.mxu0 %v762
      %766 = vmatprep.subr.bf16.mxu0 0
      %767 = vmatpush1.bf16.xpose.msra.mxu0 0
      %768 = vmatprep.subr.bf16.mxu0 0
      %769 = vmatpush1.bf16.xpose.msra.mxu0 0
      %770 = vmatprep.subr.bf16.mxu0 0
      %771 = vmatpush1.bf16.xpose.msra.mxu0 0
      %772 = vmatprep.subr.bf16.mxu0 0
      %773 = vmatpush1.bf16.xpose.msra.mxu0 0
      %774 = vmatprep.subr.bf16.mxu0 0
      %775 = vmatpush1.bf16.xpose.msra.mxu0 0
      %776 = vmatprep.subr.bf16.mxu0 0
      %777 = vmatpush1.bf16.xpose.msra.mxu0 0
      %778 = vmatprep.subr.bf16.mxu0 0
      %779 = vmatpush1.bf16.xpose.msra.mxu0 0
      %780 = vmatprep.subr.bf16.mxu0 0
      %781 = vmatpush1.bf16.xpose.msra.mxu0 0
      %782 = vmatprep.subr.bf16.mxu0 0
      %783 = vmatpush1.bf16.xpose.msra.mxu0 0
      %784 = vmatprep.subr.bf16.mxu0 0
      %785 = vmatpush1.bf16.xpose.msra.mxu0 0
      %786 = vmatprep.subr.bf16.mxu0 0
      %787 = vmatpush1.bf16.xpose.msra.mxu0 0
      %788 = vmatprep.subr.bf16.mxu0 0
      %789 = vmatpush1.bf16.xpose.msra.mxu0 0
      %790 = vmatprep.subr.bf16.mxu0 0
      %791 = vmatpush1.bf16.xpose.msra.mxu0 0
      %792 = vmatprep.subr.bf16.mxu0 0
      %793 = vmatpush1.bf16.xpose.msra.mxu0 0
      %794 = vmatprep.subr.bf16.mxu0 0
      %795 = vmatpush1.bf16.xpose.msra.mxu0 0
      %796 = vmatprep.mubr.bf16.mxu0 0
      %797 = vmatmul.mubr.bf16.gmra.mrb[0].mxu0 %v759
      %v798 = vpop.f32.mrb[0].mxu0
      %v799 = vadd.f32 0.0, %v798
      %v800 = vpop.f32.mrb[0].mxu0
      %v801 = vpop.f32.mrb[0].mxu0
      %v802 = vadd.f32 0.0, %v801
      %v803 = vpop.f32.mrb[0].mxu0
      %804 = vdwg.mxu0
      %v807 = vunpack.c.l.b16 %v300
      %v808 = vunpack.c.l.b16 %v301
      %v809 = vpack.c.b16 %v808, %v807
      %v812 = vunpack.c.l.b16 %v332
      %v813 = vunpack.c.l.b16 %v333
      %v814 = vpack.c.b16 %v813, %v812
      %v816 = vsel %vm358, %v809, 0
      %v819 = vsel %vm358, %v814, 0
      %821 = vmatprep.subr.bf16.mxu0 0
      %822 = vmatpush1.bf16.xpose.msra.mxu0 %v819
      %823 = vmatprep.subr.bf16.mxu0 0
      %824 = vmatpush1.bf16.xpose.msra.mxu0 0
      %825 = vmatprep.subr.bf16.mxu0 0
      %826 = vmatpush1.bf16.xpose.msra.mxu0 0
      %827 = vmatprep.subr.bf16.mxu0 0
      %828 = vmatpush1.bf16.xpose.msra.mxu0 0
      %829 = vmatprep.subr.bf16.mxu0 0
      %830 = vmatpush1.bf16.xpose.msra.mxu0 0
      %831 = vmatprep.subr.bf16.mxu0 0
      %832 = vmatpush1.bf16.xpose.msra.mxu0 0
      %833 = vmatprep.subr.bf16.mxu0 0
      %834 = vmatpush1.bf16.xpose.msra.mxu0 0
      %835 = vmatprep.subr.bf16.mxu0 0
      %836 = vmatpush1.bf16.xpose.msra.mxu0 0
      %837 = vmatprep.subr.bf16.mxu0 0
      %838 = vmatpush1.bf16.xpose.msra.mxu0 0
      %839 = vmatprep.subr.bf16.mxu0 0
      %840 = vmatpush1.bf16.xpose.msra.mxu0 0
      %841 = vmatprep.subr.bf16.mxu0 0
      %842 = vmatpush1.bf16.xpose.msra.mxu0 0
      %843 = vmatprep.subr.bf16.mxu0 0
      %844 = vmatpush1.bf16.xpose.msra.mxu0 0
      %845 = vmatprep.subr.bf16.mxu0 0
      %846 = vmatpush1.bf16.xpose.msra.mxu0 0
      %847 = vmatprep.subr.bf16.mxu0 0
      %848 = vmatpush1.bf16.xpose.msra.mxu0 0
      %849 = vmatprep.subr.bf16.mxu0 0
      %850 = vmatpush1.bf16.xpose.msra.mxu0 0
      %851 = vmatprep.subr.bf16.mxu0 0
      %852 = vmatpush1.bf16.xpose.msra.mxu0 0
      %853 = vmatprep.mubr.bf16.mxu0 0
      %854 = vmatmul.mubr.bf16.gmra.mrb[0].mxu0 %v816
      %v855 = vpop.f32.mrb[0].mxu0
      %v856 = vadd.f32 0.0, %v855
      %v857 = vpop.f32.mrb[0].mxu0
      %v858 = vpop.f32.mrb[0].mxu0
      %v859 = vadd.f32 0.0, %v858
      %v860 = vpop.f32.mrb[0].mxu0
      %861 = vdwg.mxu0
      %v864 = vunpack.c.l.b16 %v302
      %v865 = vunpack.c.l.b16 %v303
      %v866 = vpack.c.b16 %v865, %v864
      %v869 = vunpack.c.l.b16 %v334
      %v870 = vunpack.c.l.b16 %v335
      %v871 = vpack.c.b16 %v870, %v869
      %v873 = vsel %vm358, %v866, 0
      %v876 = vsel %vm358, %v871, 0
      %878 = vmatprep.subr.bf16.mxu0 0
      %879 = vmatpush1.bf16.xpose.msra.mxu0 %v876
      %880 = vmatprep.subr.bf16.mxu0 0
      %881 = vmatpush1.bf16.xpose.msra.mxu0 0
      %882 = vmatprep.subr.bf16.mxu0 0
      %883 = vmatpush1.bf16.xpose.msra.mxu0 0
      %884 = vmatprep.subr.bf16.mxu0 0
      %885 = vmatpush1.bf16.xpose.msra.mxu0 0
      %886 = vmatprep.subr.bf16.mxu0 0
      %887 = vmatpush1.bf16.xpose.msra.mxu0 0
      %888 = vmatprep.subr.bf16.mxu0 0
      %889 = vmatpush1.bf16.xpose.msra.mxu0 0
      %890 = vmatprep.subr.bf16.mxu0 0
      %891 = vmatpush1.bf16.xpose.msra.mxu0 0
      %892 = vmatprep.subr.bf16.mxu0 0
      %893 = vmatpush1.bf16.xpose.msra.mxu0 0
      %894 = vmatprep.subr.bf16.mxu0 0
      %895 = vmatpush1.bf16.xpose.msra.mxu0 0
      %896 = vmatprep.subr.bf16.mxu0 0
      %897 = vmatpush1.bf16.xpose.msra.mxu0 0
      %898 = vmatprep.subr.bf16.mxu0 0
      %899 = vmatpush1.bf16.xpose.msra.mxu0 0
      %900 = vmatprep.subr.bf16.mxu0 0
      %901 = vmatpush1.bf16.xpose.msra.mxu0 0
      %902 = vmatprep.subr.bf16.mxu0 0
      %903 = vmatpush1.bf16.xpose.msra.mxu0 0
      %904 = vmatprep.subr.bf16.mxu0 0
      %905 = vmatpush1.bf16.xpose.msra.mxu0 0
      %906 = vmatprep.subr.bf16.mxu0 0
      %907 = vmatpush1.bf16.xpose.msra.mxu0 0
      %908 = vmatprep.subr.bf16.mxu0 0
      %909 = vmatpush1.bf16.xpose.msra.mxu0 0
      %910 = vmatprep.mubr.bf16.mxu0 0
      %911 = vmatmul.mubr.bf16.gmra.mrb[0].mxu0 %v873
      %v912 = vpop.f32.mrb[0].mxu0
      %v913 = vadd.f32 0.0, %v912
      %v914 = vpop.f32.mrb[0].mxu0
      %v915 = vpop.f32.mrb[0].mxu0
      %v916 = vadd.f32 0.0, %v915
      %v917 = vpop.f32.mrb[0].mxu0
      %918 = vdwg.mxu0
      %v921 = vunpack.c.l.b16 %v304
      %v922 = vunpack.c.l.b16 %v305
      %v923 = vpack.c.b16 %v922, %v921
      %v926 = vunpack.c.l.b16 %v336
      %v927 = vunpack.c.l.b16 %v337
      %v928 = vpack.c.b16 %v927, %v926
      %v930 = vsel %vm358, %v923, 0
      %v933 = vsel %vm358, %v928, 0
      %935 = vmatprep.subr.bf16.mxu0 0
      %936 = vmatpush1.bf16.xpose.msra.mxu0 %v933
      %937 = vmatprep.subr.bf16.mxu0 0
      %938 = vmatpush1.bf16.xpose.msra.mxu0 0
      %939 = vmatprep.subr.bf16.mxu0 0
      %940 = vmatpush1.bf16.xpose.msra.mxu0 0
      %941 = vmatprep.subr.bf16.mxu0 0
      %942 = vmatpush1.bf16.xpose.msra.mxu0 0
      %943 = vmatprep.subr.bf16.mxu0 0
      %944 = vmatpush1.bf16.xpose.msra.mxu0 0
      %945 = vmatprep.subr.bf16.mxu0 0
      %946 = vmatpush1.bf16.xpose.msra.mxu0 0
      %947 = vmatprep.subr.bf16.mxu0 0
      %948 = vmatpush1.bf16.xpose.msra.mxu0 0
      %949 = vmatprep.subr.bf16.mxu0 0
      %950 = vmatpush1.bf16.xpose.msra.mxu0 0
      %951 = vmatprep.subr.bf16.mxu0 0
      %952 = vmatpush1.bf16.xpose.msra.mxu0 0
      %953 = vmatprep.subr.bf16.mxu0 0
      %954 = vmatpush1.bf16.xpose.msra.mxu0 0
      %955 = vmatprep.subr.bf16.mxu0 0
      %956 = vmatpush1.bf16.xpose.msra.mxu0 0
      %957 = vmatprep.subr.bf16.mxu0 0
      %958 = vmatpush1.bf16.xpose.msra.mxu0 0
      %959 = vmatprep.subr.bf16.mxu0 0
      %960 = vmatpush1.bf16.xpose.msra.mxu0 0
      %961 = vmatprep.subr.bf16.mxu0 0
      %962 = vmatpush1.bf16.xpose.msra.mxu0 0
      %963 = vmatprep.subr.bf16.mxu0 0
      %964 = vmatpush1.bf16.xpose.msra.mxu0 0
      %965 = vmatprep.subr.bf16.mxu0 0
      %966 = vmatpush1.bf16.xpose.msra.mxu0 0
      %967 = vmatprep.mubr.bf16.mxu0 0
      %968 = vmatmul.mubr.bf16.gmra.mrb[0].mxu0 %v930
      %v969 = vpop.f32.mrb[0].mxu0
      %v970 = vadd.f32 0.0, %v969
      %v971 = vpop.f32.mrb[0].mxu0
      %v972 = vpop.f32.mrb[0].mxu0
      %v973 = vadd.f32 0.0, %v972
      %v974 = vpop.f32.mrb[0].mxu0
      %975 = vdwg.mxu0
      %v978 = vunpack.c.l.b16 %v306
      %v979 = vunpack.c.l.b16 %v307
      %v980 = vpack.c.b16 %v979, %v978
      %v983 = vunpack.c.l.b16 %v338
      %v984 = vunpack.c.l.b16 %v339
      %v985 = vpack.c.b16 %v984, %v983
      %v987 = vsel %vm358, %v980, 0
      %v990 = vsel %vm358, %v985, 0
      %992 = vmatprep.subr.bf16.mxu0 0
      %993 = vmatpush1.bf16.xpose.msra.mxu0 %v990
      %994 = vmatprep.subr.bf16.mxu0 0
      %995 = vmatpush1.bf16.xpose.msra.mxu0 0
      %996 = vmatprep.subr.bf16.mxu0 0
      %997 = vmatpush1.bf16.xpose.msra.mxu0 0
      %998 = vmatprep.subr.bf16.mxu0 0
      %999 = vmatpush1.bf16.xpose.msra.mxu0 0
      %1000 = vmatprep.subr.bf16.mxu0 0
      %1001 = vmatpush1.bf16.xpose.msra.mxu0 0
      %1002 = vmatprep.subr.bf16.mxu0 0
      %1003 = vmatpush1.bf16.xpose.msra.mxu0 0
      %1004 = vmatprep.subr.bf16.mxu0 0
      %1005 = vmatpush1.bf16.xpose.msra.mxu0 0
      %1006 = vmatprep.subr.bf16.mxu0 0
      %1007 = vmatpush1.bf16.xpose.msra.mxu0 0
      %1008 = vmatprep.subr.bf16.mxu0 0
      %1009 = vmatpush1.bf16.xpose.msra.mxu0 0
      %1010 = vmatprep.subr.bf16.mxu0 0
      %1011 = vmatpush1.bf16.xpose.msra.mxu0 0
      %1012 = vmatprep.subr.bf16.mxu0 0
      %1013 = vmatpush1.bf16.xpose.msra.mxu0 0
      %1014 = vmatprep.subr.bf16.mxu0 0
      %1015 = vmatpush1.bf16.xpose.msra.mxu0 0
      %1016 = vmatprep.subr.bf16.mxu0 0
      %1017 = vmatpush1.bf16.xpose.msra.mxu0 0
      %1018 = vmatprep.subr.bf16.mxu0 0
      %1019 = vmatpush1.bf16.xpose.msra.mxu0 0
      %1020 = vmatprep.subr.bf16.mxu0 0
      %1021 = vmatpush1.bf16.xpose.msra.mxu0 0
      %1022 = vmatprep.subr.bf16.mxu0 0
      %1023 = vmatpush1.bf16.xpose.msra.mxu0 0
      %1024 = vmatprep.mubr.bf16.mxu0 0
      %1025 = vmatmul.mubr.bf16.gmra.mrb[0].mxu0 %v987
      %v1026 = vpop.f32.mrb[0].mxu0
      %v1027 = vadd.f32 0.0, %v1026
      %v1028 = vpop.f32.mrb[0].mxu0
      %v1029 = vpop.f32.mrb[0].mxu0
      %v1030 = vadd.f32 0.0, %v1029
      %v1031 = vpop.f32.mrb[0].mxu0
      %1032 = vdwg.mxu0
      %v1035 = vunpack.c.l.b16 %v308
      %v1036 = vunpack.c.l.b16 %v309
      %v1037 = vpack.c.b16 %v1036, %v1035
      %v1040 = vunpack.c.l.b16 %v340
      %v1041 = vunpack.c.l.b16 %v341
      %v1042 = vpack.c.b16 %v1041, %v1040
      %v1044 = vsel %vm358, %v1037, 0
      %v1047 = vsel %vm358, %v1042, 0
      %1049 = vmatprep.subr.bf16.mxu0 0
      %1050 = vmatpush1.bf16.xpose.msra.mxu0 %v1047
      %1051 = vmatprep.subr.bf16.mxu0 0
      %1052 = vmatpush1.bf16.xpose.msra.mxu0 0
      %1053 = vmatprep.subr.bf16.mxu0 0
      %1054 = vmatpush1.bf16.xpose.msra.mxu0 0
      %1055 = vmatprep.subr.bf16.mxu0 0
      %1056 = vmatpush1.bf16.xpose.msra.mxu0 0
      %1057 = vmatprep.subr.bf16.mxu0 0
      %1058 = vmatpush1.bf16.xpose.msra.mxu0 0
      %1059 = vmatprep.subr.bf16.mxu0 0
      %1060 = vmatpush1.bf16.xpose.msra.mxu0 0
      %1061 = vmatprep.subr.bf16.mxu0 0
      %1062 = vmatpush1.bf16.xpose.msra.mxu0 0
      %1063 = vmatprep.subr.bf16.mxu0 0
      %1064 = vmatpush1.bf16.xpose.msra.mxu0 0
      %1065 = vmatprep.subr.bf16.mxu0 0
      %1066 = vmatpush1.bf16.xpose.msra.mxu0 0
      %1067 = vmatprep.subr.bf16.mxu0 0
      %1068 = vmatpush1.bf16.xpose.msra.mxu0 0
      %1069 = vmatprep.subr.bf16.mxu0 0
      %1070 = vmatpush1.bf16.xpose.msra.mxu0 0
      %1071 = vmatprep.subr.bf16.mxu0 0
      %1072 = vmatpush1.bf16.xpose.msra.mxu0 0
      %1073 = vmatprep.subr.bf16.mxu0 0
      %1074 = vmatpush1.bf16.xpose.msra.mxu0 0
      %1075 = vmatprep.subr.bf16.mxu0 0
      %1076 = vmatpush1.bf16.xpose.msra.mxu0 0
      %1077 = vmatprep.subr.bf16.mxu0 0
      %1078 = vmatpush1.bf16.xpose.msra.mxu0 0
      %1079 = vmatprep.subr.bf16.mxu0 0
      %1080 = vmatpush1.bf16.xpose.msra.mxu0 0
      %1081 = vmatprep.mubr.bf16.mxu0 0
      %1082 = vmatmul.mubr.bf16.gmra.mrb[0].mxu0 %v1044
      %v1083 = vpop.f32.mrb[0].mxu0
      %v1084 = vadd.f32 0.0, %v1083
      %v1085 = vpop.f32.mrb[0].mxu0
      %v1086 = vpop.f32.mrb[0].mxu0
      %v1087 = vadd.f32 0.0, %v1086
      %v1088 = vpop.f32.mrb[0].mxu0
      %1089 = vdwg.mxu0
      %v1092 = vunpack.c.l.b16 %v310
      %v1093 = vunpack.c.l.b16 %v311
      %v1094 = vpack.c.b16 %v1093, %v1092
      %v1097 = vunpack.c.l.b16 %v342
      %v1098 = vunpack.c.l.b16 %v343
      %v1099 = vpack.c.b16 %v1098, %v1097
      %v1101 = vsel %vm358, %v1094, 0
      %v1104 = vsel %vm358, %v1099, 0
      %1106 = vmatprep.subr.bf16.mxu0 0
      %1107 = vmatpush1.bf16.xpose.msra.mxu0 %v1104
      %1108 = vmatprep.subr.bf16.mxu0 0
      %1109 = vmatpush1.bf16.xpose.msra.mxu0 0
      %1110 = vmatprep.subr.bf16.mxu0 0
      %1111 = vmatpush1.bf16.xpose.msra.mxu0 0
      %1112 = vmatprep.subr.bf16.mxu0 0
      %1113 = vmatpush1.bf16.xpose.msra.mxu0 0
      %1114 = vmatprep.subr.bf16.mxu0 0
      %1115 = vmatpush1.bf16.xpose.msra.mxu0 0
      %1116 = vmatprep.subr.bf16.mxu0 0
      %1117 = vmatpush1.bf16.xpose.msra.mxu0 0
      %1118 = vmatprep.subr.bf16.mxu0 0
      %1119 = vmatpush1.bf16.xpose.msra.mxu0 0
      %1120 = vmatprep.subr.bf16.mxu0 0
      %1121 = vmatpush1.bf16.xpose.msra.mxu0 0
      %1122 = vmatprep.subr.bf16.mxu0 0
      %1123 = vmatpush1.bf16.xpose.msra.mxu0 0
      %1124 = vmatprep.subr.bf16.mxu0 0
      %1125 = vmatpush1.bf16.xpose.msra.mxu0 0
      %1126 = vmatprep.subr.bf16.mxu0 0
      %1127 = vmatpush1.bf16.xpose.msra.mxu0 0
      %1128 = vmatprep.subr.bf16.mxu0 0
      %1129 = vmatpush1.bf16.xpose.msra.mxu0 0
      %1130 = vmatprep.subr.bf16.mxu0 0
      %1131 = vmatpush1.bf16.xpose.msra.mxu0 0
      %1132 = vmatprep.subr.bf16.mxu0 0
      %1133 = vmatpush1.bf16.xpose.msra.mxu0 0
      %1134 = vmatprep.subr.bf16.mxu0 0
      %1135 = vmatpush1.bf16.xpose.msra.mxu0 0
      %1136 = vmatprep.subr.bf16.mxu0 0
      %1137 = vmatpush1.bf16.xpose.msra.mxu0 0
      %1138 = vmatprep.mubr.bf16.mxu0 0
      %1139 = vmatmul.mubr.bf16.gmra.mrb[0].mxu0 %v1101
      %v1140 = vpop.f32.mrb[0].mxu0
      %v1141 = vadd.f32 0.0, %v1140
      %v1142 = vpop.f32.mrb[0].mxu0
      %v1143 = vpop.f32.mrb[0].mxu0
      %v1144 = vadd.f32 0.0, %v1143
      %v1145 = vpop.f32.mrb[0].mxu0
      %1146 = vdwg.mxu0
      %v1149 = vunpack.c.l.b16 %v312
      %v1150 = vunpack.c.l.b16 %v313
      %v1151 = vpack.c.b16 %v1150, %v1149
      %v1154 = vunpack.c.l.b16 %v344
      %v1155 = vunpack.c.l.b16 %v345
      %v1156 = vpack.c.b16 %v1155, %v1154
      %v1158 = vsel %vm358, %v1151, 0
      %v1161 = vsel %vm358, %v1156, 0
      %1163 = vmatprep.subr.bf16.mxu0 0
      %1164 = vmatpush1.bf16.xpose.msra.mxu0 %v1161
      %1165 = vmatprep.subr.bf16.mxu0 0
      %1166 = vmatpush1.bf16.xpose.msra.mxu0 0
      %1167 = vmatprep.subr.bf16.mxu0 0
      %1168 = vmatpush1.bf16.xpose.msra.mxu0 0
      %1169 = vmatprep.subr.bf16.mxu0 0
      %1170 = vmatpush1.bf16.xpose.msra.mxu0 0
      %1171 = vmatprep.subr.bf16.mxu0 0
      %1172 = vmatpush1.bf16.xpose.msra.mxu0 0
      %1173 = vmatprep.subr.bf16.mxu0 0
      %1174 = vmatpush1.bf16.xpose.msra.mxu0 0
      %1175 = vmatprep.subr.bf16.mxu0 0
      %1176 = vmatpush1.bf16.xpose.msra.mxu0 0
      %1177 = vmatprep.subr.bf16.mxu0 0
      %1178 = vmatpush1.bf16.xpose.msra.mxu0 0
      %1179 = vmatprep.subr.bf16.mxu0 0
      %1180 = vmatpush1.bf16.xpose.msra.mxu0 0
      %1181 = vmatprep.subr.bf16.mxu0 0
      %1182 = vmatpush1.bf16.xpose.msra.mxu0 0
      %1183 = vmatprep.subr.bf16.mxu0 0
      %1184 = vmatpush1.bf16.xpose.msra.mxu0 0
      %1185 = vmatprep.subr.bf16.mxu0 0
      %1186 = vmatpush1.bf16.xpose.msra.mxu0 0
      %1187 = vmatprep.subr.bf16.mxu0 0
      %1188 = vmatpush1.bf16.xpose.msra.mxu0 0
      %1189 = vmatprep.subr.bf16.mxu0 0
      %1190 = vmatpush1.bf16.xpose.msra.mxu0 0
      %1191 = vmatprep.subr.bf16.mxu0 0
      %1192 = vmatpush1.bf16.xpose.msra.mxu0 0
      %1193 = vmatprep.subr.bf16.mxu0 0
      %1194 = vmatpush1.bf16.xpose.msra.mxu0 0
      %1195 = vmatprep.mubr.bf16.mxu0 0
      %1196 = vmatmul.mubr.bf16.gmra.mrb[0].mxu0 %v1158
      %v1197 = vpop.f32.mrb[0].mxu0
      %v1198 = vadd.f32 0.0, %v1197
      %v1199 = vpop.f32.mrb[0].mxu0
      %v1200 = vpop.f32.mrb[0].mxu0
      %v1201 = vadd.f32 0.0, %v1200
      %v1202 = vpop.f32.mrb[0].mxu0
      %1203 = vdwg.mxu0
      %v1206 = vunpack.c.l.b16 %v314
      %v1207 = vunpack.c.l.b16 %v315
      %v1208 = vpack.c.b16 %v1207, %v1206
      %v1211 = vunpack.c.l.b16 %v346
      %v1212 = vunpack.c.l.b16 %v347
      %v1213 = vpack.c.b16 %v1212, %v1211
      %v1215 = vsel %vm358, %v1208, 0
      %v1218 = vsel %vm358, %v1213, 0
      %1220 = vmatprep.subr.bf16.mxu0 0
      %1221 = vmatpush1.bf16.xpose.msra.mxu0 %v1218
      %1222 = vmatprep.subr.bf16.mxu0 0
      %1223 = vmatpush1.bf16.xpose.msra.mxu0 0
      %1224 = vmatprep.subr.bf16.mxu0 0
      %1225 = vmatpush1.bf16.xpose.msra.mxu0 0
      %1226 = vmatprep.subr.bf16.mxu0 0
      %1227 = vmatpush1.bf16.xpose.msra.mxu0 0
      %1228 = vmatprep.subr.bf16.mxu0 0
      %1229 = vmatpush1.bf16.xpose.msra.mxu0 0
      %1230 = vmatprep.subr.bf16.mxu0 0
      %1231 = vmatpush1.bf16.xpose.msra.mxu0 0
      %1232 = vmatprep.subr.bf16.mxu0 0
      %1233 = vmatpush1.bf16.xpose.msra.mxu0 0
      %1234 = vmatprep.subr.bf16.mxu0 0
      %1235 = vmatpush1.bf16.xpose.msra.mxu0 0
      %1236 = vmatprep.subr.bf16.mxu0 0
      %1237 = vmatpush1.bf16.xpose.msra.mxu0 0
      %1238 = vmatprep.subr.bf16.mxu0 0
      %1239 = vmatpush1.bf16.xpose.msra.mxu0 0
      %1240 = vmatprep.subr.bf16.mxu0 0
      %1241 = vmatpush1.bf16.xpose.msra.mxu0 0
      %1242 = vmatprep.subr.bf16.mxu0 0
      %1243 = vmatpush1.bf16.xpose.msra.mxu0 0
      %1244 = vmatprep.subr.bf16.mxu0 0
      %1245 = vmatpush1.bf16.xpose.msra.mxu0 0
      %1246 = vmatprep.subr.bf16.mxu0 0
      %1247 = vmatpush1.bf16.xpose.msra.mxu0 0
      %1248 = vmatprep.subr.bf16.mxu0 0
      %1249 = vmatpush1.bf16.xpose.msra.mxu0 0
      %1250 = vmatprep.subr.bf16.mxu0 0
      %1251 = vmatpush1.bf16.xpose.msra.mxu0 0
      %1252 = vmatprep.mubr.bf16.mxu0 0
      %1253 = vmatmul.mubr.bf16.gmra.mrb[0].mxu0 %v1215
      %v1254 = vpop.f32.mrb[0].mxu0
      %v1255 = vadd.f32 0.0, %v1254
      %v1256 = vpop.f32.mrb[0].mxu0
      %v1257 = vpop.f32.mrb[0].mxu0
      %v1258 = vadd.f32 0.0, %v1257
      %v1259 = vpop.f32.mrb[0].mxu0
      %1260 = vdwg.mxu0
      %v1261 = vld [vmem:[%s3] sm:$0xff]
      %v1262 = vld [vmem:[%s3 + $0x8] sm:$0xff]
      %v1263 = vld [vmem:[%s3 + $0x10] sm:$0xff]
      %v1264 = vld [vmem:[%s3 + $0x18] sm:$0xff]
      %v1265 = vld [vmem:[%s3 + $0x20] sm:$0xff]
      %v1266 = vld [vmem:[%s3 + $0x28] sm:$0xff]
      %v1267 = vld [vmem:[%s3 + $0x30] sm:$0xff]
      %v1268 = vld [vmem:[%s3 + $0x38] sm:$0xff]
      %v1269 = vadd.f32 %v400, %v1261
      %v1270 = vadd.f32 %v403, %v1262
      %v1271 = vadd.f32 %v457, %v1263
      %v1272 = vadd.f32 %v460, %v1264
      %v1273 = vadd.f32 %v514, %v1265
      %v1274 = vadd.f32 %v517, %v1266
      %v1275 = vadd.f32 %v571, %v1267
      %v1276 = vadd.f32 %v574, %v1268
      %v1277 = vadd.f32 %v628, %v1261
      %v1278 = vadd.f32 %v631, %v1262
      %v1279 = vadd.f32 %v685, %v1263
      %v1280 = vadd.f32 %v688, %v1264
      %v1281 = vadd.f32 %v742, %v1265
      %v1282 = vadd.f32 %v745, %v1266
      %v1283 = vadd.f32 %v799, %v1267
      %v1284 = vadd.f32 %v802, %v1268
      %v1285 = vadd.f32 %v856, %v1261
      %v1286 = vadd.f32 %v859, %v1262
      %v1287 = vadd.f32 %v913, %v1263
      %v1288 = vadd.f32 %v916, %v1264
      %v1289 = vadd.f32 %v970, %v1265
      %v1290 = vadd.f32 %v973, %v1266
      %v1291 = vadd.f32 %v1027, %v1267
      %v1292 = vadd.f32 %v1030, %v1268
      %v1293 = vadd.f32 %v1084, %v1261
      %v1294 = vadd.f32 %v1087, %v1262
      %v1295 = vadd.f32 %v1141, %v1263
      %v1296 = vadd.f32 %v1144, %v1264
      %v1297 = vadd.f32 %v1198, %v1265
      %v1298 = vadd.f32 %v1201, %v1266
      %v1299 = vadd.f32 %v1255, %v1267
      %v1300 = vadd.f32 %v1258, %v1268
      %v1301 = vld [vmem:[%s4] sm:$0xff]
      %v1302 = vld [vmem:[%s4 + $0x8] sm:$0xff]
      %v1303 = vld [vmem:[%s4 + $0x10] sm:$0xff]
      %v1304 = vld [vmem:[%s4 + $0x18] sm:$0xff]
      %v1305 = vld [vmem:[%s4 + $0x20] sm:$0xff]
      %v1306 = vld [vmem:[%s4 + $0x28] sm:$0xff]
      %v1307 = vld [vmem:[%s4 + $0x30] sm:$0xff]
      %v1308 = vld [vmem:[%s4 + $0x38] sm:$0xff]
      %v1309 = vadd.f32 %v1269, %v1301
      %v1310 = vadd.f32 %v1270, %v1302
      %v1311 = vadd.f32 %v1271, %v1301
      %v1312 = vadd.f32 %v1272, %v1302
      %v1313 = vadd.f32 %v1273, %v1301
      %v1314 = vadd.f32 %v1274, %v1302
      %v1315 = vadd.f32 %v1275, %v1301
      %v1316 = vadd.f32 %v1276, %v1302
      %v1317 = vadd.f32 %v1277, %v1303
      %v1318 = vadd.f32 %v1278, %v1304
      %v1319 = vadd.f32 %v1279, %v1303
      %v1320 = vadd.f32 %v1280, %v1304
      %v1321 = vadd.f32 %v1281, %v1303
      %v1322 = vadd.f32 %v1282, %v1304
      %v1323 = vadd.f32 %v1283, %v1303
      %v1324 = vadd.f32 %v1284, %v1304
      %v1325 = vadd.f32 %v1285, %v1305
      %v1326 = vadd.f32 %v1286, %v1306
      %v1327 = vadd.f32 %v1287, %v1305
      %v1328 = vadd.f32 %v1288, %v1306
      %v1329 = vadd.f32 %v1289, %v1305
      %v1330 = vadd.f32 %v1290, %v1306
      %v1331 = vadd.f32 %v1291, %v1305
      %v1332 = vadd.f32 %v1292, %v1306
      %v1333 = vadd.f32 %v1293, %v1307
      %v1334 = vadd.f32 %v1294, %v1308
      %v1335 = vadd.f32 %v1295, %v1307
      %v1336 = vadd.f32 %v1296, %v1308
      %v1337 = vadd.f32 %v1297, %v1307
      %v1338 = vadd.f32 %v1298, %v1308
      %v1339 = vadd.f32 %v1299, %v1307
      %v1340 = vadd.f32 %v1300, %v1308
      %vm1341 = vcmask 130048
      %v1342 = vsel %vm1341, %v1309, -inf
      %1343 = vmax.xlane.f32.xlu0 %v1342
      %v1344 = vpop.xlane.xlu0 %1343
      %v1345 = vsel %vm1341, %v1310, -inf
      %1346 = vmax.xlane.f32.xlu0 %v1345
      %v1347 = vpop.xlane.xlu0 %1346
      %v1348 = vsel %vm1341, %v1311, -inf
      %1349 = vmax.xlane.f32.xlu0 %v1348
      %v1350 = vpop.xlane.xlu0 %1349
      %v1351 = vsel %vm1341, %v1312, -inf
      %1352 = vmax.xlane.f32.xlu0 %v1351
      %v1353 = vpop.xlane.xlu0 %1352
      %v1354 = vsel %vm1341, %v1313, -inf
      %1355 = vmax.xlane.f32.xlu0 %v1354
      %v1356 = vpop.xlane.xlu0 %1355
      %v1357 = vsel %vm1341, %v1314, -inf
      %1358 = vmax.xlane.f32.xlu0 %v1357
      %v1359 = vpop.xlane.xlu0 %1358
      %v1360 = vsel %vm1341, %v1315, -inf
      %1361 = vmax.xlane.f32.xlu0 %v1360
      %v1362 = vpop.xlane.xlu0 %1361
      %v1363 = vsel %vm1341, %v1316, -inf
      %1364 = vmax.xlane.f32.xlu0 %v1363
      %v1365 = vpop.xlane.xlu0 %1364
      %v1366 = vsel %vm1341, %v1317, -inf
      %1367 = vmax.xlane.f32.xlu0 %v1366
      %v1368 = vpop.xlane.xlu0 %1367
      %v1369 = vsel %vm1341, %v1318, -inf
      %1370 = vmax.xlane.f32.xlu0 %v1369
      %v1371 = vpop.xlane.xlu0 %1370
      %v1372 = vsel %vm1341, %v1319, -inf
      %1373 = vmax.xlane.f32.xlu0 %v1372
      %v1374 = vpop.xlane.xlu0 %1373
      %v1375 = vsel %vm1341, %v1320, -inf
      %1376 = vmax.xlane.f32.xlu0 %v1375
      %v1377 = vpop.xlane.xlu0 %1376
      %v1378 = vsel %vm1341, %v1321, -inf
      %1379 = vmax.xlane.f32.xlu0 %v1378
      %v1380 = vpop.xlane.xlu0 %1379
      %v1381 = vsel %vm1341, %v1322, -inf
      %1382 = vmax.xlane.f32.xlu0 %v1381
      %v1383 = vpop.xlane.xlu0 %1382
      %v1384 = vsel %vm1341, %v1323, -inf
      %1385 = vmax.xlane.f32.xlu0 %v1384
      %v1386 = vpop.xlane.xlu0 %1385
      %v1387 = vsel %vm1341, %v1324, -inf
      %1388 = vmax.xlane.f32.xlu0 %v1387
      %v1389 = vpop.xlane.xlu0 %1388
      %v1390 = vsel %vm1341, %v1325, -inf
      %1391 = vmax.xlane.f32.xlu0 %v1390
      %v1392 = vpop.xlane.xlu0 %1391
      %v1393 = vsel %vm1341, %v1326, -inf
      %1394 = vmax.xlane.f32.xlu0 %v1393
      %v1395 = vpop.xlane.xlu0 %1394
      %v1396 = vsel %vm1341, %v1327, -inf
      %1397 = vmax.xlane.f32.xlu0 %v1396
      %v1398 = vpop.xlane.xlu0 %1397
      %v1399 = vsel %vm1341, %v1328, -inf
      %1400 = vmax.xlane.f32.xlu0 %v1399
      %v1401 = vpop.xlane.xlu0 %1400
      %v1402 = vsel %vm1341, %v1329, -inf
      %1403 = vmax.xlane.f32.xlu0 %v1402
      %v1404 = vpop.xlane.xlu0 %1403
      %v1405 = vsel %vm1341, %v1330, -inf
      %1406 = vmax.xlane.f32.xlu0 %v1405
      %v1407 = vpop.xlane.xlu0 %1406
      %v1408 = vsel %vm1341, %v1331, -inf
      %1409 = vmax.xlane.f32.xlu0 %v1408
      %v1410 = vpop.xlane.xlu0 %1409
      %v1411 = vsel %vm1341, %v1332, -inf
      %1412 = vmax.xlane.f32.xlu0 %v1411
      %v1413 = vpop.xlane.xlu0 %1412
      %v1414 = vsel %vm1341, %v1333, -inf
      %1415 = vmax.xlane.f32.xlu0 %v1414
      %v1416 = vpop.xlane.xlu0 %1415
      %v1417 = vsel %vm1341, %v1334, -inf
      %1418 = vmax.xlane.f32.xlu0 %v1417
      %v1419 = vpop.xlane.xlu0 %1418
      %v1420 = vsel %vm1341, %v1335, -inf
      %1421 = vmax.xlane.f32.xlu0 %v1420
      %v1422 = vpop.xlane.xlu0 %1421
      %v1423 = vsel %vm1341, %v1336, -inf
      %1424 = vmax.xlane.f32.xlu0 %v1423
      %v1425 = vpop.xlane.xlu0 %1424
      %v1426 = vsel %vm1341, %v1337, -inf
      %1427 = vmax.xlane.f32.xlu0 %v1426
      %v1428 = vpop.xlane.xlu0 %1427
      %v1429 = vsel %vm1341, %v1338, -inf
      %1430 = vmax.xlane.f32.xlu0 %v1429
      %v1431 = vpop.xlane.xlu0 %1430
      %v1432 = vsel %vm1341, %v1339, -inf
      %1433 = vmax.xlane.f32.xlu0 %v1432
      %v1434 = vpop.xlane.xlu0 %1433
      %v1435 = vsel %vm1341, %v1340, -inf
      %1436 = vmax.xlane.f32.xlu0 %v1435
      %v1437 = vpop.xlane.xlu0 %1436
      %v1438 = vsub.f32 %v1309, %v1344
      %v1439 = vsub.f32 %v1310, %v1347
      %v1440 = vsub.f32 %v1311, %v1350
      %v1441 = vsub.f32 %v1312, %v1353
      %v1442 = vsub.f32 %v1313, %v1356
      %v1443 = vsub.f32 %v1314, %v1359
      %v1444 = vsub.f32 %v1315, %v1362
      %v1445 = vsub.f32 %v1316, %v1365
      %v1446 = vsub.f32 %v1317, %v1368
      %v1447 = vsub.f32 %v1318, %v1371
      %v1448 = vsub.f32 %v1319, %v1374
      %v1449 = vsub.f32 %v1320, %v1377
      %v1450 = vsub.f32 %v1321, %v1380
      %v1451 = vsub.f32 %v1322, %v1383
      %v1452 = vsub.f32 %v1323, %v1386
      %v1453 = vsub.f32 %v1324, %v1389
      %v1454 = vsub.f32 %v1325, %v1392
      %v1455 = vsub.f32 %v1326, %v1395
      %v1456 = vsub.f32 %v1327, %v1398
      %v1457 = vsub.f32 %v1328, %v1401
      %v1458 = vsub.f32 %v1329, %v1404
      %v1459 = vsub.f32 %v1330, %v1407
      %v1460 = vsub.f32 %v1331, %v1410
      %v1461 = vsub.f32 %v1332, %v1413
      %v1462 = vsub.f32 %v1333, %v1416
      %v1463 = vsub.f32 %v1334, %v1419
      %v1464 = vsub.f32 %v1335, %v1422
      %v1465 = vsub.f32 %v1336, %v1425
      %v1466 = vsub.f32 %v1337, %v1428
      %v1467 = vsub.f32 %v1338, %v1431
      %v1468 = vsub.f32 %v1339, %v1434
      %v1469 = vsub.f32 %v1340, %v1437
      %v1470 = vmul.f32 %v1438, 1.442695
      %v1471 = vpow.pop %v1470
      %v1472 = vmul.f32 %v1439, 1.442695
      %v1473 = vpow.pop %v1472
      %v1474 = vmul.f32 %v1440, 1.442695
      %v1475 = vpow.pop %v1474
      %v1476 = vmul.f32 %v1441, 1.442695
      %v1477 = vpow.pop %v1476
      %v1478 = vmul.f32 %v1442, 1.442695
      %v1479 = vpow.pop %v1478
      %v1480 = vmul.f32 %v1443, 1.442695
      %v1481 = vpow.pop %v1480
      %v1482 = vmul.f32 %v1444, 1.442695
      %v1483 = vpow.pop %v1482
      %v1484 = vmul.f32 %v1445, 1.442695
      %v1485 = vpow.pop %v1484
      %v1486 = vmul.f32 %v1446, 1.442695
      %v1487 = vpow.pop %v1486
      %v1488 = vmul.f32 %v1447, 1.442695
      %v1489 = vpow.pop %v1488
      %v1490 = vmul.f32 %v1448, 1.442695
      %v1491 = vpow.pop %v1490
      %v1492 = vmul.f32 %v1449, 1.442695
      %v1493 = vpow.pop %v1492
      %v1494 = vmul.f32 %v1450, 1.442695
      %v1495 = vpow.pop %v1494
      %v1496 = vmul.f32 %v1451, 1.442695
      %v1497 = vpow.pop %v1496
      %v1498 = vmul.f32 %v1452, 1.442695
      %v1499 = vpow.pop %v1498
      %v1500 = vmul.f32 %v1453, 1.442695
      %v1501 = vpow.pop %v1500
      %v1502 = vmul.f32 %v1454, 1.442695
      %v1503 = vpow.pop %v1502
      %v1504 = vmul.f32 %v1455, 1.442695
      %v1505 = vpow.pop %v1504
      %v1506 = vmul.f32 %v1456, 1.442695
      %v1507 = vpow.pop %v1506
      %v1508 = vmul.f32 %v1457, 1.442695
      %v1509 = vpow.pop %v1508
      %v1510 = vmul.f32 %v1458, 1.442695
      %v1511 = vpow.pop %v1510
      %v1512 = vmul.f32 %v1459, 1.442695
      %v1513 = vpow.pop %v1512
      %v1514 = vmul.f32 %v1460, 1.442695
      %v1515 = vpow.pop %v1514
      %v1516 = vmul.f32 %v1461, 1.442695
      %v1517 = vpow.pop %v1516
      %v1518 = vmul.f32 %v1462, 1.442695
      %v1519 = vpow.pop %v1518
      %v1520 = vmul.f32 %v1463, 1.442695
      %v1521 = vpow.pop %v1520
      %v1522 = vmul.f32 %v1464, 1.442695
      %v1523 = vpow.pop %v1522
      %v1524 = vmul.f32 %v1465, 1.442695
      %v1525 = vpow.pop %v1524
      %v1526 = vmul.f32 %v1466, 1.442695
      %v1527 = vpow.pop %v1526
      %v1528 = vmul.f32 %v1467, 1.442695
      %v1529 = vpow.pop %v1528
      %v1530 = vmul.f32 %v1468, 1.442695
      %v1531 = vpow.pop %v1530
      %v1532 = vmul.f32 %v1469, 1.442695
      %v1533 = vpow.pop %v1532
      %v1534 = vsel %vm1341, %v1471, 0.0
      %1535 = vadd.xlane.f32.xlu0 %v1534
      %v1536 = vpop.xlane.xlu0 %1535
      %v1537 = vsel %vm1341, %v1473, 0.0
      %1538 = vadd.xlane.f32.xlu0 %v1537
      %v1539 = vpop.xlane.xlu0 %1538
      %v1540 = vsel %vm1341, %v1475, 0.0
      %1541 = vadd.xlane.f32.xlu0 %v1540
      %v1542 = vpop.xlane.xlu0 %1541
      %v1543 = vsel %vm1341, %v1477, 0.0
      %1544 = vadd.xlane.f32.xlu0 %v1543
      %v1545 = vpop.xlane.xlu0 %1544
      %v1546 = vsel %vm1341, %v1479, 0.0
      %1547 = vadd.xlane.f32.xlu0 %v1546
      %v1548 = vpop.xlane.xlu0 %1547
      %v1549 = vsel %vm1341, %v1481, 0.0
      %1550 = vadd.xlane.f32.xlu0 %v1549
      %v1551 = vpop.xlane.xlu0 %1550
      %v1552 = vsel %vm1341, %v1483, 0.0
      %1553 = vadd.xlane.f32.xlu0 %v1552
      %v1554 = vpop.xlane.xlu0 %1553
      %v1555 = vsel %vm1341, %v1485, 0.0
      %1556 = vadd.xlane.f32.xlu0 %v1555
      %v1557 = vpop.xlane.xlu0 %1556
      %v1558 = vsel %vm1341, %v1487, 0.0
      %1559 = vadd.xlane.f32.xlu0 %v1558
      %v1560 = vpop.xlane.xlu0 %1559
      %v1561 = vsel %vm1341, %v1489, 0.0
      %1562 = vadd.xlane.f32.xlu0 %v1561
      %v1563 = vpop.xlane.xlu0 %1562
      %v1564 = vsel %vm1341, %v1491, 0.0
      %1565 = vadd.xlane.f32.xlu0 %v1564
      %v1566 = vpop.xlane.xlu0 %1565
      %v1567 = vsel %vm1341, %v1493, 0.0
      %1568 = vadd.xlane.f32.xlu0 %v1567
      %v1569 = vpop.xlane.xlu0 %1568
      %v1570 = vsel %vm1341, %v1495, 0.0
      %1571 = vadd.xlane.f32.xlu0 %v1570
      %v1572 = vpop.xlane.xlu0 %1571
      %v1573 = vsel %vm1341, %v1497, 0.0
      %1574 = vadd.xlane.f32.xlu0 %v1573
      %v1575 = vpop.xlane.xlu0 %1574
      %v1576 = vsel %vm1341, %v1499, 0.0
      %1577 = vadd.xlane.f32.xlu0 %v1576
      %v1578 = vpop.xlane.xlu0 %1577
      %v1579 = vsel %vm1341, %v1501, 0.0
      %1580 = vadd.xlane.f32.xlu0 %v1579
      %v1581 = vpop.xlane.xlu0 %1580
      %v1582 = vsel %vm1341, %v1503, 0.0
      %1583 = vadd.xlane.f32.xlu0 %v1582
      %v1584 = vpop.xlane.xlu0 %1583
      %v1585 = vsel %vm1341, %v1505, 0.0
      %1586 = vadd.xlane.f32.xlu0 %v1585
      %v1587 = vpop.xlane.xlu0 %1586
      %v1588 = vsel %vm1341, %v1507, 0.0
      %1589 = vadd.xlane.f32.xlu0 %v1588
      %v1590 = vpop.xlane.xlu0 %1589
      %v1591 = vsel %vm1341, %v1509, 0.0
      %1592 = vadd.xlane.f32.xlu0 %v1591
      %v1593 = vpop.xlane.xlu0 %1592
      %v1594 = vsel %vm1341, %v1511, 0.0
      %1595 = vadd.xlane.f32.xlu0 %v1594
      %v1596 = vpop.xlane.xlu0 %1595
      %v1597 = vsel %vm1341, %v1513, 0.0
      %1598 = vadd.xlane.f32.xlu0 %v1597
      %v1599 = vpop.xlane.xlu0 %1598
      %v1600 = vsel %vm1341, %v1515, 0.0
      %1601 = vadd.xlane.f32.xlu0 %v1600
      %v1602 = vpop.xlane.xlu0 %1601
      %v1603 = vsel %vm1341, %v1517, 0.0
      %1604 = vadd.xlane.f32.xlu0 %v1603
      %v1605 = vpop.xlane.xlu0 %1604
      %v1606 = vsel %vm1341, %v1519, 0.0
      %1607 = vadd.xlane.f32.xlu0 %v1606
      %v1608 = vpop.xlane.xlu0 %1607
      %v1609 = vsel %vm1341, %v1521, 0.0
      %1610 = vadd.xlane.f32.xlu0 %v1609
      %v1611 = vpop.xlane.xlu0 %1610
      %v1612 = vsel %vm1341, %v1523, 0.0
      %1613 = vadd.xlane.f32.xlu0 %v1612
      %v1614 = vpop.xlane.xlu0 %1613
      %v1615 = vsel %vm1341, %v1525, 0.0
      %1616 = vadd.xlane.f32.xlu0 %v1615
      %v1617 = vpop.xlane.xlu0 %1616
      %v1618 = vsel %vm1341, %v1527, 0.0
      %1619 = vadd.xlane.f32.xlu0 %v1618
      %v1620 = vpop.xlane.xlu0 %1619
      %v1621 = vsel %vm1341, %v1529, 0.0
      %1622 = vadd.xlane.f32.xlu0 %v1621
      %v1623 = vpop.xlane.xlu0 %1622
      %v1624 = vsel %vm1341, %v1531, 0.0
      %1625 = vadd.xlane.f32.xlu0 %v1624
      %v1626 = vpop.xlane.xlu0 %1625
      %v1627 = vsel %vm1341, %v1533, 0.0
      %1628 = vadd.xlane.f32.xlu0 %v1627
      %v1629 = vpop.xlane.xlu0 %1628
      %v1630 = vrcp.pop %v1536
      %v1631 = vrcp.pop %v1539
      %v1632 = vrcp.pop %v1542
      %v1633 = vrcp.pop %v1545
      %v1634 = vrcp.pop %v1548
      %v1635 = vrcp.pop %v1551
      %v1636 = vrcp.pop %v1554
      %v1637 = vrcp.pop %v1557
      %v1638 = vrcp.pop %v1560
      %v1639 = vrcp.pop %v1563
      %v1640 = vrcp.pop %v1566
      %v1641 = vrcp.pop %v1569
      %v1642 = vrcp.pop %v1572
      %v1643 = vrcp.pop %v1575
      %v1644 = vrcp.pop %v1578
      %v1645 = vrcp.pop %v1581
      %v1646 = vrcp.pop %v1584
      %v1647 = vrcp.pop %v1587
      %v1648 = vrcp.pop %v1590
      %v1649 = vrcp.pop %v1593
      %v1650 = vrcp.pop %v1596
      %v1651 = vrcp.pop %v1599
      %v1652 = vrcp.pop %v1602
      %v1653 = vrcp.pop %v1605
      %v1654 = vrcp.pop %v1608
      %v1655 = vrcp.pop %v1611
      %v1656 = vrcp.pop %v1614
      %v1657 = vrcp.pop %v1617
      %v1658 = vrcp.pop %v1620
      %v1659 = vrcp.pop %v1623
      %v1660 = vrcp.pop %v1626
      %v1661 = vrcp.pop %v1629
      %v1662 = vmul.f32 %v1471, %v1630
      %v1663 = vmul.f32 %v1473, %v1631
      %v1664 = vmul.f32 %v1475, %v1632
      %v1665 = vmul.f32 %v1477, %v1633
      %v1666 = vmul.f32 %v1479, %v1634
      %v1667 = vmul.f32 %v1481, %v1635
      %v1668 = vmul.f32 %v1483, %v1636
      %v1669 = vmul.f32 %v1485, %v1637
      %v1670 = vmul.f32 %v1487, %v1638
      %v1671 = vmul.f32 %v1489, %v1639
      %v1672 = vmul.f32 %v1491, %v1640
      %v1673 = vmul.f32 %v1493, %v1641
      %v1674 = vmul.f32 %v1495, %v1642
      %v1675 = vmul.f32 %v1497, %v1643
      %v1676 = vmul.f32 %v1499, %v1644
      %v1677 = vmul.f32 %v1501, %v1645
      %v1678 = vmul.f32 %v1503, %v1646
      %v1679 = vmul.f32 %v1505, %v1647
      %v1680 = vmul.f32 %v1507, %v1648
      %v1681 = vmul.f32 %v1509, %v1649
      %v1682 = vmul.f32 %v1511, %v1650
      %v1683 = vmul.f32 %v1513, %v1651
      %v1684 = vmul.f32 %v1515, %v1652
      %v1685 = vmul.f32 %v1517, %v1653
      %v1686 = vmul.f32 %v1519, %v1654
      %v1687 = vmul.f32 %v1521, %v1655
      %v1688 = vmul.f32 %v1523, %v1656
      %v1689 = vmul.f32 %v1525, %v1657
      %v1690 = vmul.f32 %v1527, %v1658
      %v1691 = vmul.f32 %v1529, %v1659
      %v1692 = vmul.f32 %v1531, %v1660
      %v1693 = vmul.f32 %v1533, %v1661
      %v1694 = vpack.c.bf16 %v1663, %v1662
      %v1695 = vpack.c.bf16 %v1665, %v1664
      %v1696 = vpack.c.bf16 %v1667, %v1666
      %v1697 = vpack.c.bf16 %v1669, %v1668
      %v1698 = vpack.c.bf16 %v1671, %v1670
      %v1699 = vpack.c.bf16 %v1673, %v1672
      %v1700 = vpack.c.bf16 %v1675, %v1674
      %v1701 = vpack.c.bf16 %v1677, %v1676
      %v1702 = vpack.c.bf16 %v1679, %v1678
      %v1703 = vpack.c.bf16 %v1681, %v1680
      %v1704 = vpack.c.bf16 %v1683, %v1682
      %v1705 = vpack.c.bf16 %v1685, %v1684
      %v1706 = vpack.c.bf16 %v1687, %v1686
      %v1707 = vpack.c.bf16 %v1689, %v1688
      %v1708 = vpack.c.bf16 %v1691, %v1690
      %v1709 = vpack.c.bf16 %v1693, %v1692
      %v1710 = vld [vmem:[%s274] sm:$0xf]
      %v1711 = vld [vmem:[%s274 + $0x4] sm:$0xf]
      %v1712 = vld [vmem:[%s274 + $0x8] sm:$0xf]
      %v1713 = vld [vmem:[%s274 + $0xc] sm:$0xf]
      %v1714 = vld [vmem:[%s274 + $0x10] sm:$0xf]
      %v1715 = vld [vmem:[%s274 + $0x14] sm:$0xf]
      %v1716 = vld [vmem:[%s274 + $0x18] sm:$0xf]
      %v1717 = vld [vmem:[%s274 + $0x1c] sm:$0xf]
      %v1718 = vld [vmem:[%s274 + $0x20] sm:$0xf]
      %v1719 = vld [vmem:[%s274 + $0x24] sm:$0xf]
      %v1720 = vld [vmem:[%s274 + $0x28] sm:$0xf]
      %v1721 = vld [vmem:[%s274 + $0x2c] sm:$0xf]
      %v1722 = vld [vmem:[%s274 + $0x30] sm:$0xf]
      %v1723 = vld [vmem:[%s274 + $0x34] sm:$0xf]
      %v1724 = vld [vmem:[%s274 + $0x38] sm:$0xf]
      %v1725 = vld [vmem:[%s274 + $0x3c] sm:$0xf]
      %v1726 = vld [vmem:[%s274 + $0x40] sm:$0xf]
      %v1727 = vld [vmem:[%s274 + $0x44] sm:$0xf]
      %v1728 = vld [vmem:[%s274 + $0x48] sm:$0xf]
      %v1729 = vld [vmem:[%s274 + $0x4c] sm:$0xf]
      %v1730 = vld [vmem:[%s274 + $0x50] sm:$0xf]
      %v1731 = vld [vmem:[%s274 + $0x54] sm:$0xf]
      %v1732 = vld [vmem:[%s274 + $0x58] sm:$0xf]
      %v1733 = vld [vmem:[%s274 + $0x5c] sm:$0xf]
      %v1734 = vld [vmem:[%s274 + $0x60] sm:$0xf]
      %v1735 = vld [vmem:[%s274 + $0x64] sm:$0xf]
      %v1736 = vld [vmem:[%s274 + $0x68] sm:$0xf]
      %v1737 = vld [vmem:[%s274 + $0x6c] sm:$0xf]
      %v1738 = vld [vmem:[%s274 + $0x70] sm:$0xf]
      %v1739 = vld [vmem:[%s274 + $0x74] sm:$0xf]
      %v1740 = vld [vmem:[%s274 + $0x78] sm:$0xf]
      %v1741 = vld [vmem:[%s274 + $0x7c] sm:$0xf]
      %v1744 = vunpack.c.l.b16 %v1710
      %v1745 = vunpack.c.l.b16 %v1711
      %v1746 = vpack.c.b16 %v1745, %v1744
      %v1749 = vsel %vm1341, %v1694, 0
      %1751 = vmatprep.subr.bf16.mxu0 0
      %1752 = vmatpush1.bf16.msra.mxu0 %v1746
      %1753 = vmatprep.subr.bf16.mxu0 0
      %1754 = vmatpush1.bf16.msra.mxu0 0
      %1755 = vmatprep.subr.bf16.mxu0 0
      %1756 = vmatpush1.bf16.msra.mxu0 0
      %1757 = vmatprep.subr.bf16.mxu0 0
      %1758 = vmatpush1.bf16.msra.mxu0 0
      %1759 = vmatprep.subr.bf16.mxu0 0
      %1760 = vmatpush1.bf16.msra.mxu0 0
      %1761 = vmatprep.subr.bf16.mxu0 0
      %1762 = vmatpush1.bf16.msra.mxu0 0
      %1763 = vmatprep.subr.bf16.mxu0 0
      %1764 = vmatpush1.bf16.msra.mxu0 0
      %1765 = vmatprep.subr.bf16.mxu0 0
      %1766 = vmatpush1.bf16.msra.mxu0 0
      %1767 = vmatprep.subr.bf16.mxu0 0
      %1768 = vmatpush1.bf16.msra.mxu0 0
      %1769 = vmatprep.subr.bf16.mxu0 0
      %1770 = vmatpush1.bf16.msra.mxu0 0
      %1771 = vmatprep.subr.bf16.mxu0 0
      %1772 = vmatpush1.bf16.msra.mxu0 0
      %1773 = vmatprep.subr.bf16.mxu0 0
      %1774 = vmatpush1.bf16.msra.mxu0 0
      %1775 = vmatprep.subr.bf16.mxu0 0
      %1776 = vmatpush1.bf16.msra.mxu0 0
      %1777 = vmatprep.subr.bf16.mxu0 0
      %1778 = vmatpush1.bf16.msra.mxu0 0
      %1779 = vmatprep.subr.bf16.mxu0 0
      %1780 = vmatpush1.bf16.msra.mxu0 0
      %1781 = vmatprep.subr.bf16.mxu0 0
      %1782 = vmatpush1.bf16.msra.mxu0 0
      %1783 = vmatprep.mubr.bf16.mxu0 0
      %1784 = vmatmul.mubr.bf16.gmra.mrb[0].mxu0 %v1749
      %v1785 = vpop.f32.mrb[0].mxu0
      %v1786 = vadd.f32 0.0, %v1785
      %v1787 = vpop.f32.mrb[0].mxu0
      %v1788 = vpop.f32.mrb[0].mxu0
      %v1789 = vadd.f32 0.0, %v1788
      %v1790 = vpop.f32.mrb[0].mxu0
      %1791 = vdwg.mxu0
      %v1794 = vunpack.c.l.b16 %v1712
      %v1795 = vunpack.c.l.b16 %v1713
      %v1796 = vpack.c.b16 %v1795, %v1794
      %v1799 = vsel %vm1341, %v1695, 0
      %1801 = vmatprep.subr.bf16.mxu0 0
      %1802 = vmatpush1.bf16.msra.mxu0 %v1796
      %1803 = vmatprep.subr.bf16.mxu0 0
      %1804 = vmatpush1.bf16.msra.mxu0 0
      %1805 = vmatprep.subr.bf16.mxu0 0
      %1806 = vmatpush1.bf16.msra.mxu0 0
      %1807 = vmatprep.subr.bf16.mxu0 0
      %1808 = vmatpush1.bf16.msra.mxu0 0
      %1809 = vmatprep.subr.bf16.mxu0 0
      %1810 = vmatpush1.bf16.msra.mxu0 0
      %1811 = vmatprep.subr.bf16.mxu0 0
      %1812 = vmatpush1.bf16.msra.mxu0 0
      %1813 = vmatprep.subr.bf16.mxu0 0
      %1814 = vmatpush1.bf16.msra.mxu0 0
      %1815 = vmatprep.subr.bf16.mxu0 0
      %1816 = vmatpush1.bf16.msra.mxu0 0
      %1817 = vmatprep.subr.bf16.mxu0 0
      %1818 = vmatpush1.bf16.msra.mxu0 0
      %1819 = vmatprep.subr.bf16.mxu0 0
      %1820 = vmatpush1.bf16.msra.mxu0 0
      %1821 = vmatprep.subr.bf16.mxu0 0
      %1822 = vmatpush1.bf16.msra.mxu0 0
      %1823 = vmatprep.subr.bf16.mxu0 0
      %1824 = vmatpush1.bf16.msra.mxu0 0
      %1825 = vmatprep.subr.bf16.mxu0 0
      %1826 = vmatpush1.bf16.msra.mxu0 0
      %1827 = vmatprep.subr.bf16.mxu0 0
      %1828 = vmatpush1.bf16.msra.mxu0 0
      %1829 = vmatprep.subr.bf16.mxu0 0
      %1830 = vmatpush1.bf16.msra.mxu0 0
      %1831 = vmatprep.subr.bf16.mxu0 0
      %1832 = vmatpush1.bf16.msra.mxu0 0
      %1833 = vmatprep.mubr.bf16.mxu0 0
      %1834 = vmatmul.mubr.bf16.gmra.mrb[0].mxu0 %v1799
      %v1835 = vpop.f32.mrb[0].mxu0
      %v1836 = vadd.f32 0.0, %v1835
      %v1837 = vpop.f32.mrb[0].mxu0
      %v1838 = vpop.f32.mrb[0].mxu0
      %v1839 = vadd.f32 0.0, %v1838
      %v1840 = vpop.f32.mrb[0].mxu0
      %1841 = vdwg.mxu0
      %v1844 = vunpack.c.l.b16 %v1714
      %v1845 = vunpack.c.l.b16 %v1715
      %v1846 = vpack.c.b16 %v1845, %v1844
      %v1849 = vsel %vm1341, %v1696, 0
      %1851 = vmatprep.subr.bf16.mxu0 0
      %1852 = vmatpush1.bf16.msra.mxu0 %v1846
      %1853 = vmatprep.subr.bf16.mxu0 0
      %1854 = vmatpush1.bf16.msra.mxu0 0
      %1855 = vmatprep.subr.bf16.mxu0 0
      %1856 = vmatpush1.bf16.msra.mxu0 0
      %1857 = vmatprep.subr.bf16.mxu0 0
      %1858 = vmatpush1.bf16.msra.mxu0 0
      %1859 = vmatprep.subr.bf16.mxu0 0
      %1860 = vmatpush1.bf16.msra.mxu0 0
      %1861 = vmatprep.subr.bf16.mxu0 0
      %1862 = vmatpush1.bf16.msra.mxu0 0
      %1863 = vmatprep.subr.bf16.mxu0 0
      %1864 = vmatpush1.bf16.msra.mxu0 0
      %1865 = vmatprep.subr.bf16.mxu0 0
      %1866 = vmatpush1.bf16.msra.mxu0 0
      %1867 = vmatprep.subr.bf16.mxu0 0
      %1868 = vmatpush1.bf16.msra.mxu0 0
      %1869 = vmatprep.subr.bf16.mxu0 0
      %1870 = vmatpush1.bf16.msra.mxu0 0
      %1871 = vmatprep.subr.bf16.mxu0 0
      %1872 = vmatpush1.bf16.msra.mxu0 0
      %1873 = vmatprep.subr.bf16.mxu0 0
      %1874 = vmatpush1.bf16.msra.mxu0 0
      %1875 = vmatprep.subr.bf16.mxu0 0
      %1876 = vmatpush1.bf16.msra.mxu0 0
      %1877 = vmatprep.subr.bf16.mxu0 0
      %1878 = vmatpush1.bf16.msra.mxu0 0
      %1879 = vmatprep.subr.bf16.mxu0 0
      %1880 = vmatpush1.bf16.msra.mxu0 0
      %1881 = vmatprep.subr.bf16.mxu0 0
      %1882 = vmatpush1.bf16.msra.mxu0 0
      %1883 = vmatprep.mubr.bf16.mxu0 0
      %1884 = vmatmul.mubr.bf16.gmra.mrb[0].mxu0 %v1849
      %v1885 = vpop.f32.mrb[0].mxu0
      %v1886 = vadd.f32 0.0, %v1885
      %v1887 = vpop.f32.mrb[0].mxu0
      %v1888 = vpop.f32.mrb[0].mxu0
      %v1889 = vadd.f32 0.0, %v1888
      %v1890 = vpop.f32.mrb[0].mxu0
      %1891 = vdwg.mxu0
      %v1894 = vunpack.c.l.b16 %v1716
      %v1895 = vunpack.c.l.b16 %v1717
      %v1896 = vpack.c.b16 %v1895, %v1894
      %v1899 = vsel %vm1341, %v1697, 0
      %1901 = vmatprep.subr.bf16.mxu0 0
      %1902 = vmatpush1.bf16.msra.mxu0 %v1896
      %1903 = vmatprep.subr.bf16.mxu0 0
      %1904 = vmatpush1.bf16.msra.mxu0 0
      %1905 = vmatprep.subr.bf16.mxu0 0
      %1906 = vmatpush1.bf16.msra.mxu0 0
      %1907 = vmatprep.subr.bf16.mxu0 0
      %1908 = vmatpush1.bf16.msra.mxu0 0
      %1909 = vmatprep.subr.bf16.mxu0 0
      %1910 = vmatpush1.bf16.msra.mxu0 0
      %1911 = vmatprep.subr.bf16.mxu0 0
      %1912 = vmatpush1.bf16.msra.mxu0 0
      %1913 = vmatprep.subr.bf16.mxu0 0
      %1914 = vmatpush1.bf16.msra.mxu0 0
      %1915 = vmatprep.subr.bf16.mxu0 0
      %1916 = vmatpush1.bf16.msra.mxu0 0
      %1917 = vmatprep.subr.bf16.mxu0 0
      %1918 = vmatpush1.bf16.msra.mxu0 0
      %1919 = vmatprep.subr.bf16.mxu0 0
      %1920 = vmatpush1.bf16.msra.mxu0 0
      %1921 = vmatprep.subr.bf16.mxu0 0
      %1922 = vmatpush1.bf16.msra.mxu0 0
      %1923 = vmatprep.subr.bf16.mxu0 0
      %1924 = vmatpush1.bf16.msra.mxu0 0
      %1925 = vmatprep.subr.bf16.mxu0 0
      %1926 = vmatpush1.bf16.msra.mxu0 0
      %1927 = vmatprep.subr.bf16.mxu0 0
      %1928 = vmatpush1.bf16.msra.mxu0 0
      %1929 = vmatprep.subr.bf16.mxu0 0
      %1930 = vmatpush1.bf16.msra.mxu0 0
      %1931 = vmatprep.subr.bf16.mxu0 0
      %1932 = vmatpush1.bf16.msra.mxu0 0
      %1933 = vmatprep.mubr.bf16.mxu0 0
      %1934 = vmatmul.mubr.bf16.gmra.mrb[0].mxu0 %v1899
      %v1935 = vpop.f32.mrb[0].mxu0
      %v1936 = vadd.f32 0.0, %v1935
      %v1937 = vpop.f32.mrb[0].mxu0
      %v1938 = vpop.f32.mrb[0].mxu0
      %v1939 = vadd.f32 0.0, %v1938
      %v1940 = vpop.f32.mrb[0].mxu0
      %1941 = vdwg.mxu0
      %v1944 = vunpack.c.l.b16 %v1718
      %v1945 = vunpack.c.l.b16 %v1719
      %v1946 = vpack.c.b16 %v1945, %v1944
      %v1949 = vsel %vm1341, %v1698, 0
      %1951 = vmatprep.subr.bf16.mxu0 0
      %1952 = vmatpush1.bf16.msra.mxu0 %v1946
      %1953 = vmatprep.subr.bf16.mxu0 0
      %1954 = vmatpush1.bf16.msra.mxu0 0
      %1955 = vmatprep.subr.bf16.mxu0 0
      %1956 = vmatpush1.bf16.msra.mxu0 0
      %1957 = vmatprep.subr.bf16.mxu0 0
      %1958 = vmatpush1.bf16.msra.mxu0 0
      %1959 = vmatprep.subr.bf16.mxu0 0
      %1960 = vmatpush1.bf16.msra.mxu0 0
      %1961 = vmatprep.subr.bf16.mxu0 0
      %1962 = vmatpush1.bf16.msra.mxu0 0
      %1963 = vmatprep.subr.bf16.mxu0 0
      %1964 = vmatpush1.bf16.msra.mxu0 0
      %1965 = vmatprep.subr.bf16.mxu0 0
      %1966 = vmatpush1.bf16.msra.mxu0 0
      %1967 = vmatprep.subr.bf16.mxu0 0
      %1968 = vmatpush1.bf16.msra.mxu0 0
      %1969 = vmatprep.subr.bf16.mxu0 0
      %1970 = vmatpush1.bf16.msra.mxu0 0
      %1971 = vmatprep.subr.bf16.mxu0 0
      %1972 = vmatpush1.bf16.msra.mxu0 0
      %1973 = vmatprep.subr.bf16.mxu0 0
      %1974 = vmatpush1.bf16.msra.mxu0 0
      %1975 = vmatprep.subr.bf16.mxu0 0
      %1976 = vmatpush1.bf16.msra.mxu0 0
      %1977 = vmatprep.subr.bf16.mxu0 0
      %1978 = vmatpush1.bf16.msra.mxu0 0
      %1979 = vmatprep.subr.bf16.mxu0 0
      %1980 = vmatpush1.bf16.msra.mxu0 0
      %1981 = vmatprep.subr.bf16.mxu0 0
      %1982 = vmatpush1.bf16.msra.mxu0 0
      %1983 = vmatprep.mubr.bf16.mxu0 0
      %1984 = vmatmul.mubr.bf16.gmra.mrb[0].mxu0 %v1949
      %v1985 = vpop.f32.mrb[0].mxu0
      %v1986 = vadd.f32 0.0, %v1985
      %v1987 = vpop.f32.mrb[0].mxu0
      %v1988 = vpop.f32.mrb[0].mxu0
      %v1989 = vadd.f32 0.0, %v1988
      %v1990 = vpop.f32.mrb[0].mxu0
      %1991 = vdwg.mxu0
      %v1994 = vunpack.c.l.b16 %v1720
      %v1995 = vunpack.c.l.b16 %v1721
      %v1996 = vpack.c.b16 %v1995, %v1994
      %v1999 = vsel %vm1341, %v1699, 0
      %2001 = vmatprep.subr.bf16.mxu0 0
      %2002 = vmatpush1.bf16.msra.mxu0 %v1996
      %2003 = vmatprep.subr.bf16.mxu0 0
      %2004 = vmatpush1.bf16.msra.mxu0 0
      %2005 = vmatprep.subr.bf16.mxu0 0
      %2006 = vmatpush1.bf16.msra.mxu0 0
      %2007 = vmatprep.subr.bf16.mxu0 0
      %2008 = vmatpush1.bf16.msra.mxu0 0
      %2009 = vmatprep.subr.bf16.mxu0 0
      %2010 = vmatpush1.bf16.msra.mxu0 0
      %2011 = vmatprep.subr.bf16.mxu0 0
      %2012 = vmatpush1.bf16.msra.mxu0 0
      %2013 = vmatprep.subr.bf16.mxu0 0
      %2014 = vmatpush1.bf16.msra.mxu0 0
      %2015 = vmatprep.subr.bf16.mxu0 0
      %2016 = vmatpush1.bf16.msra.mxu0 0
      %2017 = vmatprep.subr.bf16.mxu0 0
      %2018 = vmatpush1.bf16.msra.mxu0 0
      %2019 = vmatprep.subr.bf16.mxu0 0
      %2020 = vmatpush1.bf16.msra.mxu0 0
      %2021 = vmatprep.subr.bf16.mxu0 0
      %2022 = vmatpush1.bf16.msra.mxu0 0
      %2023 = vmatprep.subr.bf16.mxu0 0
      %2024 = vmatpush1.bf16.msra.mxu0 0
      %2025 = vmatprep.subr.bf16.mxu0 0
      %2026 = vmatpush1.bf16.msra.mxu0 0
      %2027 = vmatprep.subr.bf16.mxu0 0
      %2028 = vmatpush1.bf16.msra.mxu0 0
      %2029 = vmatprep.subr.bf16.mxu0 0
      %2030 = vmatpush1.bf16.msra.mxu0 0
      %2031 = vmatprep.subr.bf16.mxu0 0
      %2032 = vmatpush1.bf16.msra.mxu0 0
      %2033 = vmatprep.mubr.bf16.mxu0 0
      %2034 = vmatmul.mubr.bf16.gmra.mrb[0].mxu0 %v1999
      %v2035 = vpop.f32.mrb[0].mxu0
      %v2036 = vadd.f32 0.0, %v2035
      %v2037 = vpop.f32.mrb[0].mxu0
      %v2038 = vpop.f32.mrb[0].mxu0
      %v2039 = vadd.f32 0.0, %v2038
      %v2040 = vpop.f32.mrb[0].mxu0
      %2041 = vdwg.mxu0
      %v2044 = vunpack.c.l.b16 %v1722
      %v2045 = vunpack.c.l.b16 %v1723
      %v2046 = vpack.c.b16 %v2045, %v2044
      %v2049 = vsel %vm1341, %v1700, 0
      %2051 = vmatprep.subr.bf16.mxu0 0
      %2052 = vmatpush1.bf16.msra.mxu0 %v2046
      %2053 = vmatprep.subr.bf16.mxu0 0
      %2054 = vmatpush1.bf16.msra.mxu0 0
      %2055 = vmatprep.subr.bf16.mxu0 0
      %2056 = vmatpush1.bf16.msra.mxu0 0
      %2057 = vmatprep.subr.bf16.mxu0 0
      %2058 = vmatpush1.bf16.msra.mxu0 0
      %2059 = vmatprep.subr.bf16.mxu0 0
      %2060 = vmatpush1.bf16.msra.mxu0 0
      %2061 = vmatprep.subr.bf16.mxu0 0
      %2062 = vmatpush1.bf16.msra.mxu0 0
      %2063 = vmatprep.subr.bf16.mxu0 0
      %2064 = vmatpush1.bf16.msra.mxu0 0
      %2065 = vmatprep.subr.bf16.mxu0 0
      %2066 = vmatpush1.bf16.msra.mxu0 0
      %2067 = vmatprep.subr.bf16.mxu0 0
      %2068 = vmatpush1.bf16.msra.mxu0 0
      %2069 = vmatprep.subr.bf16.mxu0 0
      %2070 = vmatpush1.bf16.msra.mxu0 0
      %2071 = vmatprep.subr.bf16.mxu0 0
      %2072 = vmatpush1.bf16.msra.mxu0 0
      %2073 = vmatprep.subr.bf16.mxu0 0
      %2074 = vmatpush1.bf16.msra.mxu0 0
      %2075 = vmatprep.subr.bf16.mxu0 0
      %2076 = vmatpush1.bf16.msra.mxu0 0
      %2077 = vmatprep.subr.bf16.mxu0 0
      %2078 = vmatpush1.bf16.msra.mxu0 0
      %2079 = vmatprep.subr.bf16.mxu0 0
      %2080 = vmatpush1.bf16.msra.mxu0 0
      %2081 = vmatprep.subr.bf16.mxu0 0
      %2082 = vmatpush1.bf16.msra.mxu0 0
      %2083 = vmatprep.mubr.bf16.mxu0 0
      %2084 = vmatmul.mubr.bf16.gmra.mrb[0].mxu0 %v2049
      %v2085 = vpop.f32.mrb[0].mxu0
      %v2086 = vadd.f32 0.0, %v2085
      %v2087 = vpop.f32.mrb[0].mxu0
      %v2088 = vpop.f32.mrb[0].mxu0
      %v2089 = vadd.f32 0.0, %v2088
      %v2090 = vpop.f32.mrb[0].mxu0
      %2091 = vdwg.mxu0
      %v2094 = vunpack.c.l.b16 %v1724
      %v2095 = vunpack.c.l.b16 %v1725
      %v2096 = vpack.c.b16 %v2095, %v2094
      %v2099 = vsel %vm1341, %v1701, 0
      %2101 = vmatprep.subr.bf16.mxu0 0
      %2102 = vmatpush1.bf16.msra.mxu0 %v2096
      %2103 = vmatprep.subr.bf16.mxu0 0
      %2104 = vmatpush1.bf16.msra.mxu0 0
      %2105 = vmatprep.subr.bf16.mxu0 0
      %2106 = vmatpush1.bf16.msra.mxu0 0
      %2107 = vmatprep.subr.bf16.mxu0 0
      %2108 = vmatpush1.bf16.msra.mxu0 0
      %2109 = vmatprep.subr.bf16.mxu0 0
      %2110 = vmatpush1.bf16.msra.mxu0 0
      %2111 = vmatprep.subr.bf16.mxu0 0
      %2112 = vmatpush1.bf16.msra.mxu0 0
      %2113 = vmatprep.subr.bf16.mxu0 0
      %2114 = vmatpush1.bf16.msra.mxu0 0
      %2115 = vmatprep.subr.bf16.mxu0 0
      %2116 = vmatpush1.bf16.msra.mxu0 0
      %2117 = vmatprep.subr.bf16.mxu0 0
      %2118 = vmatpush1.bf16.msra.mxu0 0
      %2119 = vmatprep.subr.bf16.mxu0 0
      %2120 = vmatpush1.bf16.msra.mxu0 0
      %2121 = vmatprep.subr.bf16.mxu0 0
      %2122 = vmatpush1.bf16.msra.mxu0 0
      %2123 = vmatprep.subr.bf16.mxu0 0
      %2124 = vmatpush1.bf16.msra.mxu0 0
      %2125 = vmatprep.subr.bf16.mxu0 0
      %2126 = vmatpush1.bf16.msra.mxu0 0
      %2127 = vmatprep.subr.bf16.mxu0 0
      %2128 = vmatpush1.bf16.msra.mxu0 0
      %2129 = vmatprep.subr.bf16.mxu0 0
      %2130 = vmatpush1.bf16.msra.mxu0 0
      %2131 = vmatprep.subr.bf16.mxu0 0
      %2132 = vmatpush1.bf16.msra.mxu0 0
      %2133 = vmatprep.mubr.bf16.mxu0 0
      %2134 = vmatmul.mubr.bf16.gmra.mrb[0].mxu0 %v2099
      %v2135 = vpop.f32.mrb[0].mxu0
      %v2136 = vadd.f32 0.0, %v2135
      %v2137 = vpop.f32.mrb[0].mxu0
      %v2138 = vpop.f32.mrb[0].mxu0
      %v2139 = vadd.f32 0.0, %v2138
      %v2140 = vpop.f32.mrb[0].mxu0
      %2141 = vdwg.mxu0
      %v2144 = vunpack.c.l.b16 %v1726
      %v2145 = vunpack.c.l.b16 %v1727
      %v2146 = vpack.c.b16 %v2145, %v2144
      %v2149 = vsel %vm1341, %v1702, 0
      %2151 = vmatprep.subr.bf16.mxu0 0
      %2152 = vmatpush1.bf16.msra.mxu0 %v2146
      %2153 = vmatprep.subr.bf16.mxu0 0
      %2154 = vmatpush1.bf16.msra.mxu0 0
      %2155 = vmatprep.subr.bf16.mxu0 0
      %2156 = vmatpush1.bf16.msra.mxu0 0
      %2157 = vmatprep.subr.bf16.mxu0 0
      %2158 = vmatpush1.bf16.msra.mxu0 0
      %2159 = vmatprep.subr.bf16.mxu0 0
      %2160 = vmatpush1.bf16.msra.mxu0 0
      %2161 = vmatprep.subr.bf16.mxu0 0
      %2162 = vmatpush1.bf16.msra.mxu0 0
      %2163 = vmatprep.subr.bf16.mxu0 0
      %2164 = vmatpush1.bf16.msra.mxu0 0
      %2165 = vmatprep.subr.bf16.mxu0 0
      %2166 = vmatpush1.bf16.msra.mxu0 0
      %2167 = vmatprep.subr.bf16.mxu0 0
      %2168 = vmatpush1.bf16.msra.mxu0 0
      %2169 = vmatprep.subr.bf16.mxu0 0
      %2170 = vmatpush1.bf16.msra.mxu0 0
      %2171 = vmatprep.subr.bf16.mxu0 0
      %2172 = vmatpush1.bf16.msra.mxu0 0
      %2173 = vmatprep.subr.bf16.mxu0 0
      %2174 = vmatpush1.bf16.msra.mxu0 0
      %2175 = vmatprep.subr.bf16.mxu0 0
      %2176 = vmatpush1.bf16.msra.mxu0 0
      %2177 = vmatprep.subr.bf16.mxu0 0
      %2178 = vmatpush1.bf16.msra.mxu0 0
      %2179 = vmatprep.subr.bf16.mxu0 0
      %2180 = vmatpush1.bf16.msra.mxu0 0
      %2181 = vmatprep.subr.bf16.mxu0 0
      %2182 = vmatpush1.bf16.msra.mxu0 0
      %2183 = vmatprep.mubr.bf16.mxu0 0
      %2184 = vmatmul.mubr.bf16.gmra.mrb[0].mxu0 %v2149
      %v2185 = vpop.f32.mrb[0].mxu0
      %v2186 = vadd.f32 0.0, %v2185
      %v2187 = vpop.f32.mrb[0].mxu0
      %v2188 = vpop.f32.mrb[0].mxu0
      %v2189 = vadd.f32 0.0, %v2188
      %v2190 = vpop.f32.mrb[0].mxu0
      %2191 = vdwg.mxu0
      %v2194 = vunpack.c.l.b16 %v1728
      %v2195 = vunpack.c.l.b16 %v1729
      %v2196 = vpack.c.b16 %v2195, %v2194
      %v2199 = vsel %vm1341, %v1703, 0
      %2201 = vmatprep.subr.bf16.mxu0 0
      %2202 = vmatpush1.bf16.msra.mxu0 %v2196
      %2203 = vmatprep.subr.bf16.mxu0 0
      %2204 = vmatpush1.bf16.msra.mxu0 0
      %2205 = vmatprep.subr.bf16.mxu0 0
      %2206 = vmatpush1.bf16.msra.mxu0 0
      %2207 = vmatprep.subr.bf16.mxu0 0
      %2208 = vmatpush1.bf16.msra.mxu0 0
      %2209 = vmatprep.subr.bf16.mxu0 0
      %2210 = vmatpush1.bf16.msra.mxu0 0
      %2211 = vmatprep.subr.bf16.mxu0 0
      %2212 = vmatpush1.bf16.msra.mxu0 0
      %2213 = vmatprep.subr.bf16.mxu0 0
      %2214 = vmatpush1.bf16.msra.mxu0 0
      %2215 = vmatprep.subr.bf16.mxu0 0
      %2216 = vmatpush1.bf16.msra.mxu0 0
      %2217 = vmatprep.subr.bf16.mxu0 0
      %2218 = vmatpush1.bf16.msra.mxu0 0
      %2219 = vmatprep.subr.bf16.mxu0 0
      %2220 = vmatpush1.bf16.msra.mxu0 0
      %2221 = vmatprep.subr.bf16.mxu0 0
      %2222 = vmatpush1.bf16.msra.mxu0 0
      %2223 = vmatprep.subr.bf16.mxu0 0
      %2224 = vmatpush1.bf16.msra.mxu0 0
      %2225 = vmatprep.subr.bf16.mxu0 0
      %2226 = vmatpush1.bf16.msra.mxu0 0
      %2227 = vmatprep.subr.bf16.mxu0 0
      %2228 = vmatpush1.bf16.msra.mxu0 0
      %2229 = vmatprep.subr.bf16.mxu0 0
      %2230 = vmatpush1.bf16.msra.mxu0 0
      %2231 = vmatprep.subr.bf16.mxu0 0
      %2232 = vmatpush1.bf16.msra.mxu0 0
      %2233 = vmatprep.mubr.bf16.mxu0 0
      %2234 = vmatmul.mubr.bf16.gmra.mrb[0].mxu0 %v2199
      %v2235 = vpop.f32.mrb[0].mxu0
      %v2236 = vadd.f32 0.0, %v2235
      %v2237 = vpop.f32.mrb[0].mxu0
      %v2238 = vpop.f32.mrb[0].mxu0
      %v2239 = vadd.f32 0.0, %v2238
      %v2240 = vpop.f32.mrb[0].mxu0
      %2241 = vdwg.mxu0
      %v2244 = vunpack.c.l.b16 %v1730
      %v2245 = vunpack.c.l.b16 %v1731
      %v2246 = vpack.c.b16 %v2245, %v2244
      %v2249 = vsel %vm1341, %v1704, 0
      %2251 = vmatprep.subr.bf16.mxu0 0
      %2252 = vmatpush1.bf16.msra.mxu0 %v2246
      %2253 = vmatprep.subr.bf16.mxu0 0
      %2254 = vmatpush1.bf16.msra.mxu0 0
      %2255 = vmatprep.subr.bf16.mxu0 0
      %2256 = vmatpush1.bf16.msra.mxu0 0
      %2257 = vmatprep.subr.bf16.mxu0 0
      %2258 = vmatpush1.bf16.msra.mxu0 0
      %2259 = vmatprep.subr.bf16.mxu0 0
      %2260 = vmatpush1.bf16.msra.mxu0 0
      %2261 = vmatprep.subr.bf16.mxu0 0
      %2262 = vmatpush1.bf16.msra.mxu0 0
      %2263 = vmatprep.subr.bf16.mxu0 0
      %2264 = vmatpush1.bf16.msra.mxu0 0
      %2265 = vmatprep.subr.bf16.mxu0 0
      %2266 = vmatpush1.bf16.msra.mxu0 0
      %2267 = vmatprep.subr.bf16.mxu0 0
      %2268 = vmatpush1.bf16.msra.mxu0 0
      %2269 = vmatprep.subr.bf16.mxu0 0
      %2270 = vmatpush1.bf16.msra.mxu0 0
      %2271 = vmatprep.subr.bf16.mxu0 0
      %2272 = vmatpush1.bf16.msra.mxu0 0
      %2273 = vmatprep.subr.bf16.mxu0 0
      %2274 = vmatpush1.bf16.msra.mxu0 0
      %2275 = vmatprep.subr.bf16.mxu0 0
      %2276 = vmatpush1.bf16.msra.mxu0 0
      %2277 = vmatprep.subr.bf16.mxu0 0
      %2278 = vmatpush1.bf16.msra.mxu0 0
      %2279 = vmatprep.subr.bf16.mxu0 0
      %2280 = vmatpush1.bf16.msra.mxu0 0
      %2281 = vmatprep.subr.bf16.mxu0 0
      %2282 = vmatpush1.bf16.msra.mxu0 0
      %2283 = vmatprep.mubr.bf16.mxu0 0
      %2284 = vmatmul.mubr.bf16.gmra.mrb[0].mxu0 %v2249
      %v2285 = vpop.f32.mrb[0].mxu0
      %v2286 = vadd.f32 0.0, %v2285
      %v2287 = vpop.f32.mrb[0].mxu0
      %v2288 = vpop.f32.mrb[0].mxu0
      %v2289 = vadd.f32 0.0, %v2288
      %v2290 = vpop.f32.mrb[0].mxu0
      %2291 = vdwg.mxu0
      %v2294 = vunpack.c.l.b16 %v1732
      %v2295 = vunpack.c.l.b16 %v1733
      %v2296 = vpack.c.b16 %v2295, %v2294
      %v2299 = vsel %vm1341, %v1705, 0
      %2301 = vmatprep.subr.bf16.mxu0 0
      %2302 = vmatpush1.bf16.msra.mxu0 %v2296
      %2303 = vmatprep.subr.bf16.mxu0 0
      %2304 = vmatpush1.bf16.msra.mxu0 0
      %2305 = vmatprep.subr.bf16.mxu0 0
      %2306 = vmatpush1.bf16.msra.mxu0 0
      %2307 = vmatprep.subr.bf16.mxu0 0
      %2308 = vmatpush1.bf16.msra.mxu0 0
      %2309 = vmatprep.subr.bf16.mxu0 0
      %2310 = vmatpush1.bf16.msra.mxu0 0
      %2311 = vmatprep.subr.bf16.mxu0 0
      %2312 = vmatpush1.bf16.msra.mxu0 0
      %2313 = vmatprep.subr.bf16.mxu0 0
      %2314 = vmatpush1.bf16.msra.mxu0 0
      %2315 = vmatprep.subr.bf16.mxu0 0
      %2316 = vmatpush1.bf16.msra.mxu0 0
      %2317 = vmatprep.subr.bf16.mxu0 0
      %2318 = vmatpush1.bf16.msra.mxu0 0
      %2319 = vmatprep.subr.bf16.mxu0 0
      %2320 = vmatpush1.bf16.msra.mxu0 0
      %2321 = vmatprep.subr.bf16.mxu0 0
      %2322 = vmatpush1.bf16.msra.mxu0 0
      %2323 = vmatprep.subr.bf16.mxu0 0
      %2324 = vmatpush1.bf16.msra.mxu0 0
      %2325 = vmatprep.subr.bf16.mxu0 0
      %2326 = vmatpush1.bf16.msra.mxu0 0
      %2327 = vmatprep.subr.bf16.mxu0 0
      %2328 = vmatpush1.bf16.msra.mxu0 0
      %2329 = vmatprep.subr.bf16.mxu0 0
      %2330 = vmatpush1.bf16.msra.mxu0 0
      %2331 = vmatprep.subr.bf16.mxu0 0
      %2332 = vmatpush1.bf16.msra.mxu0 0
      %2333 = vmatprep.mubr.bf16.mxu0 0
      %2334 = vmatmul.mubr.bf16.gmra.mrb[0].mxu0 %v2299
      %v2335 = vpop.f32.mrb[0].mxu0
      %v2336 = vadd.f32 0.0, %v2335
      %v2337 = vpop.f32.mrb[0].mxu0
      %v2338 = vpop.f32.mrb[0].mxu0
      %v2339 = vadd.f32 0.0, %v2338
      %v2340 = vpop.f32.mrb[0].mxu0
      %2341 = vdwg.mxu0
      %v2344 = vunpack.c.l.b16 %v1734
      %v2345 = vunpack.c.l.b16 %v1735
      %v2346 = vpack.c.b16 %v2345, %v2344
      %v2349 = vsel %vm1341, %v1706, 0
      %2351 = vmatprep.subr.bf16.mxu0 0
      %2352 = vmatpush1.bf16.msra.mxu0 %v2346
      %2353 = vmatprep.subr.bf16.mxu0 0
      %2354 = vmatpush1.bf16.msra.mxu0 0
      %2355 = vmatprep.subr.bf16.mxu0 0
      %2356 = vmatpush1.bf16.msra.mxu0 0
      %2357 = vmatprep.subr.bf16.mxu0 0
      %2358 = vmatpush1.bf16.msra.mxu0 0
      %2359 = vmatprep.subr.bf16.mxu0 0
      %2360 = vmatpush1.bf16.msra.mxu0 0
      %2361 = vmatprep.subr.bf16.mxu0 0
      %2362 = vmatpush1.bf16.msra.mxu0 0
      %2363 = vmatprep.subr.bf16.mxu0 0
      %2364 = vmatpush1.bf16.msra.mxu0 0
      %2365 = vmatprep.subr.bf16.mxu0 0
      %2366 = vmatpush1.bf16.msra.mxu0 0
      %2367 = vmatprep.subr.bf16.mxu0 0
      %2368 = vmatpush1.bf16.msra.mxu0 0
      %2369 = vmatprep.subr.bf16.mxu0 0
      %2370 = vmatpush1.bf16.msra.mxu0 0
      %2371 = vmatprep.subr.bf16.mxu0 0
      %2372 = vmatpush1.bf16.msra.mxu0 0
      %2373 = vmatprep.subr.bf16.mxu0 0
      %2374 = vmatpush1.bf16.msra.mxu0 0
      %2375 = vmatprep.subr.bf16.mxu0 0
      %2376 = vmatpush1.bf16.msra.mxu0 0
      %2377 = vmatprep.subr.bf16.mxu0 0
      %2378 = vmatpush1.bf16.msra.mxu0 0
      %2379 = vmatprep.subr.bf16.mxu0 0
      %2380 = vmatpush1.bf16.msra.mxu0 0
      %2381 = vmatprep.subr.bf16.mxu0 0
      %2382 = vmatpush1.bf16.msra.mxu0 0
      %2383 = vmatprep.mubr.bf16.mxu0 0
      %2384 = vmatmul.mubr.bf16.gmra.mrb[0].mxu0 %v2349
      %v2385 = vpop.f32.mrb[0].mxu0
      %v2386 = vadd.f32 0.0, %v2385
      %v2387 = vpop.f32.mrb[0].mxu0
      %v2388 = vpop.f32.mrb[0].mxu0
      %v2389 = vadd.f32 0.0, %v2388
      %v2390 = vpop.f32.mrb[0].mxu0
      %2391 = vdwg.mxu0
      %v2394 = vunpack.c.l.b16 %v1736
      %v2395 = vunpack.c.l.b16 %v1737
      %v2396 = vpack.c.b16 %v2395, %v2394
      %v2399 = vsel %vm1341, %v1707, 0
      %2401 = vmatprep.subr.bf16.mxu0 0
      %2402 = vmatpush1.bf16.msra.mxu0 %v2396
      %2403 = vmatprep.subr.bf16.mxu0 0
      %2404 = vmatpush1.bf16.msra.mxu0 0
      %2405 = vmatprep.subr.bf16.mxu0 0
      %2406 = vmatpush1.bf16.msra.mxu0 0
      %2407 = vmatprep.subr.bf16.mxu0 0
      %2408 = vmatpush1.bf16.msra.mxu0 0
      %2409 = vmatprep.subr.bf16.mxu0 0
      %2410 = vmatpush1.bf16.msra.mxu0 0
      %2411 = vmatprep.subr.bf16.mxu0 0
      %2412 = vmatpush1.bf16.msra.mxu0 0
      %2413 = vmatprep.subr.bf16.mxu0 0
      %2414 = vmatpush1.bf16.msra.mxu0 0
      %2415 = vmatprep.subr.bf16.mxu0 0
      %2416 = vmatpush1.bf16.msra.mxu0 0
      %2417 = vmatprep.subr.bf16.mxu0 0
      %2418 = vmatpush1.bf16.msra.mxu0 0
      %2419 = vmatprep.subr.bf16.mxu0 0
      %2420 = vmatpush1.bf16.msra.mxu0 0
      %2421 = vmatprep.subr.bf16.mxu0 0
      %2422 = vmatpush1.bf16.msra.mxu0 0
      %2423 = vmatprep.subr.bf16.mxu0 0
      %2424 = vmatpush1.bf16.msra.mxu0 0
      %2425 = vmatprep.subr.bf16.mxu0 0
      %2426 = vmatpush1.bf16.msra.mxu0 0
      %2427 = vmatprep.subr.bf16.mxu0 0
      %2428 = vmatpush1.bf16.msra.mxu0 0
      %2429 = vmatprep.subr.bf16.mxu0 0
      %2430 = vmatpush1.bf16.msra.mxu0 0
      %2431 = vmatprep.subr.bf16.mxu0 0
      %2432 = vmatpush1.bf16.msra.mxu0 0
      %2433 = vmatprep.mubr.bf16.mxu0 0
      %2434 = vmatmul.mubr.bf16.gmra.mrb[0].mxu0 %v2399
      %v2435 = vpop.f32.mrb[0].mxu0
      %v2436 = vadd.f32 0.0, %v2435
      %v2437 = vpop.f32.mrb[0].mxu0
      %v2438 = vpop.f32.mrb[0].mxu0
      %v2439 = vadd.f32 0.0, %v2438
      %v2440 = vpop.f32.mrb[0].mxu0
      %2441 = vdwg.mxu0
      %v2444 = vunpack.c.l.b16 %v1738
      %v2445 = vunpack.c.l.b16 %v1739
      %v2446 = vpack.c.b16 %v2445, %v2444
      %v2449 = vsel %vm1341, %v1708, 0
      %2451 = vmatprep.subr.bf16.mxu0 0
      %2452 = vmatpush1.bf16.msra.mxu0 %v2446
      %2453 = vmatprep.subr.bf16.mxu0 0
      %2454 = vmatpush1.bf16.msra.mxu0 0
      %2455 = vmatprep.subr.bf16.mxu0 0
      %2456 = vmatpush1.bf16.msra.mxu0 0
      %2457 = vmatprep.subr.bf16.mxu0 0
      %2458 = vmatpush1.bf16.msra.mxu0 0
      %2459 = vmatprep.subr.bf16.mxu0 0
      %2460 = vmatpush1.bf16.msra.mxu0 0
      %2461 = vmatprep.subr.bf16.mxu0 0
      %2462 = vmatpush1.bf16.msra.mxu0 0
      %2463 = vmatprep.subr.bf16.mxu0 0
      %2464 = vmatpush1.bf16.msra.mxu0 0
      %2465 = vmatprep.subr.bf16.mxu0 0
      %2466 = vmatpush1.bf16.msra.mxu0 0
      %2467 = vmatprep.subr.bf16.mxu0 0
      %2468 = vmatpush1.bf16.msra.mxu0 0
      %2469 = vmatprep.subr.bf16.mxu0 0
      %2470 = vmatpush1.bf16.msra.mxu0 0
      %2471 = vmatprep.subr.bf16.mxu0 0
      %2472 = vmatpush1.bf16.msra.mxu0 0
      %2473 = vmatprep.subr.bf16.mxu0 0
      %2474 = vmatpush1.bf16.msra.mxu0 0
      %2475 = vmatprep.subr.bf16.mxu0 0
      %2476 = vmatpush1.bf16.msra.mxu0 0
      %2477 = vmatprep.subr.bf16.mxu0 0
      %2478 = vmatpush1.bf16.msra.mxu0 0
      %2479 = vmatprep.subr.bf16.mxu0 0
      %2480 = vmatpush1.bf16.msra.mxu0 0
      %2481 = vmatprep.subr.bf16.mxu0 0
      %2482 = vmatpush1.bf16.msra.mxu0 0
      %2483 = vmatprep.mubr.bf16.mxu0 0
      %2484 = vmatmul.mubr.bf16.gmra.mrb[0].mxu0 %v2449
      %v2485 = vpop.f32.mrb[0].mxu0
      %v2486 = vadd.f32 0.0, %v2485
      %v2487 = vpop.f32.mrb[0].mxu0
      %v2488 = vpop.f32.mrb[0].mxu0
      %v2489 = vadd.f32 0.0, %v2488
      %v2490 = vpop.f32.mrb[0].mxu0
      %2491 = vdwg.mxu0
      %v2494 = vunpack.c.l.b16 %v1740
      %v2495 = vunpack.c.l.b16 %v1741
      %v2496 = vpack.c.b16 %v2495, %v2494
      %v2499 = vsel %vm1341, %v1709, 0
      %2501 = vmatprep.subr.bf16.mxu0 0
      %2502 = vmatpush1.bf16.msra.mxu0 %v2496
      %2503 = vmatprep.subr.bf16.mxu0 0
      %2504 = vmatpush1.bf16.msra.mxu0 0
      %2505 = vmatprep.subr.bf16.mxu0 0
      %2506 = vmatpush1.bf16.msra.mxu0 0
      %2507 = vmatprep.subr.bf16.mxu0 0
      %2508 = vmatpush1.bf16.msra.mxu0 0
      %2509 = vmatprep.subr.bf16.mxu0 0
      %2510 = vmatpush1.bf16.msra.mxu0 0
      %2511 = vmatprep.subr.bf16.mxu0 0
      %2512 = vmatpush1.bf16.msra.mxu0 0
      %2513 = vmatprep.subr.bf16.mxu0 0
      %2514 = vmatpush1.bf16.msra.mxu0 0
      %2515 = vmatprep.subr.bf16.mxu0 0
      %2516 = vmatpush1.bf16.msra.mxu0 0
      %2517 = vmatprep.subr.bf16.mxu0 0
      %2518 = vmatpush1.bf16.msra.mxu0 0
      %2519 = vmatprep.subr.bf16.mxu0 0
      %2520 = vmatpush1.bf16.msra.mxu0 0
      %2521 = vmatprep.subr.bf16.mxu0 0
      %2522 = vmatpush1.bf16.msra.mxu0 0
      %2523 = vmatprep.subr.bf16.mxu0 0
      %2524 = vmatpush1.bf16.msra.mxu0 0
      %2525 = vmatprep.subr.bf16.mxu0 0
      %2526 = vmatpush1.bf16.msra.mxu0 0
      %2527 = vmatprep.subr.bf16.mxu0 0
      %2528 = vmatpush1.bf16.msra.mxu0 0
      %2529 = vmatprep.subr.bf16.mxu0 0
      %2530 = vmatpush1.bf16.msra.mxu0 0
      %2531 = vmatprep.subr.bf16.mxu0 0
      %2532 = vmatpush1.bf16.msra.mxu0 0
      %2533 = vmatprep.mubr.bf16.mxu0 0
      %2534 = vmatmul.mubr.bf16.gmra.mrb[0].mxu0 %v2499
      %v2535 = vpop.f32.mrb[0].mxu0
      %v2536 = vadd.f32 0.0, %v2535
      %v2537 = vpop.f32.mrb[0].mxu0
      %v2538 = vpop.f32.mrb[0].mxu0
      %v2539 = vadd.f32 0.0, %v2538
      %v2540 = vpop.f32.mrb[0].mxu0
      %2541 = vdwg.mxu0
      %v2542 = vpack.c.bf16 %v1789, %v1786
      %v2543 = vpack.c.bf16 %v1839, %v1836
      %v2544 = vpack.c.bf16 %v1889, %v1886
      %v2545 = vpack.c.bf16 %v1939, %v1936
      %v2546 = vpack.c.bf16 %v1989, %v1986
      %v2547 = vpack.c.bf16 %v2039, %v2036
      %v2548 = vpack.c.bf16 %v2089, %v2086
      %v2549 = vpack.c.bf16 %v2139, %v2136
      %v2550 = vpack.c.bf16 %v2189, %v2186
      %v2551 = vpack.c.bf16 %v2239, %v2236
      %v2552 = vpack.c.bf16 %v2289, %v2286
      %v2553 = vpack.c.bf16 %v2339, %v2336
      %v2554 = vpack.c.bf16 %v2389, %v2386
      %v2555 = vpack.c.bf16 %v2439, %v2436
      %v2556 = vpack.c.bf16 %v2489, %v2486
      %v2557 = vpack.c.bf16 %v2539, %v2536
      %v2574 = vunpack.c.l.b16 %v2542
      %v2575 = vunpack.c.h.b16 %v2542
      %v2576 = vunpack.c.l.b16 %v2543
      %v2577 = vunpack.c.h.b16 %v2543
      %v2578 = vunpack.c.l.b16 %v2544
      %v2579 = vunpack.c.h.b16 %v2544
      %v2580 = vunpack.c.l.b16 %v2545
      %v2581 = vunpack.c.h.b16 %v2545
      %v2582 = vunpack.c.l.b16 %v2546
      %v2583 = vunpack.c.h.b16 %v2546
      %v2584 = vunpack.c.l.b16 %v2547
      %v2585 = vunpack.c.h.b16 %v2547
      %v2586 = vunpack.c.l.b16 %v2548
      %v2587 = vunpack.c.h.b16 %v2548
      %v2588 = vunpack.c.l.b16 %v2549
      %v2589 = vunpack.c.h.b16 %v2549
      %v2590 = vunpack.c.l.b16 %v2550
      %v2591 = vunpack.c.h.b16 %v2550
      %v2592 = vunpack.c.l.b16 %v2551
      %v2593 = vunpack.c.h.b16 %v2551
      %v2594 = vunpack.c.l.b16 %v2552
      %v2595 = vunpack.c.h.b16 %v2552
      %v2596 = vunpack.c.l.b16 %v2553
      %v2597 = vunpack.c.h.b16 %v2553
      %v2598 = vunpack.c.l.b16 %v2554
      %v2599 = vunpack.c.h.b16 %v2554
      %v2600 = vunpack.c.l.b16 %v2555
      %v2601 = vunpack.c.h.b16 %v2555
      %v2602 = vunpack.c.l.b16 %v2556
      %v2603 = vunpack.c.h.b16 %v2556
      %v2604 = vunpack.c.l.b16 %v2557
      %v2605 = vunpack.c.h.b16 %v2557
      %v2606 = vpack.c.b16 %v2574, %v2574
      %v2607 = vpack.c.b16 %v2575, %v2575
      %v2608 = vpack.c.b16 %v2576, %v2576
      %v2609 = vpack.c.b16 %v2577, %v2577
      %v2610 = vpack.c.b16 %v2578, %v2578
      %v2611 = vpack.c.b16 %v2579, %v2579
      %v2612 = vpack.c.b16 %v2580, %v2580
      %v2613 = vpack.c.b16 %v2581, %v2581
      %v2614 = vpack.c.b16 %v2582, %v2582
      %v2615 = vpack.c.b16 %v2583, %v2583
      %v2616 = vpack.c.b16 %v2584, %v2584
      %v2617 = vpack.c.b16 %v2585, %v2585
      %v2618 = vpack.c.b16 %v2586, %v2586
      %v2619 = vpack.c.b16 %v2587, %v2587
      %v2620 = vpack.c.b16 %v2588, %v2588
      %v2621 = vpack.c.b16 %v2589, %v2589
      %v2622 = vpack.c.b16 %v2590, %v2590
      %v2623 = vpack.c.b16 %v2591, %v2591
      %v2624 = vpack.c.b16 %v2592, %v2592
      %v2625 = vpack.c.b16 %v2593, %v2593
      %v2626 = vpack.c.b16 %v2594, %v2594
      %v2627 = vpack.c.b16 %v2595, %v2595
      %v2628 = vpack.c.b16 %v2596, %v2596
      %v2629 = vpack.c.b16 %v2597, %v2597
      %v2630 = vpack.c.b16 %v2598, %v2598
      %v2631 = vpack.c.b16 %v2599, %v2599
      %v2632 = vpack.c.b16 %v2600, %v2600
      %v2633 = vpack.c.b16 %v2601, %v2601
      %v2634 = vpack.c.b16 %v2602, %v2602
      %v2635 = vpack.c.b16 %v2603, %v2603
      %v2636 = vpack.c.b16 %v2604, %v2604
      %v2637 = vpack.c.b16 %v2605, %v2605
      %vm2670 = vcmask 257024
      %2671 = vst.msk [vmem:[%s281] sm:$0xf] %vm2670, %v2606
      %2672 = vst.msk [vmem:[%s281 + $0x4] sm:$0xf] %vm2670, %v2607
      %2673 = vst.msk [vmem:[%s281 + $0x8] sm:$0xf] %vm2670, %v2608
      %2674 = vst.msk [vmem:[%s281 + $0xc] sm:$0xf] %vm2670, %v2609
      %2675 = vst.msk [vmem:[%s281 + $0x10] sm:$0xf] %vm2670, %v2610
      %2676 = vst.msk [vmem:[%s281 + $0x14] sm:$0xf] %vm2670, %v2611
      %2677 = vst.msk [vmem:[%s281 + $0x18] sm:$0xf] %vm2670, %v2612
      %2678 = vst.msk [vmem:[%s281 + $0x1c] sm:$0xf] %vm2670, %v2613
      %2679 = vst.msk [vmem:[%s281 + $0x20] sm:$0xf] %vm2670, %v2614
      %2680 = vst.msk [vmem:[%s281 + $0x24] sm:$0xf] %vm2670, %v2615
      %2681 = vst.msk [vmem:[%s281 + $0x28] sm:$0xf] %vm2670, %v2616
      %2682 = vst.msk [vmem:[%s281 + $0x2c] sm:$0xf] %vm2670, %v2617
      %2683 = vst.msk [vmem:[%s281 + $0x30] sm:$0xf] %vm2670, %v2618
      %2684 = vst.msk [vmem:[%s281 + $0x34] sm:$0xf] %vm2670, %v2619
      %2685 = vst.msk [vmem:[%s281 + $0x38] sm:$0xf] %vm2670, %v2620
      %2686 = vst.msk [vmem:[%s281 + $0x3c] sm:$0xf] %vm2670, %v2621
      %2687 = vst.msk [vmem:[%s281 + $0x40] sm:$0xf] %vm2670, %v2622
      %2688 = vst.msk [vmem:[%s281 + $0x44] sm:$0xf] %vm2670, %v2623
      %2689 = vst.msk [vmem:[%s281 + $0x48] sm:$0xf] %vm2670, %v2624
      %2690 = vst.msk [vmem:[%s281 + $0x4c] sm:$0xf] %vm2670, %v2625
      %2691 = vst.msk [vmem:[%s281 + $0x50] sm:$0xf] %vm2670, %v2626
      %2692 = vst.msk [vmem:[%s281 + $0x54] sm:$0xf] %vm2670, %v2627
      %2693 = vst.msk [vmem:[%s281 + $0x58] sm:$0xf] %vm2670, %v2628
      %2694 = vst.msk [vmem:[%s281 + $0x5c] sm:$0xf] %vm2670, %v2629
      %2695 = vst.msk [vmem:[%s281 + $0x60] sm:$0xf] %vm2670, %v2630
      %2696 = vst.msk [vmem:[%s281 + $0x64] sm:$0xf] %vm2670, %v2631
      %2697 = vst.msk [vmem:[%s281 + $0x68] sm:$0xf] %vm2670, %v2632
      %2698 = vst.msk [vmem:[%s281 + $0x6c] sm:$0xf] %vm2670, %v2633
      %2699 = vst.msk [vmem:[%s281 + $0x70] sm:$0xf] %vm2670, %v2634
      %2700 = vst.msk [vmem:[%s281 + $0x74] sm:$0xf] %vm2670, %v2635
      %2701 = vst.msk [vmem:[%s281 + $0x78] sm:$0xf] %vm2670, %v2636
      %2702 = vst.msk [vmem:[%s281 + $0x7c] sm:$0xf] %vm2670, %v2637
      %s2703 = smul.u32 4, %s16
      %p2704 = scmp.lt.s32.totalorder %s2703, 7
      %s2705 = scalar_select %p2704, %s2703, 7
      %s2706 = smul.addr %s2705, 8
      %s2707 = smul.addr %s2706, 4
      %s2708 = scalar_lea.vmem %s5, %s2707
      // Predicated region
      $region41: #{swin_block_forward.6} parent=39 // pred_check
        %p2709 = pneg %p154
      $region42: #{swin_block_forward.6} parent=39 // pred_check_branch
        %2711 = sbr.rel (%p2709) target = $region44
      $region43: #{swin_block_forward.6} parent=39 // pred_region
        %s2712 = smul.u32 4, %s16
      $region44: #{swin_block_forward.6} parent=39 // pred_fallthru
        _
    $region40: #{swin_block_forward.6} parent=5 // pred_fallthru
      _
    %p2713 = scmp.le.s32.totalorder 2, %s11
    // Predicated region
    $region45: #{swin_block_forward.6} parent=5 // pred_check
      %p2714 = pneg %p2713
    $region46: #{swin_block_forward.6} parent=5 // pred_check_branch
      %2716 = sbr.rel (%p2714) target = $region48
    $region47: #{swin_block_forward.6} parent=5 // pred_region
      %s2717 = ssub.s32 %s11, 2
      // Predicated region
      $region49: #{swin_block_forward.6} parent=47 // pred_check
        %p2718 = pneg %p160
      $region50: #{swin_block_forward.6} parent=47 // pred_check_branch
        %2720 = sbr.rel (%p2718) target = $region52
      $region51: #{swin_block_forward.6} parent=47 // pred_region
        %s2721 = smul.u32 4, %s17
        %p2722 = scmp.lt.s32.totalorder %s2721, 7
        %s2723 = scalar_select %p2722, %s2721, 7
        %s2724 = smul.addr %s2723, 8
        %s2725 = smul.addr %s2724, 4
        %s2726 = scalar_lea.vmem %s5, %s2725
      $region52: #{swin_block_forward.6} parent=47 // pred_fallthru
        _
    $region48: #{swin_block_forward.6} parent=5 // pred_fallthru
      _
  $region6: #{swin_block_forward.6} parent=0 // loop_footer
    %s15 = sadd.s32 1, %s11
  $region7: #{swin_block_forward.6} parent=0 // loop_footer_branch
    %10 = sbr.rel target = $region3
  $region8: #{swin_block_forward.6} parent=0 // loop_exit
    _

</llo_original>
